<compile_context>
chip_gen: v7x
topology: tpu7x:2x2x1
jax: 0.10.0
libtpu: 0.0.40
codegen_flags: <defaults>
</compile_context>

<pallas_src>
import functools
import math

import jax
import jax.numpy as jnp
from jax import lax
from jax.experimental import pallas as pl
from jax.experimental.pallas import tpu as pltpu

_NEG_LARGE = -0.7 * float(jnp.finfo(jnp.float32).max)  # finite "-inf" for the key mask
_LN_EPS = 1e-5  # nn.LayerNorm default


def _layernorm(x, gamma, beta, eps=_LN_EPS):
    mean = jnp.mean(x, axis=-1, keepdims=True)
    var = jnp.mean((x - mean) ** 2, axis=-1, keepdims=True)
    inv = jax.lax.rsqrt(var + eps)
    return (x - mean) * inv * gamma + beta


def encoder_layer_kernel(
    x_ref,        # (S, E)   f32, one batch element (leading batch dim squeezed)
    mask_ref,     # (1, S)   f32 additive mask (0 or large negative)
    wqkv_ref,     # (E, 3E)  bf16 pre-transposed in_proj weight, q-part pre-scaled
    bqkv_ref,     # (1, 3E)  f32, q-part pre-scaled
    wo_ref,       # (E, E)   bf16 out_proj.weight^T
    bo_ref,       # (1, E)   f32
    w1_ref,       # (E, H)   bf16 linear1.weight^T
    b1_ref,       # (1, H)   f32
    w2_ref,       # (H, E)   bf16 linear2.weight^T
    b2_ref,       # (1, E)   f32
    g1_ref, be1_ref,   # norm1 (1, E) f32
    g2_ref, be2_ref,   # norm2 (1, H) f32
    g3_ref, be3_ref,   # norm3 (1, E) f32
    out_ref,      # (S, E)   f32
    *,
    num_heads: int,
):
    x = x_ref[...]                                   # f32 residual copy
    S, E = x.shape
    hd = E // num_heads

    # Fused QKV projection: one (S,E)x(E,3E) bf16 matmul, f32 accumulation.
    qkv = jnp.dot(x.astype(jnp.bfloat16), wqkv_ref[...],
                  preferred_element_type=jnp.float32) + bqkv_ref[...]

    # Lane-aligned q/k/v slices (offsets 0, E, 2E), cast once for the MXU.
    q_all = qkv[:, :E].astype(jnp.bfloat16)          # scale already folded into weights
    k_all = qkv[:, E:2 * E].astype(jnp.bfloat16)
    v_all = qkv[:, 2 * E:].astype(jnp.bfloat16)
    mask = mask_ref[...]                             # (1, S) f32, broadcasts over queries

    # Per-head attention with pure 2-D dots (no head-batched einsum relayouts).
    ctx_heads = []
    for h in range(num_heads):
        sl = slice(h * hd, (h + 1) * hd)
        # scores = q_h @ k_h^T, MXU handles the transpose via dimension numbers.
        sc = lax.dot_general(q_all[:, sl], k_all[:, sl],
                             (((1,), (1,)), ((), ())),
                             preferred_element_type=jnp.float32)     # (S, S) f32
        sc = sc + mask                                               # f32 mask add
        m = jnp.max(sc, axis=-1, keepdims=True)
        p = jnp.exp(sc - m)
        l = jnp.sum(p, axis=-1, keepdims=True)
        r = pl.reciprocal(l, approx=True)
        r = r * (2.0 - l * r)                       # one Newton step -> near-exact 1/l
        p = (p * r).astype(jnp.bfloat16)
        ctx_heads.append(jnp.dot(p, v_all[:, sl],
                                 preferred_element_type=jnp.float32))  # (S, hd) f32
    attn = jnp.concatenate(ctx_heads, axis=-1)       # (S, E), lane-dense, single assembly

    # Output projection.
    attn = jnp.dot(attn.astype(jnp.bfloat16), wo_ref[...],
                   preferred_element_type=jnp.float32) + bo_ref[...]

    # Residual + norm1 (f32 elementwise).
    y = _layernorm(attn + x, g1_ref[...], be1_ref[...])

    # FFN: linear1 -> relu -> norm2 -> (dropout = identity in eval) -> linear2.
    ff = jnp.dot(y.astype(jnp.bfloat16), w1_ref[...],
                 preferred_element_type=jnp.float32) + b1_ref[...]
    ff = jnp.maximum(ff, 0.0)
    ff = _layernorm(ff, g2_ref[...], be2_ref[...])
    ff = jnp.dot(ff.astype(jnp.bfloat16), w2_ref[...],
                 preferred_element_type=jnp.float32) + b2_ref[...]

    # Residual + norm3.
    out_ref[...] = _layernorm(ff + y, g3_ref[...], be3_ref[...]).astype(out_ref.dtype)


def prepare_params(params, num_heads):
    """One-time prep: transpose weights, fold attention scale, store matmul weights bf16."""
    E = params["out_proj_w"].shape[0]
    hd = E // num_heads
    scale = 1.0 / math.sqrt(hd)
    scale_vec = jnp.concatenate(
        [jnp.full((E,), scale, jnp.float32), jnp.ones((2 * E,), jnp.float32)])
    wqkv = params["in_proj_w"] * scale_vec[:, None]   # (3E, E), q rows pre-scaled
    bqkv = params["in_proj_b"] * scale_vec
    r2 = lambda a: a.reshape(1, -1)                   # biases/norm vecs stay f32
    bf = lambda a: a.astype(jnp.bfloat16)             # MXU weights stored bf16
    return {
        "wqkv_t": bf(wqkv.T),                 # (E, 3E) bf16
        "bqkv": r2(bqkv),                     # (1, 3E) f32
        "wo_t": bf(params["out_proj_w"].T),   # (E, E)  bf16
        "bo": r2(params["out_proj_b"]),
        "w1_t": bf(params["lin1_w"].T),       # (E, H)  bf16
        "b1": r2(params["lin1_b"]),
        "w2_t": bf(params["lin2_w"].T),       # (H, E)  bf16
        "b2": r2(params["lin2_b"]),
        "n1_g": r2(params["n1_g"]), "n1_b": r2(params["n1_b"]),
        "n2_g": r2(params["n2_g"]), "n2_b": r2(params["n2_b"]),
        "n3_g": r2(params["n3_g"]), "n3_b": r2(params["n3_b"]),
    }


def _pick_vmem_limit(resident_weight_bytes, act_bytes):
    """Size- and generation-aware VMEM limit instead of a hard-coded constant."""
    want = int(resident_weight_bytes + act_bytes) + (8 << 20)   # + headroom
    cap = 64 << 20                       # conservative default (v7x physical VMEM)
    try:
        cap = int(getattr(pltpu.get_tpu_info(), "vmem_capacity_bytes", cap))
    except Exception:
        pass
    return int(max(32 << 20, min(want, cap * 3 // 4)))


def encoder_layer_forward_batch_first(x_bse, key_padding_mask, kp, *, num_heads,
                                      single_buffer_weights=True):
    """Core entry point. x_bse: (B, S, E) f32, key_padding_mask: (B, S) bool (True=ignore)."""
    B, S, E = x_bse.shape
    H = kp["w1_t"].shape[1]
    add_mask = jnp.where(key_padding_mask, _NEG_LARGE, 0.0).astype(jnp.float32)[:, None, :]

    if single_buffer_weights:
        # Weights never change across the grid -> one resident buffer, not two.
        def const_spec(shape):
            return pl.BlockSpec(shape, lambda b: (0, 0),
                                pipeline_mode=pl.Buffered(buffer_count=1))
    else:
        def const_spec(shape):
            return pl.BlockSpec(shape, lambda b: (0, 0))

    in_specs = [
        pl.BlockSpec((None, S, E), lambda b: (b, 0, 0)),         # x      (per-batch tile)
        pl.BlockSpec((None, 1, S), lambda b: (b, 0, 0)),         # mask   (per-batch tile)
        const_spec((E, 3 * E)), const_spec((1, 3 * E)),          # wqkv_t, bqkv
        const_spec((E, E)), const_spec((1, E)),                  # wo_t, bo
        const_spec((E, H)), const_spec((1, H)),                  # w1_t, b1
        const_spec((H, E)), const_spec((1, E)),                  # w2_t, b2
        const_spec((1, E)), const_spec((1, E)),                  # norm1
        const_spec((1, H)), const_spec((1, H)),                  # norm2
        const_spec((1, E)), const_spec((1, E)),                  # norm3
    ]

    # Advisory cost estimate so XLA schedules around the custom call sensibly.
    flops = B * S * (8 * E * E + 4 * S * E + 4 * E * H)
    transcendentals = B * (num_heads * S * S + num_heads * S + 3 * S)
    weight_bytes = int(sum(int(v.size) * v.dtype.itemsize for v in kp.values()))
    bytes_accessed = 8 * B * S * E + 4 * B * S + weight_bytes
    cost = pl.CostEstimate(flops=int(flops), transcendentals=int(transcendentals),
                           bytes_accessed=int(bytes_accessed))

    weight_buffers = 1 if single_buffer_weights else 2
    inter_bytes = 4 * (3 * S * E + 2 * S * S + 6 * S * E + S * H)   # qkv, scores, ffn, etc.
    act_bytes = 2 * 4 * (2 * S * E + S) + inter_bytes               # double-buffered tiles
    vmem_limit = _pick_vmem_limit(weight_buffers * weight_bytes, act_bytes)

    return pl.pallas_call(
        functools.partial(encoder_layer_kernel, num_heads=num_heads),
        grid=(B,),
        in_specs=in_specs,
        out_specs=pl.BlockSpec((None, S, E), lambda b: (b, 0, 0)),
        out_shape=jax.ShapeDtypeStruct((B, S, E), jnp.float32),
        compiler_params=pltpu.CompilerParams(
            dimension_semantics=("parallel",),        # grid split across TCs on v7x
            vmem_limit_bytes=vmem_limit,
        ),
        cost_estimate=cost,
    )(
        x_bse, add_mask,
        kp["wqkv_t"], kp["bqkv"], kp["wo_t"], kp["bo"],
        kp["w1_t"], kp["b1"], kp["w2_t"], kp["b2"],
        kp["n1_g"], kp["n1_b"], kp["n2_g"], kp["n2_b"], kp["n3_g"], kp["n3_b"],
    )


def encoder_layer_forward(x_sbe, key_padding_mask, kp, *, num_heads,
                          single_buffer_weights=True):
    """Seq-first wrapper matching PyTorch nn.MultiheadAttention's default (S, B, E) layout.

    If the surrounding model is batch-first, call encoder_layer_forward_batch_first
    directly and skip these two full-activation HBM round trips.
    """
    x_bse = jnp.transpose(x_sbe, (1, 0, 2))
    out_bse = encoder_layer_forward_batch_first(
        x_bse, key_padding_mask, kp, num_heads=num_heads,
        single_buffer_weights=single_buffer_weights)
    return jnp.transpose(out_bse, (1, 0, 2))


def _pure_jax_reference(x_sbe, key_padding_mask, params, *, num_heads):
    """Plain-JAX f32 reference replicating PyTorch EncoderLayer (eval-mode dropout)."""
    S, B, E = x_sbe.shape
    hd = E // num_heads
    x = jnp.transpose(x_sbe, (1, 0, 2))                          # (B, S, E)
    wqkv, bqkv = params["in_proj_w"], params["in_proj_b"]
    q = x @ wqkv[:E].T + bqkv[:E]
    k = x @ wqkv[E:2 * E].T + bqkv[E:2 * E]
    v = x @ wqkv[2 * E:].T + bqkv[2 * E:]
    q = q * (1.0 / math.sqrt(hd))
    add_mask = jnp.where(key_padding_mask, -jnp.inf, 0.0)[:, None, :]
    outs = []
    for h in range(num_heads):
        lo, hi = h * hd, (h + 1) * hd
        sc = jnp.einsum("bqd,bkd->bqk", q[:, :, lo:hi], k[:, :, lo:hi]) + add_mask
        p = jax.nn.softmax(sc, axis=-1)
        outs.append(jnp.einsum("bqk,bkd->bqd", p, v[:, :, lo:hi]))
    attn = jnp.concatenate(outs, axis=-1) @ params["out_proj_w"].T + params["out_proj_b"]
    y = _layernorm(attn + x, params["n1_g"], params["n1_b"])
    ff = jnp.maximum(y @ params["lin1_w"].T + params["lin1_b"], 0.0)
    ff = _layernorm(ff, params["n2_g"], params["n2_b"])
    ff = ff @ params["lin2_w"].T + params["lin2_b"]
    out = _layernorm(ff + y, params["n3_g"], params["n3_b"])
    return jnp.transpose(out, (1, 0, 2))


def init_params(key, embed_dim, hidden_dim):
    keys = jax.random.split(key, 8)
    s = 0.1
    return {
        "in_proj_w": s * jax.random.normal(keys[0], (3 * embed_dim, embed_dim), jnp.float32),
        "in_proj_b": s * jax.random.normal(keys[1], (3 * embed_dim,), jnp.float32),
        "out_proj_w": s * jax.random.normal(keys[2], (embed_dim, embed_dim), jnp.float32),
        "out_proj_b": s * jax.random.normal(keys[3], (embed_dim,), jnp.float32),
        "lin1_w": s * jax.random.normal(keys[4], (hidden_dim, embed_dim), jnp.float32),
        "lin1_b": s * jax.random.normal(keys[5], (hidden_dim,), jnp.float32),
        "lin2_w": s * jax.random.normal(keys[6], (embed_dim, hidden_dim), jnp.float32),
        "lin2_b": s * jax.random.normal(keys[7], (embed_dim,), jnp.float32),
        "n1_g": jnp.ones((embed_dim,), jnp.float32),
        "n1_b": jnp.zeros((embed_dim,), jnp.float32),
        "n2_g": jnp.ones((hidden_dim,), jnp.float32),
        "n2_b": jnp.zeros((hidden_dim,), jnp.float32),
        "n3_g": jnp.ones((embed_dim,), jnp.float32),
        "n3_b": jnp.zeros((embed_dim,), jnp.float32),
    }


if __name__ == "__main__":
    # Small but lane-dense shapes: E and H are multiples of 128, S a multiple of 8.
    SEQ, BATCH, EMBED, HIDDEN, HEADS = 16, 4, 128, 256, 4

    root = jax.random.PRNGKey(0)
    k_x, k_p = jax.random.split(root)
    x = jax.random.normal(k_x, (SEQ, BATCH, EMBED), jnp.float32)   # (S, B, E) seq-first

    # key_padding_mask: (B, S), True = padded/ignored; keep valid keys in every row.
    src_key_padding_mask = jnp.zeros((BATCH, SEQ), dtype=bool).at[:, SEQ - 3:].set(True)

    params = init_params(k_p, EMBED, HIDDEN)
    kparams = prepare_params(params, HEADS)

    def run(single_buffer):
        fwd = jax.jit(functools.partial(encoder_layer_forward, num_heads=HEADS,
                                        single_buffer_weights=single_buffer))
        return jax.block_until_ready(fwd(x, src_key_padding_mask, kparams))

    try:
        out = run(True)          # single-buffered constant weights (v7x VMEM fix)
    except Exception:
        out = run(False)         # fallback: default double-buffered weight specs

    ref = _pure_jax_reference(x, src_key_padding_mask, params, num_heads=HEADS)
    assert out.shape == (SEQ, BATCH, EMBED)
    # Tolerance covers bf16 MXU inputs (accumulation is f32; softmax recip is Newton-refined).
    err = float(jnp.max(jnp.abs(out - ref)))
    assert err < 5e-2, f"mismatch vs JAX reference: max abs err {err}"

    print("KERNEL_OK")
</pallas_src>

<mosaic_0001>
module attributes {stable_mosaic.version = 11 : i64} {
  func.func @encoder_layer_kernel(%arg0: i32, %arg1: memref<1x16x128xf32, #tpu.memory_space<vmem>>, %arg2: memref<1x1x16xf32, #tpu.memory_space<vmem>>, %arg3: memref<128x384xbf16, #tpu.memory_space<vmem>>, %arg4: memref<1x384xf32, #tpu.memory_space<vmem>>, %arg5: memref<128x128xbf16, #tpu.memory_space<vmem>>, %arg6: memref<1x128xf32, #tpu.memory_space<vmem>>, %arg7: memref<128x256xbf16, #tpu.memory_space<vmem>>, %arg8: memref<1x256xf32, #tpu.memory_space<vmem>>, %arg9: memref<256x128xbf16, #tpu.memory_space<vmem>>, %arg10: memref<1x128xf32, #tpu.memory_space<vmem>>, %arg11: memref<1x128xf32, #tpu.memory_space<vmem>>, %arg12: memref<1x128xf32, #tpu.memory_space<vmem>>, %arg13: memref<1x256xf32, #tpu.memory_space<vmem>>, %arg14: memref<1x256xf32, #tpu.memory_space<vmem>>, %arg15: memref<1x128xf32, #tpu.memory_space<vmem>>, %arg16: memref<1x128xf32, #tpu.memory_space<vmem>>, %arg17: memref<1x16x128xf32, #tpu.memory_space<vmem>>) attributes {dimension_semantics = [#tpu.dimension_semantics<parallel>], iteration_bounds = array<i64: 4>, scalar_prefetch = 0 : i64, scratch_operands = 0 : i64, tpu.core_type = #tpu.core_type<tc>, window_params = [{transform_indices = @transform_0, window_bounds = array<i64: 1, 16, 128>}, {transform_indices = @transform_1, window_bounds = array<i64: 1, 1, 16>}, {pipeline_mode = #tpu.pipeline_mode<synchronous>, transform_indices = @transform_2, window_bounds = array<i64: 128, 384>}, {pipeline_mode = #tpu.pipeline_mode<synchronous>, transform_indices = @transform_3, window_bounds = array<i64: 1, 384>}, {pipeline_mode = #tpu.pipeline_mode<synchronous>, transform_indices = @transform_4, window_bounds = array<i64: 128, 128>}, {pipeline_mode = #tpu.pipeline_mode<synchronous>, transform_indices = @transform_5, window_bounds = array<i64: 1, 128>}, {pipeline_mode = #tpu.pipeline_mode<synchronous>, transform_indices = @transform_6, window_bounds = array<i64: 128, 256>}, {pipeline_mode = #tpu.pipeline_mode<synchronous>, transform_indices = @transform_7, window_bounds = array<i64: 1, 256>}, {pipeline_mode = #tpu.pipeline_mode<synchronous>, transform_indices = @transform_8, window_bounds = array<i64: 256, 128>}, {pipeline_mode = #tpu.pipeline_mode<synchronous>, transform_indices = @transform_9, window_bounds = array<i64: 1, 128>}, {pipeline_mode = #tpu.pipeline_mode<synchronous>, transform_indices = @transform_10, window_bounds = array<i64: 1, 128>}, {pipeline_mode = #tpu.pipeline_mode<synchronous>, transform_indices = @transform_11, window_bounds = array<i64: 1, 128>}, {pipeline_mode = #tpu.pipeline_mode<synchronous>, transform_indices = @transform_12, window_bounds = array<i64: 1, 256>}, {pipeline_mode = #tpu.pipeline_mode<synchronous>, transform_indices = @transform_13, window_bounds = array<i64: 1, 256>}, {pipeline_mode = #tpu.pipeline_mode<synchronous>, transform_indices = @transform_14, window_bounds = array<i64: 1, 128>}, {pipeline_mode = #tpu.pipeline_mode<synchronous>, transform_indices = @transform_15, window_bounds = array<i64: 1, 128>}, {transform_indices = @transform_16, window_bounds = array<i64: 1, 16, 128>}]} {
    %c0 = arith.constant 0 : index
    %c0_0 = arith.constant 0 : index
    %c0_1 = arith.constant 0 : index
    %0 = vector.load %arg1[%c0, %c0_0, %c0_1] : memref<1x16x128xf32, #tpu.memory_space<vmem>>, vector<1x16x128xf32>
    %1 = vector.shape_cast %0 : vector<1x16x128xf32> to vector<16x128xf32>
    %2 = arith.truncf %1 : vector<16x128xf32> to vector<16x128xbf16>
    %c0_2 = arith.constant 0 : index
    %c0_3 = arith.constant 0 : index
    %3 = vector.load %arg3[%c0_2, %c0_3] : memref<128x384xbf16, #tpu.memory_space<vmem>>, vector<128x384xbf16>
    %cst = arith.constant dense<0.000000e+00> : vector<16x384xf32>
    %4 = tpu.matmul %2, %3, %cst {dimension_numbers = #tpu.dot_dimension_numbers<[1], [0], [0], [1], [0, 0, 1, 1], [], []>} : vector<16x128xbf16>, vector<128x384xbf16>, vector<16x384xf32> -> vector<16x384xf32>
    %c0_4 = arith.constant 0 : index
    %c0_5 = arith.constant 0 : index
    %5 = vector.load %arg4[%c0_4, %c0_5] : memref<1x384xf32, #tpu.memory_space<vmem>>, vector<1x384xf32>
    %6 = vector.broadcast %5 : vector<1x384xf32> to vector<16x384xf32>
    %7 = arith.addf %4, %6 : vector<16x384xf32>
    %8 = vector.extract_strided_slice %7 {offsets = [0, 0], sizes = [16, 128], strides = [1, 1]} : vector<16x384xf32> to vector<16x128xf32>
    %9 = arith.truncf %8 : vector<16x128xf32> to vector<16x128xbf16>
    %10 = vector.extract_strided_slice %7 {offsets = [0, 128], sizes = [16, 128], strides = [1, 1]} : vector<16x384xf32> to vector<16x128xf32>
    %11 = arith.truncf %10 : vector<16x128xf32> to vector<16x128xbf16>
    %12 = vector.extract_strided_slice %7 {offsets = [0, 256], sizes = [16, 128], strides = [1, 1]} : vector<16x384xf32> to vector<16x128xf32>
    %13 = arith.truncf %12 : vector<16x128xf32> to vector<16x128xbf16>
    %c0_6 = arith.constant 0 : index
    %c0_7 = arith.constant 0 : index
    %c0_8 = arith.constant 0 : index
    %14 = vector.load %arg2[%c0_6, %c0_7, %c0_8] : memref<1x1x16xf32, #tpu.memory_space<vmem>>, vector<1x1x16xf32>
    %15 = vector.shape_cast %14 : vector<1x1x16xf32> to vector<1x16xf32>
    %16 = vector.extract_strided_slice %9 {offsets = [0, 0], sizes = [16, 32], strides = [1, 1]} : vector<16x128xbf16> to vector<16x32xbf16>
    %17 = vector.extract_strided_slice %11 {offsets = [0, 0], sizes = [16, 32], strides = [1, 1]} : vector<16x128xbf16> to vector<16x32xbf16>
    %cst_9 = arith.constant dense<0.000000e+00> : vector<16x16xf32>
    %18 = tpu.matmul %16, %17, %cst_9 {dimension_numbers = #tpu.dot_dimension_numbers<[1], [1], [0], [0], [0, 0, 1, 0], [], []>} : vector<16x32xbf16>, vector<16x32xbf16>, vector<16x16xf32> -> vector<16x16xf32>
    %19 = vector.broadcast %15 : vector<1x16xf32> to vector<16x16xf32>
    %20 = arith.addf %18, %19 : vector<16x16xf32>
    %cst_10 = arith.constant dense<0xFF800000> : vector<16xf32>
    %21 = vector.multi_reduction <maximumf>, %20, %cst_10 [1] : vector<16x16xf32> to vector<16xf32>
    %22 = vector.shape_cast %21 : vector<16xf32> to vector<16x1xf32>
    %23 = vector.broadcast %22 : vector<16x1xf32> to vector<16x16xf32>
    %24 = arith.subf %20, %23 : vector<16x16xf32>
    %25 = math.exp %24 : vector<16x16xf32>
    %cst_11 = arith.constant dense<0.000000e+00> : vector<16xf32>
    %26 = vector.multi_reduction <add>, %25, %cst_11 [1] : vector<16x16xf32> to vector<16xf32>
    %27 = vector.shape_cast %26 : vector<16xf32> to vector<16x1xf32>
    %28 = tpu.reciprocal %27 {approx = true} : vector<16x1xf32> -> vector<16x1xf32>
    %29 = arith.mulf %27, %28 : vector<16x1xf32>
    %cst_12 = arith.constant 2.000000e+00 : f32
    %30 = vector.broadcast %cst_12 : f32 to vector<16x1xf32>
    %31 = arith.subf %30, %29 : vector<16x1xf32>
    %32 = arith.mulf %28, %31 : vector<16x1xf32>
    %33 = vector.broadcast %32 : vector<16x1xf32> to vector<16x16xf32>
    %34 = arith.mulf %25, %33 : vector<16x16xf32>
    %35 = arith.truncf %34 : vector<16x16xf32> to vector<16x16xbf16>
    %36 = vector.extract_strided_slice %13 {offsets = [0, 0], sizes = [16, 32], strides = [1, 1]} : vector<16x128xbf16> to vector<16x32xbf16>
    %cst_13 = arith.constant dense<0.000000e+00> : vector<16x32xf32>
    %37 = tpu.matmul %35, %36, %cst_13 {dimension_numbers = #tpu.dot_dimension_numbers<[1], [0], [0], [1], [0, 0, 1, 1], [], []>} : vector<16x16xbf16>, vector<16x32xbf16>, vector<16x32xf32> -> vector<16x32xf32>
    %38 = vector.extract_strided_slice %9 {offsets = [0, 32], sizes = [16, 32], strides = [1, 1]} : vector<16x128xbf16> to vector<16x32xbf16>
    %39 = vector.extract_strided_slice %11 {offsets = [0, 32], sizes = [16, 32], strides = [1, 1]} : vector<16x128xbf16> to vector<16x32xbf16>
    %cst_14 = arith.constant dense<0.000000e+00> : vector<16x16xf32>
    %40 = tpu.matmul %38, %39, %cst_14 {dimension_numbers = #tpu.dot_dimension_numbers<[1], [1], [0], [0], [0, 0, 1, 0], [], []>} : vector<16x32xbf16>, vector<16x32xbf16>, vector<16x16xf32> -> vector<16x16xf32>
    %41 = vector.broadcast %15 : vector<1x16xf32> to vector<16x16xf32>
    %42 = arith.addf %40, %41 : vector<16x16xf32>
    %cst_15 = arith.constant dense<0xFF800000> : vector<16xf32>
    %43 = vector.multi_reduction <maximumf>, %42, %cst_15 [1] : vector<16x16xf32> to vector<16xf32>
    %44 = vector.shape_cast %43 : vector<16xf32> to vector<16x1xf32>
    %45 = vector.broadcast %44 : vector<16x1xf32> to vector<16x16xf32>
    %46 = arith.subf %42, %45 : vector<16x16xf32>
    %47 = math.exp %46 : vector<16x16xf32>
    %cst_16 = arith.constant dense<0.000000e+00> : vector<16xf32>
    %48 = vector.multi_reduction <add>, %47, %cst_16 [1] : vector<16x16xf32> to vector<16xf32>
    %49 = vector.shape_cast %48 : vector<16xf32> to vector<16x1xf32>
    %50 = tpu.reciprocal %49 {approx = true} : vector<16x1xf32> -> vector<16x1xf32>
    %51 = arith.mulf %49, %50 : vector<16x1xf32>
    %cst_17 = arith.constant 2.000000e+00 : f32
    %52 = vector.broadcast %cst_17 : f32 to vector<16x1xf32>
    %53 = arith.subf %52, %51 : vector<16x1xf32>
    %54 = arith.mulf %50, %53 : vector<16x1xf32>
    %55 = vector.broadcast %54 : vector<16x1xf32> to vector<16x16xf32>
    %56 = arith.mulf %47, %55 : vector<16x16xf32>
    %57 = arith.truncf %56 : vector<16x16xf32> to vector<16x16xbf16>
    %58 = vector.extract_strided_slice %13 {offsets = [0, 32], sizes = [16, 32], strides = [1, 1]} : vector<16x128xbf16> to vector<16x32xbf16>
    %cst_18 = arith.constant dense<0.000000e+00> : vector<16x32xf32>
    %59 = tpu.matmul %57, %58, %cst_18 {dimension_numbers = #tpu.dot_dimension_numbers<[1], [0], [0], [1], [0, 0, 1, 1], [], []>} : vector<16x16xbf16>, vector<16x32xbf16>, vector<16x32xf32> -> vector<16x32xf32>
    %60 = vector.extract_strided_slice %9 {offsets = [0, 64], sizes = [16, 32], strides = [1, 1]} : vector<16x128xbf16> to vector<16x32xbf16>
    %61 = vector.extract_strided_slice %11 {offsets = [0, 64], sizes = [16, 32], strides = [1, 1]} : vector<16x128xbf16> to vector<16x32xbf16>
    %cst_19 = arith.constant dense<0.000000e+00> : vector<16x16xf32>
    %62 = tpu.matmul %60, %61, %cst_19 {dimension_numbers = #tpu.dot_dimension_numbers<[1], [1], [0], [0], [0, 0, 1, 0], [], []>} : vector<16x32xbf16>, vector<16x32xbf16>, vector<16x16xf32> -> vector<16x16xf32>
    %63 = vector.broadcast %15 : vector<1x16xf32> to vector<16x16xf32>
    %64 = arith.addf %62, %63 : vector<16x16xf32>
    %cst_20 = arith.constant dense<0xFF800000> : vector<16xf32>
    %65 = vector.multi_reduction <maximumf>, %64, %cst_20 [1] : vector<16x16xf32> to vector<16xf32>
    %66 = vector.shape_cast %65 : vector<16xf32> to vector<16x1xf32>
    %67 = vector.broadcast %66 : vector<16x1xf32> to vector<16x16xf32>
    %68 = arith.subf %64, %67 : vector<16x16xf32>
    %69 = math.exp %68 : vector<16x16xf32>
    %cst_21 = arith.constant dense<0.000000e+00> : vector<16xf32>
    %70 = vector.multi_reduction <add>, %69, %cst_21 [1] : vector<16x16xf32> to vector<16xf32>
    %71 = vector.shape_cast %70 : vector<16xf32> to vector<16x1xf32>
    %72 = tpu.reciprocal %71 {approx = true} : vector<16x1xf32> -> vector<16x1xf32>
    %73 = arith.mulf %71, %72 : vector<16x1xf32>
    %cst_22 = arith.constant 2.000000e+00 : f32
    %74 = vector.broadcast %cst_22 : f32 to vector<16x1xf32>
    %75 = arith.subf %74, %73 : vector<16x1xf32>
    %76 = arith.mulf %72, %75 : vector<16x1xf32>
    %77 = vector.broadcast %76 : vector<16x1xf32> to vector<16x16xf32>
    %78 = arith.mulf %69, %77 : vector<16x16xf32>
    %79 = arith.truncf %78 : vector<16x16xf32> to vector<16x16xbf16>
    %80 = vector.extract_strided_slice %13 {offsets = [0, 64], sizes = [16, 32], strides = [1, 1]} : vector<16x128xbf16> to vector<16x32xbf16>
    %cst_23 = arith.constant dense<0.000000e+00> : vector<16x32xf32>
    %81 = tpu.matmul %79, %80, %cst_23 {dimension_numbers = #tpu.dot_dimension_numbers<[1], [0], [0], [1], [0, 0, 1, 1], [], []>} : vector<16x16xbf16>, vector<16x32xbf16>, vector<16x32xf32> -> vector<16x32xf32>
    %82 = vector.extract_strided_slice %9 {offsets = [0, 96], sizes = [16, 32], strides = [1, 1]} : vector<16x128xbf16> to vector<16x32xbf16>
    %83 = vector.extract_strided_slice %11 {offsets = [0, 96], sizes = [16, 32], strides = [1, 1]} : vector<16x128xbf16> to vector<16x32xbf16>
    %cst_24 = arith.constant dense<0.000000e+00> : vector<16x16xf32>
    %84 = tpu.matmul %82, %83, %cst_24 {dimension_numbers = #tpu.dot_dimension_numbers<[1], [1], [0], [0], [0, 0, 1, 0], [], []>} : vector<16x32xbf16>, vector<16x32xbf16>, vector<16x16xf32> -> vector<16x16xf32>
    %85 = vector.broadcast %15 : vector<1x16xf32> to vector<16x16xf32>
    %86 = arith.addf %84, %85 : vector<16x16xf32>
    %cst_25 = arith.constant dense<0xFF800000> : vector<16xf32>
    %87 = vector.multi_reduction <maximumf>, %86, %cst_25 [1] : vector<16x16xf32> to vector<16xf32>
    %88 = vector.shape_cast %87 : vector<16xf32> to vector<16x1xf32>
    %89 = vector.broadcast %88 : vector<16x1xf32> to vector<16x16xf32>
    %90 = arith.subf %86, %89 : vector<16x16xf32>
    %91 = math.exp %90 : vector<16x16xf32>
    %cst_26 = arith.constant dense<0.000000e+00> : vector<16xf32>
    %92 = vector.multi_reduction <add>, %91, %cst_26 [1] : vector<16x16xf32> to vector<16xf32>
    %93 = vector.shape_cast %92 : vector<16xf32> to vector<16x1xf32>
    %94 = tpu.reciprocal %93 {approx = true} : vector<16x1xf32> -> vector<16x1xf32>
    %95 = arith.mulf %93, %94 : vector<16x1xf32>
    %cst_27 = arith.constant 2.000000e+00 : f32
    %96 = vector.broadcast %cst_27 : f32 to vector<16x1xf32>
    %97 = arith.subf %96, %95 : vector<16x1xf32>
    %98 = arith.mulf %94, %97 : vector<16x1xf32>
    %99 = vector.broadcast %98 : vector<16x1xf32> to vector<16x16xf32>
    %100 = arith.mulf %91, %99 : vector<16x16xf32>
    %101 = arith.truncf %100 : vector<16x16xf32> to vector<16x16xbf16>
    %102 = vector.extract_strided_slice %13 {offsets = [0, 96], sizes = [16, 32], strides = [1, 1]} : vector<16x128xbf16> to vector<16x32xbf16>
    %cst_28 = arith.constant dense<0.000000e+00> : vector<16x32xf32>
    %103 = tpu.matmul %101, %102, %cst_28 {dimension_numbers = #tpu.dot_dimension_numbers<[1], [0], [0], [1], [0, 0, 1, 1], [], []>} : vector<16x16xbf16>, vector<16x32xbf16>, vector<16x32xf32> -> vector<16x32xf32>
    %104 = tpu.concatenate %37, %59, %81, %103 in 1 : vector<16x32xf32>, vector<16x32xf32>, vector<16x32xf32>, vector<16x32xf32> -> vector<16x128xf32>
    %105 = arith.truncf %104 : vector<16x128xf32> to vector<16x128xbf16>
    %c0_29 = arith.constant 0 : index
    %c0_30 = arith.constant 0 : index
    %106 = vector.load %arg5[%c0_29, %c0_30] : memref<128x128xbf16, #tpu.memory_space<vmem>>, vector<128x128xbf16>
    %cst_31 = arith.constant dense<0.000000e+00> : vector<16x128xf32>
    %107 = tpu.matmul %105, %106, %cst_31 {dimension_numbers = #tpu.dot_dimension_numbers<[1], [0], [0], [1], [0, 0, 1, 1], [], []>} : vector<16x128xbf16>, vector<128x128xbf16>, vector<16x128xf32> -> vector<16x128xf32>
    %c0_32 = arith.constant 0 : index
    %c0_33 = arith.constant 0 : index
    %108 = vector.load %arg6[%c0_32, %c0_33] : memref<1x128xf32, #tpu.memory_space<vmem>>, vector<1x128xf32>
    %109 = vector.broadcast %108 : vector<1x128xf32> to vector<16x128xf32>
    %110 = arith.addf %107, %109 : vector<16x128xf32>
    %111 = arith.addf %110, %1 : vector<16x128xf32>
    %c0_34 = arith.constant 0 : index
    %c0_35 = arith.constant 0 : index
    %112 = vector.load %arg11[%c0_34, %c0_35] : memref<1x128xf32, #tpu.memory_space<vmem>>, vector<1x128xf32>
    %c0_36 = arith.constant 0 : index
    %c0_37 = arith.constant 0 : index
    %113 = vector.load %arg12[%c0_36, %c0_37] : memref<1x128xf32, #tpu.memory_space<vmem>>, vector<1x128xf32>
    %cst_38 = arith.constant dense<0.000000e+00> : vector<16xf32>
    %114 = vector.multi_reduction <add>, %111, %cst_38 [1] : vector<16x128xf32> to vector<16xf32>
    %115 = vector.shape_cast %114 : vector<16xf32> to vector<16x1xf32>
    %cst_39 = arith.constant 1.280000e+02 : f32
    %116 = vector.broadcast %cst_39 : f32 to vector<16x1xf32>
    %117 = arith.divf %115, %116 : vector<16x1xf32>
    %118 = vector.broadcast %117 : vector<16x1xf32> to vector<16x128xf32>
    %119 = arith.subf %111, %118 : vector<16x128xf32>
    %120 = arith.mulf %119, %119 : vector<16x128xf32>
    %cst_40 = arith.constant dense<0.000000e+00> : vector<16xf32>
    %121 = vector.multi_reduction <add>, %120, %cst_40 [1] : vector<16x128xf32> to vector<16xf32>
    %122 = vector.shape_cast %121 : vector<16xf32> to vector<16x1xf32>
    %cst_41 = arith.constant 1.280000e+02 : f32
    %123 = vector.broadcast %cst_41 : f32 to vector<16x1xf32>
    %124 = arith.divf %122, %123 : vector<16x1xf32>
    %cst_42 = arith.constant 9.99999974E-6 : f32
    %125 = vector.broadcast %cst_42 : f32 to vector<16x1xf32>
    %126 = arith.addf %124, %125 : vector<16x1xf32>
    %127 = math.rsqrt %126 : vector<16x1xf32>
    %128 = vector.broadcast %117 : vector<16x1xf32> to vector<16x128xf32>
    %129 = arith.subf %111, %128 : vector<16x128xf32>
    %130 = vector.broadcast %127 : vector<16x1xf32> to vector<16x128xf32>
    %131 = arith.mulf %129, %130 : vector<16x128xf32>
    %132 = vector.broadcast %112 : vector<1x128xf32> to vector<16x128xf32>
    %133 = arith.mulf %131, %132 : vector<16x128xf32>
    %134 = vector.broadcast %113 : vector<1x128xf32> to vector<16x128xf32>
    %135 = arith.addf %133, %134 : vector<16x128xf32>
    %136 = arith.truncf %135 : vector<16x128xf32> to vector<16x128xbf16>
    %c0_43 = arith.constant 0 : index
    %c0_44 = arith.constant 0 : index
    %137 = vector.load %arg7[%c0_43, %c0_44] : memref<128x256xbf16, #tpu.memory_space<vmem>>, vector<128x256xbf16>
    %cst_45 = arith.constant dense<0.000000e+00> : vector<16x256xf32>
    %138 = tpu.matmul %136, %137, %cst_45 {dimension_numbers = #tpu.dot_dimension_numbers<[1], [0], [0], [1], [0, 0, 1, 1], [], []>} : vector<16x128xbf16>, vector<128x256xbf16>, vector<16x256xf32> -> vector<16x256xf32>
    %c0_46 = arith.constant 0 : index
    %c0_47 = arith.constant 0 : index
    %139 = vector.load %arg8[%c0_46, %c0_47] : memref<1x256xf32, #tpu.memory_space<vmem>>, vector<1x256xf32>
    %140 = vector.broadcast %139 : vector<1x256xf32> to vector<16x256xf32>
    %141 = arith.addf %138, %140 : vector<16x256xf32>
    %cst_48 = arith.constant 0.000000e+00 : f32
    %142 = vector.broadcast %cst_48 : f32 to vector<16x256xf32>
    %143 = arith.maximumf %141, %142 : vector<16x256xf32>
    %c0_49 = arith.constant 0 : index
    %c0_50 = arith.constant 0 : index
    %144 = vector.load %arg13[%c0_49, %c0_50] : memref<1x256xf32, #tpu.memory_space<vmem>>, vector<1x256xf32>
    %c0_51 = arith.constant 0 : index
    %c0_52 = arith.constant 0 : index
    %145 = vector.load %arg14[%c0_51, %c0_52] : memref<1x256xf32, #tpu.memory_space<vmem>>, vector<1x256xf32>
    %cst_53 = arith.constant dense<0.000000e+00> : vector<16xf32>
    %146 = vector.multi_reduction <add>, %143, %cst_53 [1] : vector<16x256xf32> to vector<16xf32>
    %147 = vector.shape_cast %146 : vector<16xf32> to vector<16x1xf32>
    %cst_54 = arith.constant 2.560000e+02 : f32
    %148 = vector.broadcast %cst_54 : f32 to vector<16x1xf32>
    %149 = arith.divf %147, %148 : vector<16x1xf32>
    %150 = vector.broadcast %149 : vector<16x1xf32> to vector<16x256xf32>
    %151 = arith.subf %143, %150 : vector<16x256xf32>
    %152 = arith.mulf %151, %151 : vector<16x256xf32>
    %cst_55 = arith.constant dense<0.000000e+00> : vector<16xf32>
    %153 = vector.multi_reduction <add>, %152, %cst_55 [1] : vector<16x256xf32> to vector<16xf32>
    %154 = vector.shape_cast %153 : vector<16xf32> to vector<16x1xf32>
    %cst_56 = arith.constant 2.560000e+02 : f32
    %155 = vector.broadcast %cst_56 : f32 to vector<16x1xf32>
    %156 = arith.divf %154, %155 : vector<16x1xf32>
    %cst_57 = arith.constant 9.99999974E-6 : f32
    %157 = vector.broadcast %cst_57 : f32 to vector<16x1xf32>
    %158 = arith.addf %156, %157 : vector<16x1xf32>
    %159 = math.rsqrt %158 : vector<16x1xf32>
    %160 = vector.broadcast %149 : vector<16x1xf32> to vector<16x256xf32>
    %161 = arith.subf %143, %160 : vector<16x256xf32>
    %162 = vector.broadcast %159 : vector<16x1xf32> to vector<16x256xf32>
    %163 = arith.mulf %161, %162 : vector<16x256xf32>
    %164 = vector.broadcast %144 : vector<1x256xf32> to vector<16x256xf32>
    %165 = arith.mulf %163, %164 : vector<16x256xf32>
    %166 = vector.broadcast %145 : vector<1x256xf32> to vector<16x256xf32>
    %167 = arith.addf %165, %166 : vector<16x256xf32>
    %168 = arith.truncf %167 : vector<16x256xf32> to vector<16x256xbf16>
    %c0_58 = arith.constant 0 : index
    %c0_59 = arith.constant 0 : index
    %169 = vector.load %arg9[%c0_58, %c0_59] : memref<256x128xbf16, #tpu.memory_space<vmem>>, vector<256x128xbf16>
    %cst_60 = arith.constant dense<0.000000e+00> : vector<16x128xf32>
    %170 = tpu.matmul %168, %169, %cst_60 {dimension_numbers = #tpu.dot_dimension_numbers<[1], [0], [0], [1], [0, 0, 1, 1], [], []>} : vector<16x256xbf16>, vector<256x128xbf16>, vector<16x128xf32> -> vector<16x128xf32>
    %c0_61 = arith.constant 0 : index
    %c0_62 = arith.constant 0 : index
    %171 = vector.load %arg10[%c0_61, %c0_62] : memref<1x128xf32, #tpu.memory_space<vmem>>, vector<1x128xf32>
    %172 = vector.broadcast %171 : vector<1x128xf32> to vector<16x128xf32>
    %173 = arith.addf %170, %172 : vector<16x128xf32>
    %174 = arith.addf %173, %135 : vector<16x128xf32>
    %c0_63 = arith.constant 0 : index
    %c0_64 = arith.constant 0 : index
    %175 = vector.load %arg15[%c0_63, %c0_64] : memref<1x128xf32, #tpu.memory_space<vmem>>, vector<1x128xf32>
    %c0_65 = arith.constant 0 : index
    %c0_66 = arith.constant 0 : index
    %176 = vector.load %arg16[%c0_65, %c0_66] : memref<1x128xf32, #tpu.memory_space<vmem>>, vector<1x128xf32>
    %cst_67 = arith.constant dense<0.000000e+00> : vector<16xf32>
    %177 = vector.multi_reduction <add>, %174, %cst_67 [1] : vector<16x128xf32> to vector<16xf32>
    %178 = vector.shape_cast %177 : vector<16xf32> to vector<16x1xf32>
    %cst_68 = arith.constant 1.280000e+02 : f32
    %179 = vector.broadcast %cst_68 : f32 to vector<16x1xf32>
    %180 = arith.divf %178, %179 : vector<16x1xf32>
    %181 = vector.broadcast %180 : vector<16x1xf32> to vector<16x128xf32>
    %182 = arith.subf %174, %181 : vector<16x128xf32>
    %183 = arith.mulf %182, %182 : vector<16x128xf32>
    %cst_69 = arith.constant dense<0.000000e+00> : vector<16xf32>
    %184 = vector.multi_reduction <add>, %183, %cst_69 [1] : vector<16x128xf32> to vector<16xf32>
    %185 = vector.shape_cast %184 : vector<16xf32> to vector<16x1xf32>
    %cst_70 = arith.constant 1.280000e+02 : f32
    %186 = vector.broadcast %cst_70 : f32 to vector<16x1xf32>
    %187 = arith.divf %185, %186 : vector<16x1xf32>
    %cst_71 = arith.constant 9.99999974E-6 : f32
    %188 = vector.broadcast %cst_71 : f32 to vector<16x1xf32>
    %189 = arith.addf %187, %188 : vector<16x1xf32>
    %190 = math.rsqrt %189 : vector<16x1xf32>
    %191 = vector.broadcast %180 : vector<16x1xf32> to vector<16x128xf32>
    %192 = arith.subf %174, %191 : vector<16x128xf32>
    %193 = vector.broadcast %190 : vector<16x1xf32> to vector<16x128xf32>
    %194 = arith.mulf %192, %193 : vector<16x128xf32>
    %195 = vector.broadcast %175 : vector<1x128xf32> to vector<16x128xf32>
    %196 = arith.mulf %194, %195 : vector<16x128xf32>
    %197 = vector.broadcast %176 : vector<1x128xf32> to vector<16x128xf32>
    %198 = arith.addf %196, %197 : vector<16x128xf32>
    %c0_72 = arith.constant 0 : index
    %c0_73 = arith.constant 0 : index
    %c0_74 = arith.constant 0 : index
    %199 = vector.load %arg17[%c0_72, %c0_73, %c0_74] : memref<1x16x128xf32, #tpu.memory_space<vmem>>, vector<1x16x128xf32>
    %200 = vector.shape_cast %199 : vector<1x16x128xf32> to vector<16x128xf32>
    %201 = vector.shape_cast %198 : vector<16x128xf32> to vector<1x16x128xf32>
    tpu.vector_store %arg17[%c0_72, %c0_73, %c0_74], %201 {strides = array<i32>} : memref<1x16x128xf32, #tpu.memory_space<vmem>>, vector<1x16x128xf32>,
    return
  }
  func.func @transform_0(%arg0: i32) -> (i32, i32, i32) {
    %c0_i32 = arith.constant 0 : i32
    %c0_i32_0 = arith.constant 0 : i32
    %c0_i32_1 = arith.constant 0 : i32
    return %arg0, %c0_i32, %c0_i32_0 : i32, i32, i32
  }
  func.func @transform_1(%arg0: i32) -> (i32, i32, i32) {
    %c0_i32 = arith.constant 0 : i32
    %c0_i32_0 = arith.constant 0 : i32
    %c0_i32_1 = arith.constant 0 : i32
    return %arg0, %c0_i32, %c0_i32_0 : i32, i32, i32
  }
  func.func @transform_2(%arg0: i32) -> (i32, i32) {
    %c0_i32 = arith.constant 0 : i32
    %c0_i32_0 = arith.constant 0 : i32
    %c0_i32_1 = arith.constant 0 : i32
    return %c0_i32, %c0_i32_0 : i32, i32
  }
  func.func @transform_3(%arg0: i32) -> (i32, i32) {
    %c0_i32 = arith.constant 0 : i32
    %c0_i32_0 = arith.constant 0 : i32
    %c0_i32_1 = arith.constant 0 : i32
    return %c0_i32, %c0_i32_0 : i32, i32
  }
  func.func @transform_4(%arg0: i32) -> (i32, i32) {
    %c0_i32 = arith.constant 0 : i32
    %c0_i32_0 = arith.constant 0 : i32
    %c0_i32_1 = arith.constant 0 : i32
    return %c0_i32, %c0_i32_0 : i32, i32
  }
  func.func @transform_5(%arg0: i32) -> (i32, i32) {
    %c0_i32 = arith.constant 0 : i32
    %c0_i32_0 = arith.constant 0 : i32
    %c0_i32_1 = arith.constant 0 : i32
    return %c0_i32, %c0_i32_0 : i32, i32
  }
  func.func @transform_6(%arg0: i32) -> (i32, i32) {
    %c0_i32 = arith.constant 0 : i32
    %c0_i32_0 = arith.constant 0 : i32
    %c0_i32_1 = arith.constant 0 : i32
    return %c0_i32, %c0_i32_0 : i32, i32
  }
  func.func @transform_7(%arg0: i32) -> (i32, i32) {
    %c0_i32 = arith.constant 0 : i32
    %c0_i32_0 = arith.constant 0 : i32
    %c0_i32_1 = arith.constant 0 : i32
    return %c0_i32, %c0_i32_0 : i32, i32
  }
  func.func @transform_8(%arg0: i32) -> (i32, i32) {
    %c0_i32 = arith.constant 0 : i32
    %c0_i32_0 = arith.constant 0 : i32
    %c0_i32_1 = arith.constant 0 : i32
    return %c0_i32, %c0_i32_0 : i32, i32
  }
  func.func @transform_9(%arg0: i32) -> (i32, i32) {
    %c0_i32 = arith.constant 0 : i32
    %c0_i32_0 = arith.constant 0 : i32
    %c0_i32_1 = arith.constant 0 : i32
    return %c0_i32, %c0_i32_0 : i32, i32
  }
  func.func @transform_10(%arg0: i32) -> (i32, i32) {
    %c0_i32 = arith.constant 0 : i32
    %c0_i32_0 = arith.constant 0 : i32
    %c0_i32_1 = arith.constant 0 : i32
    return %c0_i32, %c0_i32_0 : i32, i32
  }
  func.func @transform_11(%arg0: i32) -> (i32, i32) {
    %c0_i32 = arith.constant 0 : i32
    %c0_i32_0 = arith.constant 0 : i32
    %c0_i32_1 = arith.constant 0 : i32
    return %c0_i32, %c0_i32_0 : i32, i32
  }
  func.func @transform_12(%arg0: i32) -> (i32, i32) {
    %c0_i32 = arith.constant 0 : i32
    %c0_i32_0 = arith.constant 0 : i32
    %c0_i32_1 = arith.constant 0 : i32
    return %c0_i32, %c0_i32_0 : i32, i32
  }
  func.func @transform_13(%arg0: i32) -> (i32, i32) {
    %c0_i32 = arith.constant 0 : i32
    %c0_i32_0 = arith.constant 0 : i32
    %c0_i32_1 = arith.constant 0 : i32
    return %c0_i32, %c0_i32_0 : i32, i32
  }
  func.func @transform_14(%arg0: i32) -> (i32, i32) {
    %c0_i32 = arith.constant 0 : i32
    %c0_i32_0 = arith.constant 0 : i32
    %c0_i32_1 = arith.constant 0 : i32
    return %c0_i32, %c0_i32_0 : i32, i32
  }
  func.func @transform_15(%arg0: i32) -> (i32, i32) {
    %c0_i32 = arith.constant 0 : i32
    %c0_i32_0 = arith.constant 0 : i32
    %c0_i32_1 = arith.constant 0 : i32
    return %c0_i32, %c0_i32_0 : i32, i32
  }
  func.func @transform_16(%arg0: i32) -> (i32, i32, i32) {
    %c0_i32 = arith.constant 0 : i32
    %c0_i32_0 = arith.constant 0 : i32
    %c0_i32_1 = arith.constant 0 : i32
    return %arg0, %c0_i32, %c0_i32_0 : i32, i32, i32
  }
}

module attributes {stable_mosaic.version = 11 : i64} {
  func.func @encoder_layer_kernel(%arg0: i32, %arg1: memref<1x16x128xf32, #tpu.memory_space<vmem>>, %arg2: memref<1x1x16xf32, #tpu.memory_space<vmem>>, %arg3: memref<128x384xbf16, #tpu.memory_space<vmem>>, %arg4: memref<1x384xf32, #tpu.memory_space<vmem>>, %arg5: memref<128x128xbf16, #tpu.memory_space<vmem>>, %arg6: memref<1x128xf32, #tpu.memory_space<vmem>>, %arg7: memref<128x256xbf16, #tpu.memory_space<vmem>>, %arg8: memref<1x256xf32, #tpu.memory_space<vmem>>, %arg9: memref<256x128xbf16, #tpu.memory_space<vmem>>, %arg10: memref<1x128xf32, #tpu.memory_space<vmem>>, %arg11: memref<1x128xf32, #tpu.memory_space<vmem>>, %arg12: memref<1x128xf32, #tpu.memory_space<vmem>>, %arg13: memref<1x256xf32, #tpu.memory_space<vmem>>, %arg14: memref<1x256xf32, #tpu.memory_space<vmem>>, %arg15: memref<1x128xf32, #tpu.memory_space<vmem>>, %arg16: memref<1x128xf32, #tpu.memory_space<vmem>>, %arg17: memref<1x16x128xf32, #tpu.memory_space<vmem>>) attributes {dimension_semantics = [#tpu.dimension_semantics<parallel>], iteration_bounds = array<i64: 4>, scalar_prefetch = 0 : i64, scratch_operands = 0 : i64, tpu.core_type = #tpu.core_type<tc>, window_params = [{transform_indices = @transform_0, window_bounds = array<i64: 1, 16, 128>}, {transform_indices = @transform_1, window_bounds = array<i64: 1, 1, 16>}, {pipeline_mode = #tpu.pipeline_mode<synchronous>, transform_indices = @transform_2, window_bounds = array<i64: 128, 384>}, {pipeline_mode = #tpu.pipeline_mode<synchronous>, transform_indices = @transform_3, window_bounds = array<i64: 1, 384>}, {pipeline_mode = #tpu.pipeline_mode<synchronous>, transform_indices = @transform_4, window_bounds = array<i64: 128, 128>}, {pipeline_mode = #tpu.pipeline_mode<synchronous>, transform_indices = @transform_5, window_bounds = array<i64: 1, 128>}, {pipeline_mode = #tpu.pipeline_mode<synchronous>, transform_indices = @transform_6, window_bounds = array<i64: 128, 256>}, {pipeline_mode = #tpu.pipeline_mode<synchronous>, transform_indices = @transform_7, window_bounds = array<i64: 1, 256>}, {pipeline_mode = #tpu.pipeline_mode<synchronous>, transform_indices = @transform_8, window_bounds = array<i64: 256, 128>}, {pipeline_mode = #tpu.pipeline_mode<synchronous>, transform_indices = @transform_9, window_bounds = array<i64: 1, 128>}, {pipeline_mode = #tpu.pipeline_mode<synchronous>, transform_indices = @transform_10, window_bounds = array<i64: 1, 128>}, {pipeline_mode = #tpu.pipeline_mode<synchronous>, transform_indices = @transform_11, window_bounds = array<i64: 1, 128>}, {pipeline_mode = #tpu.pipeline_mode<synchronous>, transform_indices = @transform_12, window_bounds = array<i64: 1, 256>}, {pipeline_mode = #tpu.pipeline_mode<synchronous>, transform_indices = @transform_13, window_bounds = array<i64: 1, 256>}, {pipeline_mode = #tpu.pipeline_mode<synchronous>, transform_indices = @transform_14, window_bounds = array<i64: 1, 128>}, {pipeline_mode = #tpu.pipeline_mode<synchronous>, transform_indices = @transform_15, window_bounds = array<i64: 1, 128>}, {transform_indices = @transform_16, window_bounds = array<i64: 1, 16, 128>}]} {
    %c0 = arith.constant 0 : index
    %c0_0 = arith.constant 0 : index
    %c0_1 = arith.constant 0 : index
    %0 = vector.load %arg1[%c0, %c0_0, %c0_1] : memref<1x16x128xf32, #tpu.memory_space<vmem>>, vector<1x16x128xf32>
    %1 = vector.shape_cast %0 : vector<1x16x128xf32> to vector<16x128xf32>
    %2 = arith.truncf %1 : vector<16x128xf32> to vector<16x128xbf16>
    %c0_2 = arith.constant 0 : index
    %c0_3 = arith.constant 0 : index
    %3 = vector.load %arg3[%c0_2, %c0_3] : memref<128x384xbf16, #tpu.memory_space<vmem>>, vector<128x384xbf16>
    %cst = arith.constant dense<0.000000e+00> : vector<16x384xf32>
    %4 = tpu.matmul %2, %3, %cst {dimension_numbers = #tpu.dot_dimension_numbers<[1], [0], [0], [1], [0, 0, 1, 1], [], []>} : vector<16x128xbf16>, vector<128x384xbf16>, vector<16x384xf32> -> vector<16x384xf32>
    %c0_4 = arith.constant 0 : index
    %c0_5 = arith.constant 0 : index
    %5 = vector.load %arg4[%c0_4, %c0_5] : memref<1x384xf32, #tpu.memory_space<vmem>>, vector<1x384xf32>
    %6 = vector.broadcast %5 : vector<1x384xf32> to vector<16x384xf32>
    %7 = arith.addf %4, %6 : vector<16x384xf32>
    %8 = vector.extract_strided_slice %7 {offsets = [0, 0], sizes = [16, 128], strides = [1, 1]} : vector<16x384xf32> to vector<16x128xf32>
    %9 = arith.truncf %8 : vector<16x128xf32> to vector<16x128xbf16>
    %10 = vector.extract_strided_slice %7 {offsets = [0, 128], sizes = [16, 128], strides = [1, 1]} : vector<16x384xf32> to vector<16x128xf32>
    %11 = arith.truncf %10 : vector<16x128xf32> to vector<16x128xbf16>
    %12 = vector.extract_strided_slice %7 {offsets = [0, 256], sizes = [16, 128], strides = [1, 1]} : vector<16x384xf32> to vector<16x128xf32>
    %13 = arith.truncf %12 : vector<16x128xf32> to vector<16x128xbf16>
    %c0_6 = arith.constant 0 : index
    %c0_7 = arith.constant 0 : index
    %c0_8 = arith.constant 0 : index
    %14 = vector.load %arg2[%c0_6, %c0_7, %c0_8] : memref<1x1x16xf32, #tpu.memory_space<vmem>>, vector<1x1x16xf32>
    %15 = vector.shape_cast %14 : vector<1x1x16xf32> to vector<1x16xf32>
    %16 = vector.extract_strided_slice %9 {offsets = [0, 0], sizes = [16, 32], strides = [1, 1]} : vector<16x128xbf16> to vector<16x32xbf16>
    %17 = vector.extract_strided_slice %11 {offsets = [0, 0], sizes = [16, 32], strides = [1, 1]} : vector<16x128xbf16> to vector<16x32xbf16>
    %cst_9 = arith.constant dense<0.000000e+00> : vector<16x16xf32>
    %18 = tpu.matmul %16, %17, %cst_9 {dimension_numbers = #tpu.dot_dimension_numbers<[1], [1], [0], [0], [0, 0, 1, 0], [], []>} : vector<16x32xbf16>, vector<16x32xbf16>, vector<16x16xf32> -> vector<16x16xf32>
    %19 = vector.broadcast %15 : vector<1x16xf32> to vector<16x16xf32>
    %20 = arith.addf %18, %19 : vector<16x16xf32>
    %cst_10 = arith.constant dense<0xFF800000> : vector<16xf32>
    %21 = vector.multi_reduction <maximumf>, %20, %cst_10 [1] : vector<16x16xf32> to vector<16xf32>
    %22 = vector.shape_cast %21 : vector<16xf32> to vector<16x1xf32>
    %23 = vector.broadcast %22 : vector<16x1xf32> to vector<16x16xf32>
    %24 = arith.subf %20, %23 : vector<16x16xf32>
    %25 = math.exp %24 : vector<16x16xf32>
    %cst_11 = arith.constant dense<0.000000e+00> : vector<16xf32>
    %26 = vector.multi_reduction <add>, %25, %cst_11 [1] : vector<16x16xf32> to vector<16xf32>
    %27 = vector.shape_cast %26 : vector<16xf32> to vector<16x1xf32>
    %28 = tpu.reciprocal %27 {approx = true} : vector<16x1xf32> -> vector<16x1xf32>
    %29 = arith.mulf %27, %28 : vector<16x1xf32>
    %cst_12 = arith.constant 2.000000e+00 : f32
    %30 = vector.broadcast %cst_12 : f32 to vector<16x1xf32>
    %31 = arith.subf %30, %29 : vector<16x1xf32>
    %32 = arith.mulf %28, %31 : vector<16x1xf32>
    %33 = vector.broadcast %32 : vector<16x1xf32> to vector<16x16xf32>
    %34 = arith.mulf %25, %33 : vector<16x16xf32>
    %35 = arith.truncf %34 : vector<16x16xf32> to vector<16x16xbf16>
    %36 = vector.extract_strided_slice %13 {offsets = [0, 0], sizes = [16, 32], strides = [1, 1]} : vector<16x128xbf16> to vector<16x32xbf16>
    %cst_13 = arith.constant dense<0.000000e+00> : vector<16x32xf32>
    %37 = tpu.matmul %35, %36, %cst_13 {dimension_numbers = #tpu.dot_dimension_numbers<[1], [0], [0], [1], [0, 0, 1, 1], [], []>} : vector<16x16xbf16>, vector<16x32xbf16>, vector<16x32xf32> -> vector<16x32xf32>
    %38 = vector.extract_strided_slice %9 {offsets = [0, 32], sizes = [16, 32], strides = [1, 1]} : vector<16x128xbf16> to vector<16x32xbf16>
    %39 = vector.extract_strided_slice %11 {offsets = [0, 32], sizes = [16, 32], strides = [1, 1]} : vector<16x128xbf16> to vector<16x32xbf16>
    %cst_14 = arith.constant dense<0.000000e+00> : vector<16x16xf32>
    %40 = tpu.matmul %38, %39, %cst_14 {dimension_numbers = #tpu.dot_dimension_numbers<[1], [1], [0], [0], [0, 0, 1, 0], [], []>} : vector<16x32xbf16>, vector<16x32xbf16>, vector<16x16xf32> -> vector<16x16xf32>
    %41 = vector.broadcast %15 : vector<1x16xf32> to vector<16x16xf32>
    %42 = arith.addf %40, %41 : vector<16x16xf32>
    %cst_15 = arith.constant dense<0xFF800000> : vector<16xf32>
    %43 = vector.multi_reduction <maximumf>, %42, %cst_15 [1] : vector<16x16xf32> to vector<16xf32>
    %44 = vector.shape_cast %43 : vector<16xf32> to vector<16x1xf32>
    %45 = vector.broadcast %44 : vector<16x1xf32> to vector<16x16xf32>
    %46 = arith.subf %42, %45 : vector<16x16xf32>
    %47 = math.exp %46 : vector<16x16xf32>
    %cst_16 = arith.constant dense<0.000000e+00> : vector<16xf32>
    %48 = vector.multi_reduction <add>, %47, %cst_16 [1] : vector<16x16xf32> to vector<16xf32>
    %49 = vector.shape_cast %48 : vector<16xf32> to vector<16x1xf32>
    %50 = tpu.reciprocal %49 {approx = true} : vector<16x1xf32> -> vector<16x1xf32>
    %51 = arith.mulf %49, %50 : vector<16x1xf32>
    %cst_17 = arith.constant 2.000000e+00 : f32
    %52 = vector.broadcast %cst_17 : f32 to vector<16x1xf32>
    %53 = arith.subf %52, %51 : vector<16x1xf32>
    %54 = arith.mulf %50, %53 : vector<16x1xf32>
    %55 = vector.broadcast %54 : vector<16x1xf32> to vector<16x16xf32>
    %56 = arith.mulf %47, %55 : vector<16x16xf32>
    %57 = arith.truncf %56 : vector<16x16xf32> to vector<16x16xbf16>
    %58 = vector.extract_strided_slice %13 {offsets = [0, 32], sizes = [16, 32], strides = [1, 1]} : vector<16x128xbf16> to vector<16x32xbf16>
    %cst_18 = arith.constant dense<0.000000e+00> : vector<16x32xf32>
    %59 = tpu.matmul %57, %58, %cst_18 {dimension_numbers = #tpu.dot_dimension_numbers<[1], [0], [0], [1], [0, 0, 1, 1], [], []>} : vector<16x16xbf16>, vector<16x32xbf16>, vector<16x32xf32> -> vector<16x32xf32>
    %60 = vector.extract_strided_slice %9 {offsets = [0, 64], sizes = [16, 32], strides = [1, 1]} : vector<16x128xbf16> to vector<16x32xbf16>
    %61 = vector.extract_strided_slice %11 {offsets = [0, 64], sizes = [16, 32], strides = [1, 1]} : vector<16x128xbf16> to vector<16x32xbf16>
    %cst_19 = arith.constant dense<0.000000e+00> : vector<16x16xf32>
    %62 = tpu.matmul %60, %61, %cst_19 {dimension_numbers = #tpu.dot_dimension_numbers<[1], [1], [0], [0], [0, 0, 1, 0], [], []>} : vector<16x32xbf16>, vector<16x32xbf16>, vector<16x16xf32> -> vector<16x16xf32>
    %63 = vector.broadcast %15 : vector<1x16xf32> to vector<16x16xf32>
    %64 = arith.addf %62, %63 : vector<16x16xf32>
    %cst_20 = arith.constant dense<0xFF800000> : vector<16xf32>
    %65 = vector.multi_reduction <maximumf>, %64, %cst_20 [1] : vector<16x16xf32> to vector<16xf32>
    %66 = vector.shape_cast %65 : vector<16xf32> to vector<16x1xf32>
    %67 = vector.broadcast %66 : vector<16x1xf32> to vector<16x16xf32>
    %68 = arith.subf %64, %67 : vector<16x16xf32>
    %69 = math.exp %68 : vector<16x16xf32>
    %cst_21 = arith.constant dense<0.000000e+00> : vector<16xf32>
    %70 = vector.multi_reduction <add>, %69, %cst_21 [1] : vector<16x16xf32> to vector<16xf32>
    %71 = vector.shape_cast %70 : vector<16xf32> to vector<16x1xf32>
    %72 = tpu.reciprocal %71 {approx = true} : vector<16x1xf32> -> vector<16x1xf32>
    %73 = arith.mulf %71, %72 : vector<16x1xf32>
    %cst_22 = arith.constant 2.000000e+00 : f32
    %74 = vector.broadcast %cst_22 : f32 to vector<16x1xf32>
    %75 = arith.subf %74, %73 : vector<16x1xf32>
    %76 = arith.mulf %72, %75 : vector<16x1xf32>
    %77 = vector.broadcast %76 : vector<16x1xf32> to vector<16x16xf32>
    %78 = arith.mulf %69, %77 : vector<16x16xf32>
    %79 = arith.truncf %78 : vector<16x16xf32> to vector<16x16xbf16>
    %80 = vector.extract_strided_slice %13 {offsets = [0, 64], sizes = [16, 32], strides = [1, 1]} : vector<16x128xbf16> to vector<16x32xbf16>
    %cst_23 = arith.constant dense<0.000000e+00> : vector<16x32xf32>
    %81 = tpu.matmul %79, %80, %cst_23 {dimension_numbers = #tpu.dot_dimension_numbers<[1], [0], [0], [1], [0, 0, 1, 1], [], []>} : vector<16x16xbf16>, vector<16x32xbf16>, vector<16x32xf32> -> vector<16x32xf32>
    %82 = vector.extract_strided_slice %9 {offsets = [0, 96], sizes = [16, 32], strides = [1, 1]} : vector<16x128xbf16> to vector<16x32xbf16>
    %83 = vector.extract_strided_slice %11 {offsets = [0, 96], sizes = [16, 32], strides = [1, 1]} : vector<16x128xbf16> to vector<16x32xbf16>
    %cst_24 = arith.constant dense<0.000000e+00> : vector<16x16xf32>
    %84 = tpu.matmul %82, %83, %cst_24 {dimension_numbers = #tpu.dot_dimension_numbers<[1], [1], [0], [0], [0, 0, 1, 0], [], []>} : vector<16x32xbf16>, vector<16x32xbf16>, vector<16x16xf32> -> vector<16x16xf32>
    %85 = vector.broadcast %15 : vector<1x16xf32> to vector<16x16xf32>
    %86 = arith.addf %84, %85 : vector<16x16xf32>
    %cst_25 = arith.constant dense<0xFF800000> : vector<16xf32>
    %87 = vector.multi_reduction <maximumf>, %86, %cst_25 [1] : vector<16x16xf32> to vector<16xf32>
    %88 = vector.shape_cast %87 : vector<16xf32> to vector<16x1xf32>
    %89 = vector.broadcast %88 : vector<16x1xf32> to vector<16x16xf32>
    %90 = arith.subf %86, %89 : vector<16x16xf32>
    %91 = math.exp %90 : vector<16x16xf32>
    %cst_26 = arith.constant dense<0.000000e+00> : vector<16xf32>
    %92 = vector.multi_reduction <add>, %91, %cst_26 [1] : vector<16x16xf32> to vector<16xf32>
    %93 = vector.shape_cast %92 : vector<16xf32> to vector<16x1xf32>
    %94 = tpu.reciprocal %93 {approx = true} : vector<16x1xf32> -> vector<16x1xf32>
    %95 = arith.mulf %93, %94 : vector<16x1xf32>
    %cst_27 = arith.constant 2.000000e+00 : f32
    %96 = vector.broadcast %cst_27 : f32 to vector<16x1xf32>
    %97 = arith.subf %96, %95 : vector<16x1xf32>
    %98 = arith.mulf %94, %97 : vector<16x1xf32>
    %99 = vector.broadcast %98 : vector<16x1xf32> to vector<16x16xf32>
    %100 = arith.mulf %91, %99 : vector<16x16xf32>
    %101 = arith.truncf %100 : vector<16x16xf32> to vector<16x16xbf16>
    %102 = vector.extract_strided_slice %13 {offsets = [0, 96], sizes = [16, 32], strides = [1, 1]} : vector<16x128xbf16> to vector<16x32xbf16>
    %cst_28 = arith.constant dense<0.000000e+00> : vector<16x32xf32>
    %103 = tpu.matmul %101, %102, %cst_28 {dimension_numbers = #tpu.dot_dimension_numbers<[1], [0], [0], [1], [0, 0, 1, 1], [], []>} : vector<16x16xbf16>, vector<16x32xbf16>, vector<16x32xf32> -> vector<16x32xf32>
    %104 = tpu.concatenate %37, %59, %81, %103 in 1 : vector<16x32xf32>, vector<16x32xf32>, vector<16x32xf32>, vector<16x32xf32> -> vector<16x128xf32>
    %105 = arith.truncf %104 : vector<16x128xf32> to vector<16x128xbf16>
    %c0_29 = arith.constant 0 : index
    %c0_30 = arith.constant 0 : index
    %106 = vector.load %arg5[%c0_29, %c0_30] : memref<128x128xbf16, #tpu.memory_space<vmem>>, vector<128x128xbf16>
    %cst_31 = arith.constant dense<0.000000e+00> : vector<16x128xf32>
    %107 = tpu.matmul %105, %106, %cst_31 {dimension_numbers = #tpu.dot_dimension_numbers<[1], [0], [0], [1], [0, 0, 1, 1], [], []>} : vector<16x128xbf16>, vector<128x128xbf16>, vector<16x128xf32> -> vector<16x128xf32>
    %c0_32 = arith.constant 0 : index
    %c0_33 = arith.constant 0 : index
    %108 = vector.load %arg6[%c0_32, %c0_33] : memref<1x128xf32, #tpu.memory_space<vmem>>, vector<1x128xf32>
    %109 = vector.broadcast %108 : vector<1x128xf32> to vector<16x128xf32>
    %110 = arith.addf %107, %109 : vector<16x128xf32>
    %111 = arith.addf %110, %1 : vector<16x128xf32>
    %c0_34 = arith.constant 0 : index
    %c0_35 = arith.constant 0 : index
    %112 = vector.load %arg11[%c0_34, %c0_35] : memref<1x128xf32, #tpu.memory_space<vmem>>, vector<1x128xf32>
    %c0_36 = arith.constant 0 : index
    %c0_37 = arith.constant 0 : index
    %113 = vector.load %arg12[%c0_36, %c0_37] : memref<1x128xf32, #tpu.memory_space<vmem>>, vector<1x128xf32>
    %cst_38 = arith.constant dense<0.000000e+00> : vector<16xf32>
    %114 = vector.multi_reduction <add>, %111, %cst_38 [1] : vector<16x128xf32> to vector<16xf32>
    %115 = vector.shape_cast %114 : vector<16xf32> to vector<16x1xf32>
    %cst_39 = arith.constant 1.280000e+02 : f32
    %116 = vector.broadcast %cst_39 : f32 to vector<16x1xf32>
    %117 = arith.divf %115, %116 : vector<16x1xf32>
    %118 = vector.broadcast %117 : vector<16x1xf32> to vector<16x128xf32>
    %119 = arith.subf %111, %118 : vector<16x128xf32>
    %120 = arith.mulf %119, %119 : vector<16x128xf32>
    %cst_40 = arith.constant dense<0.000000e+00> : vector<16xf32>
    %121 = vector.multi_reduction <add>, %120, %cst_40 [1] : vector<16x128xf32> to vector<16xf32>
    %122 = vector.shape_cast %121 : vector<16xf32> to vector<16x1xf32>
    %cst_41 = arith.constant 1.280000e+02 : f32
    %123 = vector.broadcast %cst_41 : f32 to vector<16x1xf32>
    %124 = arith.divf %122, %123 : vector<16x1xf32>
    %cst_42 = arith.constant 9.99999974E-6 : f32
    %125 = vector.broadcast %cst_42 : f32 to vector<16x1xf32>
    %126 = arith.addf %124, %125 : vector<16x1xf32>
    %127 = math.rsqrt %126 : vector<16x1xf32>
    %128 = vector.broadcast %117 : vector<16x1xf32> to vector<16x128xf32>
    %129 = arith.subf %111, %128 : vector<16x128xf32>
    %130 = vector.broadcast %127 : vector<16x1xf32> to vector<16x128xf32>
    %131 = arith.mulf %129, %130 : vector<16x128xf32>
    %132 = vector.broadcast %112 : vector<1x128xf32> to vector<16x128xf32>
    %133 = arith.mulf %131, %132 : vector<16x128xf32>
    %134 = vector.broadcast %113 : vector<1x128xf32> to vector<16x128xf32>
    %135 = arith.addf %133, %134 : vector<16x128xf32>
    %136 = arith.truncf %135 : vector<16x128xf32> to vector<16x128xbf16>
    %c0_43 = arith.constant 0 : index
    %c0_44 = arith.constant 0 : index
    %137 = vector.load %arg7[%c0_43, %c0_44] : memref<128x256xbf16, #tpu.memory_space<vmem>>, vector<128x256xbf16>
    %cst_45 = arith.constant dense<0.000000e+00> : vector<16x256xf32>
    %138 = tpu.matmul %136, %137, %cst_45 {dimension_numbers = #tpu.dot_dimension_numbers<[1], [0], [0], [1], [0, 0, 1, 1], [], []>} : vector<16x128xbf16>, vector<128x256xbf16>, vector<16x256xf32> -> vector<16x256xf32>
    %c0_46 = arith.constant 0 : index
    %c0_47 = arith.constant 0 : index
    %139 = vector.load %arg8[%c0_46, %c0_47] : memref<1x256xf32, #tpu.memory_space<vmem>>, vector<1x256xf32>
    %140 = vector.broadcast %139 : vector<1x256xf32> to vector<16x256xf32>
    %141 = arith.addf %138, %140 : vector<16x256xf32>
    %cst_48 = arith.constant 0.000000e+00 : f32
    %142 = vector.broadcast %cst_48 : f32 to vector<16x256xf32>
    %143 = arith.maximumf %141, %142 : vector<16x256xf32>
    %c0_49 = arith.constant 0 : index
    %c0_50 = arith.constant 0 : index
    %144 = vector.load %arg13[%c0_49, %c0_50] : memref<1x256xf32, #tpu.memory_space<vmem>>, vector<1x256xf32>
    %c0_51 = arith.constant 0 : index
    %c0_52 = arith.constant 0 : index
    %145 = vector.load %arg14[%c0_51, %c0_52] : memref<1x256xf32, #tpu.memory_space<vmem>>, vector<1x256xf32>
    %cst_53 = arith.constant dense<0.000000e+00> : vector<16xf32>
    %146 = vector.multi_reduction <add>, %143, %cst_53 [1] : vector<16x256xf32> to vector<16xf32>
    %147 = vector.shape_cast %146 : vector<16xf32> to vector<16x1xf32>
    %cst_54 = arith.constant 2.560000e+02 : f32
    %148 = vector.broadcast %cst_54 : f32 to vector<16x1xf32>
    %149 = arith.divf %147, %148 : vector<16x1xf32>
    %150 = vector.broadcast %149 : vector<16x1xf32> to vector<16x256xf32>
    %151 = arith.subf %143, %150 : vector<16x256xf32>
    %152 = arith.mulf %151, %151 : vector<16x256xf32>
    %cst_55 = arith.constant dense<0.000000e+00> : vector<16xf32>
    %153 = vector.multi_reduction <add>, %152, %cst_55 [1] : vector<16x256xf32> to vector<16xf32>
    %154 = vector.shape_cast %153 : vector<16xf32> to vector<16x1xf32>
    %cst_56 = arith.constant 2.560000e+02 : f32
    %155 = vector.broadcast %cst_56 : f32 to vector<16x1xf32>
    %156 = arith.divf %154, %155 : vector<16x1xf32>
    %cst_57 = arith.constant 9.99999974E-6 : f32
    %157 = vector.broadcast %cst_57 : f32 to vector<16x1xf32>
    %158 = arith.addf %156, %157 : vector<16x1xf32>
    %159 = math.rsqrt %158 : vector<16x1xf32>
    %160 = vector.broadcast %149 : vector<16x1xf32> to vector<16x256xf32>
    %161 = arith.subf %143, %160 : vector<16x256xf32>
    %162 = vector.broadcast %159 : vector<16x1xf32> to vector<16x256xf32>
    %163 = arith.mulf %161, %162 : vector<16x256xf32>
    %164 = vector.broadcast %144 : vector<1x256xf32> to vector<16x256xf32>
    %165 = arith.mulf %163, %164 : vector<16x256xf32>
    %166 = vector.broadcast %145 : vector<1x256xf32> to vector<16x256xf32>
    %167 = arith.addf %165, %166 : vector<16x256xf32>
    %168 = arith.truncf %167 : vector<16x256xf32> to vector<16x256xbf16>
    %c0_58 = arith.constant 0 : index
    %c0_59 = arith.constant 0 : index
    %169 = vector.load %arg9[%c0_58, %c0_59] : memref<256x128xbf16, #tpu.memory_space<vmem>>, vector<256x128xbf16>
    %cst_60 = arith.constant dense<0.000000e+00> : vector<16x128xf32>
    %170 = tpu.matmul %168, %169, %cst_60 {dimension_numbers = #tpu.dot_dimension_numbers<[1], [0], [0], [1], [0, 0, 1, 1], [], []>} : vector<16x256xbf16>, vector<256x128xbf16>, vector<16x128xf32> -> vector<16x128xf32>
    %c0_61 = arith.constant 0 : index
    %c0_62 = arith.constant 0 : index
    %171 = vector.load %arg10[%c0_61, %c0_62] : memref<1x128xf32, #tpu.memory_space<vmem>>, vector<1x128xf32>
    %172 = vector.broadcast %171 : vector<1x128xf32> to vector<16x128xf32>
    %173 = arith.addf %170, %172 : vector<16x128xf32>
    %174 = arith.addf %173, %135 : vector<16x128xf32>
    %c0_63 = arith.constant 0 : index
    %c0_64 = arith.constant 0 : index
    %175 = vector.load %arg15[%c0_63, %c0_64] : memref<1x128xf32, #tpu.memory_space<vmem>>, vector<1x128xf32>
    %c0_65 = arith.constant 0 : index
    %c0_66 = arith.constant 0 : index
    %176 = vector.load %arg16[%c0_65, %c0_66] : memref<1x128xf32, #tpu.memory_space<vmem>>, vector<1x128xf32>
    %cst_67 = arith.constant dense<0.000000e+00> : vector<16xf32>
    %177 = vector.multi_reduction <add>, %174, %cst_67 [1] : vector<16x128xf32> to vector<16xf32>
    %178 = vector.shape_cast %177 : vector<16xf32> to vector<16x1xf32>
    %cst_68 = arith.constant 1.280000e+02 : f32
    %179 = vector.broadcast %cst_68 : f32 to vector<16x1xf32>
    %180 = arith.divf %178, %179 : vector<16x1xf32>
    %181 = vector.broadcast %180 : vector<16x1xf32> to vector<16x128xf32>
    %182 = arith.subf %174, %181 : vector<16x128xf32>
    %183 = arith.mulf %182, %182 : vector<16x128xf32>
    %cst_69 = arith.constant dense<0.000000e+00> : vector<16xf32>
    %184 = vector.multi_reduction <add>, %183, %cst_69 [1] : vector<16x128xf32> to vector<16xf32>
    %185 = vector.shape_cast %184 : vector<16xf32> to vector<16x1xf32>
    %cst_70 = arith.constant 1.280000e+02 : f32
    %186 = vector.broadcast %cst_70 : f32 to vector<16x1xf32>
    %187 = arith.divf %185, %186 : vector<16x1xf32>
    %cst_71 = arith.constant 9.99999974E-6 : f32
    %188 = vector.broadcast %cst_71 : f32 to vector<16x1xf32>
    %189 = arith.addf %187, %188 : vector<16x1xf32>
    %190 = math.rsqrt %189 : vector<16x1xf32>
    %191 = vector.broadcast %180 : vector<16x1xf32> to vector<16x128xf32>
    %192 = arith.subf %174, %191 : vector<16x128xf32>
    %193 = vector.broadcast %190 : vector<16x1xf32> to vector<16x128xf32>
    %194 = arith.mulf %192, %193 : vector<16x128xf32>
    %195 = vector.broadcast %175 : vector<1x128xf32> to vector<16x128xf32>
    %196 = arith.mulf %194, %195 : vector<16x128xf32>
    %197 = vector.broadcast %176 : vector<1x128xf32> to vector<16x128xf32>
    %198 = arith.addf %196, %197 : vector<16x128xf32>
    %c0_72 = arith.constant 0 : index
    %c0_73 = arith.constant 0 : index
    %c0_74 = arith.constant 0 : index
    %199 = vector.load %arg17[%c0_72, %c0_73, %c0_74] : memref<1x16x128xf32, #tpu.memory_space<vmem>>, vector<1x16x128xf32>
    %200 = vector.shape_cast %199 : vector<1x16x128xf32> to vector<16x128xf32>
    %201 = vector.shape_cast %198 : vector<16x128xf32> to vector<1x16x128xf32>
    tpu.vector_store %arg17[%c0_72, %c0_73, %c0_74], %201 {strides = array<i32>} : memref<1x16x128xf32, #tpu.memory_space<vmem>>, vector<1x16x128xf32>,
    return
  }
  func.func @transform_0(%arg0: i32) -> (i32, i32, i32) {
    %c0_i32 = arith.constant 0 : i32
    %c0_i32_0 = arith.constant 0 : i32
    %c0_i32_1 = arith.constant 0 : i32
    return %arg0, %c0_i32, %c0_i32_0 : i32, i32, i32
  }
  func.func @transform_1(%arg0: i32) -> (i32, i32, i32) {
    %c0_i32 = arith.constant 0 : i32
    %c0_i32_0 = arith.constant 0 : i32
    %c0_i32_1 = arith.constant 0 : i32
    return %arg0, %c0_i32, %c0_i32_0 : i32, i32, i32
  }
  func.func @transform_2(%arg0: i32) -> (i32, i32) {
    %c0_i32 = arith.constant 0 : i32
    %c0_i32_0 = arith.constant 0 : i32
    %c0_i32_1 = arith.constant 0 : i32
    return %c0_i32, %c0_i32_0 : i32, i32
  }
  func.func @transform_3(%arg0: i32) -> (i32, i32) {
    %c0_i32 = arith.constant 0 : i32
    %c0_i32_0 = arith.constant 0 : i32
    %c0_i32_1 = arith.constant 0 : i32
    return %c0_i32, %c0_i32_0 : i32, i32
  }
  func.func @transform_4(%arg0: i32) -> (i32, i32) {
    %c0_i32 = arith.constant 0 : i32
    %c0_i32_0 = arith.constant 0 : i32
    %c0_i32_1 = arith.constant 0 : i32
    return %c0_i32, %c0_i32_0 : i32, i32
  }
  func.func @transform_5(%arg0: i32) -> (i32, i32) {
    %c0_i32 = arith.constant 0 : i32
    %c0_i32_0 = arith.constant 0 : i32
    %c0_i32_1 = arith.constant 0 : i32
    return %c0_i32, %c0_i32_0 : i32, i32
  }
  func.func @transform_6(%arg0: i32) -> (i32, i32) {
    %c0_i32 = arith.constant 0 : i32
    %c0_i32_0 = arith.constant 0 : i32
    %c0_i32_1 = arith.constant 0 : i32
    return %c0_i32, %c0_i32_0 : i32, i32
  }
  func.func @transform_7(%arg0: i32) -> (i32, i32) {
    %c0_i32 = arith.constant 0 : i32
    %c0_i32_0 = arith.constant 0 : i32
    %c0_i32_1 = arith.constant 0 : i32
    return %c0_i32, %c0_i32_0 : i32, i32
  }
  func.func @transform_8(%arg0: i32) -> (i32, i32) {
    %c0_i32 = arith.constant 0 : i32
    %c0_i32_0 = arith.constant 0 : i32
    %c0_i32_1 = arith.constant 0 : i32
    return %c0_i32, %c0_i32_0 : i32, i32
  }
  func.func @transform_9(%arg0: i32) -> (i32, i32) {
    %c0_i32 = arith.constant 0 : i32
    %c0_i32_0 = arith.constant 0 : i32
    %c0_i32_1 = arith.constant 0 : i32
    return %c0_i32, %c0_i32_0 : i32, i32
  }
  func.func @transform_10(%arg0: i32) -> (i32, i32) {
    %c0_i32 = arith.constant 0 : i32
    %c0_i32_0 = arith.constant 0 : i32
    %c0_i32_1 = arith.constant 0 : i32
    return %c0_i32, %c0_i32_0 : i32, i32
  }
  func.func @transform_11(%arg0: i32) -> (i32, i32) {
    %c0_i32 = arith.constant 0 : i32
    %c0_i32_0 = arith.constant 0 : i32
    %c0_i32_1 = arith.constant 0 : i32
    return %c0_i32, %c0_i32_0 : i32, i32
  }
  func.func @transform_12(%arg0: i32) -> (i32, i32) {
    %c0_i32 = arith.constant 0 : i32
    %c0_i32_0 = arith.constant 0 : i32
    %c0_i32_1 = arith.constant 0 : i32
    return %c0_i32, %c0_i32_0 : i32, i32
  }
  func.func @transform_13(%arg0: i32) -> (i32, i32) {
    %c0_i32 = arith.constant 0 : i32
    %c0_i32_0 = arith.constant 0 : i32
    %c0_i32_1 = arith.constant 0 : i32
    return %c0_i32, %c0_i32_0 : i32, i32
  }
  func.func @transform_14(%arg0: i32) -> (i32, i32) {
    %c0_i32 = arith.constant 0 : i32
    %c0_i32_0 = arith.constant 0 : i32
    %c0_i32_1 = arith.constant 0 : i32
    return %c0_i32, %c0_i32_0 : i32, i32
  }
  func.func @transform_15(%arg0: i32) -> (i32, i32) {
    %c0_i32 = arith.constant 0 : i32
    %c0_i32_0 = arith.constant 0 : i32
    %c0_i32_1 = arith.constant 0 : i32
    return %c0_i32, %c0_i32_0 : i32, i32
  }
  func.func @transform_16(%arg0: i32) -> (i32, i32, i32) {
    %c0_i32 = arith.constant 0 : i32
    %c0_i32_0 = arith.constant 0 : i32
    %c0_i32_1 = arith.constant 0 : i32
    return %arg0, %c0_i32, %c0_i32_0 : i32, i32, i32
  }
}

</mosaic_0001>

<llo_original>
// kernel: encoder_layer_forward.1
$region0: #{encoder_layer_forward.1}
  #allocation0 [shape = 'u32[]', space=smem, size = 0x4, offset = 0x4, fixed_abs, tag = 'smem constant byte address 0x4 - core index']
  #allocation1 [shape = 'u32[144,128]{1,0:T(1,128)}', space=vmem, size = 0x12000, scoped, tag = 'internal scratch']
  %s0 = inlined_call_operand.vmem [shape: f32[4,16,128], index: 0, kind: input, shape index: {}]
  %s1 = inlined_call_operand.vmem [shape: f32[4,1,16], index: 1, kind: input, shape index: {}]
  %s2 = inlined_call_operand.vmem [shape: bf16[128,384], index: 2, kind: input, shape index: {}]
  %s3 = inlined_call_operand.hbm [shape: f32[1,384], index: 3, kind: input, shape index: {}]
  %s4 = inlined_call_operand.hbm [shape: bf16[128,128], index: 4, kind: input, shape index: {}]
  %s5 = inlined_call_operand.vmem [shape: f32[1,128], index: 5, kind: input, shape index: {}]
  %s6 = inlined_call_operand.hbm [shape: bf16[128,256], index: 6, kind: input, shape index: {}]
  %s7 = inlined_call_operand.hbm [shape: f32[1,256], index: 7, kind: input, shape index: {}]
  %s8 = inlined_call_operand.hbm [shape: bf16[256,128], index: 8, kind: input, shape index: {}]
  %s9 = inlined_call_operand.hbm [shape: f32[1,128], index: 9, kind: input, shape index: {}]
  %s10 = inlined_call_operand.hbm [shape: f32[1,128], index: 10, kind: input, shape index: {}]
  %s11 = inlined_call_operand.hbm [shape: f32[1,128], index: 11, kind: input, shape index: {}]
  %s12 = inlined_call_operand.hbm [shape: f32[1,256], index: 12, kind: input, shape index: {}]
  %s13 = inlined_call_operand.hbm [shape: f32[1,256], index: 13, kind: input, shape index: {}]
  %s14 = inlined_call_operand.hbm [shape: f32[1,128], index: 14, kind: input, shape index: {}]
  %s15 = inlined_call_operand.hbm [shape: f32[1,128], index: 15, kind: input, shape index: {}]
  %s16 = inlined_call_operand.vmem [shape: f32[4,16,128], index: 16, kind: output, shape index: {}]
  %s17 = sld [smem:[#allocation0]]
  $region145: #{encoder_layer_forward.1} parent=0
    _
  %s19 = ssub.s32 1, %s17
  %s20 = scalar_select 0, %s19, %s17
  $region1: #{encoder_layer_forward.1} parent=0
    #allocation2 [shape = 'u8[1536]{0}', space=vmem, size = 0x800, scoped, tag = 'input window, operand 3, single buffered']
    #allocation3 [shape = 's32[2]{0}', space=sflag, size = 0x8, scoped, tag = 'scoped memory for encoder_layer_forward.1']
    #allocation4 [shape = 'u8[32768]{0}', space=vmem, size = 0x8000, scoped, tag = 'input window, operand 4, single buffered']
    #allocation5 [shape = 's32[1]{0}', space=sflag, size = 0x4, scoped, tag = 'scoped memory for encoder_layer_forward.1']
    #allocation6 [shape = 'u8[65536]{0}', space=vmem, size = 0x10000, scoped, tag = 'input window, operand 6, single buffered']
    #allocation7 [shape = 'u8[1024]{0}', space=vmem, size = 0x400, scoped, tag = 'input window, operand 7, single buffered']
    #allocation8 [shape = 's32[1]{0}', space=sflag, size = 0x4, scoped, tag = 'scoped memory for encoder_layer_forward.1']
    #allocation9 [shape = 'u8[65536]{0}', space=vmem, size = 0x10000, scoped, tag = 'input window, operand 8, single buffered']
    #allocation10 [shape = 'u8[512]{0}', space=vmem, size = 0x400, scoped, tag = 'input window, operand 9, single buffered']
    #allocation11 [shape = 's32[1]{0}', space=sflag, size = 0x4, scoped, tag = 'scoped memory for encoder_layer_forward.1']
    #allocation12 [shape = 'u8[512]{0}', space=vmem, size = 0x400, scoped, tag = 'input window, operand 10, single buffered']
    #allocation13 [shape = 'u8[512]{0}', space=vmem, size = 0x400, scoped, tag = 'input window, operand 11, single buffered']
    #allocation14 [shape = 's32[1]{0}', space=sflag, size = 0x4, scoped, tag = 'scoped memory for encoder_layer_forward.1']
    #allocation15 [shape = 'u8[1024]{0}', space=vmem, size = 0x400, scoped, tag = 'input window, operand 12, single buffered']
    #allocation16 [shape = 'u8[1024]{0}', space=vmem, size = 0x400, scoped, tag = 'input window, operand 13, single buffered']
    #allocation17 [shape = 's32[1]{0}', space=sflag, size = 0x4, scoped, tag = 'scoped memory for encoder_layer_forward.1']
    #allocation18 [shape = 'u8[512]{0}', space=vmem, size = 0x400, scoped, tag = 'input window, operand 14, single buffered']
    #allocation19 [shape = 'u8[512]{0}', space=vmem, size = 0x400, scoped, tag = 'input window, operand 15, single buffered']
    #allocation20 [shape = 's32[1]{0}', space=sflag, size = 0x4, scoped, tag = 'scoped memory for encoder_layer_forward.1']
    %21 = vsyncpa [#allocation3], 0
    %22 = vsyncpa [#allocation5], 0
    %23 = vsyncpa [#allocation8], 0
    %24 = vsyncpa [#allocation11], 0
    %25 = vsyncpa [#allocation14], 0
    %26 = vsyncpa [#allocation17], 0
    %27 = vsyncpa [#allocation20], 0
    loop: start=0, step=1, limit=6
    $region2: #{encoder_layer_forward.1} parent=1 // loop_pre_header
      _
    $region3: #{encoder_layer_forward.1} parent=1 // loop_header
      %s29 = sphi 0, %s33
      %p30 = scmp.ge.s32.totalorder %s29, 6
      %s39 = sphi 0, %s41
      %s42 = sphi 0, %s39
      %s43 = sphi 0, %s42
      %s59 = sphi 0, %s43
      %s65 = sphi 0, %s67
      %s68 = sphi 0, %s65
      %s69 = sphi 0, %s68
      %s85 = sphi 0, %s69
      %s89 = sphi 0, %s89
      %s91 = sphi 0, %s89
      %s92 = sphi 0, %s91
      %s106 = sphi 0, %s92
      %s110 = sphi 0, %s110
      %s112 = sphi 0, %s110
      %s113 = sphi 0, %s112
      %s127 = sphi 0, %s113
      %s131 = sphi 0, %s131
      %s133 = sphi 0, %s131
      %s134 = sphi 0, %s133
      %s148 = sphi 0, %s134
      %s152 = sphi 0, %s152
      %s154 = sphi 0, %s152
      %s155 = sphi 0, %s154
      %s169 = sphi 0, %s155
      %s173 = sphi 0, %s173
      %s175 = sphi 0, %s173
      %s176 = sphi 0, %s175
      %s190 = sphi 0, %s176
      %s194 = sphi 0, %s194
      %s196 = sphi 0, %s194
      %s197 = sphi 0, %s196
      %s211 = sphi 0, %s197
      %s215 = sphi 0, %s215
      %s217 = sphi 0, %s215
      %s218 = sphi 0, %s217
      %s232 = sphi 0, %s218
      %s236 = sphi 0, %s236
      %s238 = sphi 0, %s236
      %s239 = sphi 0, %s238
      %s253 = sphi 0, %s239
      %s257 = sphi 0, %s257
      %s259 = sphi 0, %s257
      %s260 = sphi 0, %s259
      %s274 = sphi 0, %s260
      %s278 = sphi 0, %s278
      %s280 = sphi 0, %s278
      %s281 = sphi 0, %s280
      %s295 = sphi 0, %s281
      %s299 = sphi 0, %s299
      %s301 = sphi 0, %s299
      %s302 = sphi 0, %s301
      %s316 = sphi 0, %s302
      %s320 = sphi 0, %s320
      %s322 = sphi 0, %s320
      %s323 = sphi 0, %s322
      %s337 = sphi 0, %s323
      %s341 = sphi 0, %s341
      %s343 = sphi 0, %s341
      %s344 = sphi 0, %s343
      %s358 = sphi 0, %s344
      %s362 = sphi 0, %s362
      %s364 = sphi 0, %s362
      %s365 = sphi 0, %s364
      %s379 = sphi 0, %s365
      %s385 = sphi 0, %s387
      %s388 = sphi 0, %s385
      %s389 = sphi 0, %s388
      %s405 = sphi 0, %s389
    $region4: #{encoder_layer_forward.1} parent=1 // loop_header_branch
      %32 = sbr.rel (%p30) target = $region8
    $region5: #{encoder_layer_forward.1} parent=1 // loop_body
      %s34 = ssub.s32 %s29, 1
      %s35 = ssub.s32 %s29, 2
      %s36 = sadd.s32 %s29, 1
      %s37 = ssub.s32 %s29, %s36
      %p38 = scmp.eq.s32.totalorder %s37, 0
      %s40 = sadd.s32 %s39, 1
      %s41 = scalar_select %p38, %s39, %s40
      %p44 = pneg %p38
      %p45 = scmp.eq.s32.totalorder %s29, 3
      %p46 = por %p44, %p45
      %p47 = scmp.ne.s32.totalorder %s39, %s42
      %p48 = scmp.eq.s32.totalorder %s29, 0
      %p49 = por %p47, %p48
      %p50 = scmp.ne.s32.totalorder %s39, %s42
      %p51 = scmp.eq.s32.totalorder %s34, 3
      %p52 = por %p50, %p51
      %p53 = scmp.ne.s32.totalorder %s42, %s43
      %p54 = scmp.eq.s32.totalorder %s34, 0
      %p55 = por %p53, %p54
      %p56 = scmp.ne.s32.totalorder %s42, %s43
      %p57 = scmp.eq.s32.totalorder %s35, 3
      %p58 = por %p56, %p57
      %p60 = scmp.ne.s32.totalorder %s43, %s59
      %p61 = scmp.eq.s32.totalorder %s35, 0
      %p62 = por %p60, %p61
      %s63 = ssub.s32 %s29, %s36
      %p64 = scmp.eq.s32.totalorder %s63, 0
      %s66 = sadd.s32 %s65, 1
      %s67 = scalar_select %p64, %s65, %s66
      %p70 = pneg %p64
      %p71 = scmp.eq.s32.totalorder %s29, 3
      %p72 = por %p70, %p71
      %p73 = scmp.ne.s32.totalorder %s65, %s68
      %p74 = scmp.eq.s32.totalorder %s29, 0
      %p75 = por %p73, %p74
      %p76 = scmp.ne.s32.totalorder %s65, %s68
      %p77 = scmp.eq.s32.totalorder %s34, 3
      %p78 = por %p76, %p77
      %p79 = scmp.ne.s32.totalorder %s68, %s69
      %p80 = scmp.eq.s32.totalorder %s34, 0
      %p81 = por %p79, %p80
      %p82 = scmp.ne.s32.totalorder %s68, %s69
      %p83 = scmp.eq.s32.totalorder %s35, 3
      %p84 = por %p82, %p83
      %p86 = scmp.ne.s32.totalorder %s69, %s85
      %p87 = scmp.eq.s32.totalorder %s35, 0
      %p88 = por %p86, %p87
      %s90 = sadd.s32 %s89, 1
      %p93 = scmp.eq.s32.totalorder %s29, 3
      %p94 = scmp.ne.s32.totalorder %s89, %s91
      %p95 = scmp.eq.s32.totalorder %s29, 0
      %p96 = por %p94, %p95
      %p97 = scmp.ne.s32.totalorder %s89, %s91
      %p98 = scmp.eq.s32.totalorder %s34, 3
      %p99 = por %p97, %p98
      %p100 = scmp.ne.s32.totalorder %s91, %s92
      %p101 = scmp.eq.s32.totalorder %s34, 0
      %p102 = por %p100, %p101
      %p103 = scmp.ne.s32.totalorder %s91, %s92
      %p104 = scmp.eq.s32.totalorder %s35, 3
      %p105 = por %p103, %p104
      %p107 = scmp.ne.s32.totalorder %s92, %s106
      %p108 = scmp.eq.s32.totalorder %s35, 0
      %p109 = por %p107, %p108
      %s111 = sadd.s32 %s110, 1
      %p114 = scmp.eq.s32.totalorder %s29, 3
      %p115 = scmp.ne.s32.totalorder %s110, %s112
      %p116 = scmp.eq.s32.totalorder %s29, 0
      %p117 = por %p115, %p116
      %p118 = scmp.ne.s32.totalorder %s110, %s112
      %p119 = scmp.eq.s32.totalorder %s34, 3
      %p120 = por %p118, %p119
      %p121 = scmp.ne.s32.totalorder %s112, %s113
      %p122 = scmp.eq.s32.totalorder %s34, 0
      %p123 = por %p121, %p122
      %p124 = scmp.ne.s32.totalorder %s112, %s113
      %p125 = scmp.eq.s32.totalorder %s35, 3
      %p126 = por %p124, %p125
      %p128 = scmp.ne.s32.totalorder %s113, %s127
      %p129 = scmp.eq.s32.totalorder %s35, 0
      %p130 = por %p128, %p129
      %s132 = sadd.s32 %s131, 1
      %p135 = scmp.eq.s32.totalorder %s29, 3
      %p136 = scmp.ne.s32.totalorder %s131, %s133
      %p137 = scmp.eq.s32.totalorder %s29, 0
      %p138 = por %p136, %p137
      %p139 = scmp.ne.s32.totalorder %s131, %s133
      %p140 = scmp.eq.s32.totalorder %s34, 3
      %p141 = por %p139, %p140
      %p142 = scmp.ne.s32.totalorder %s133, %s134
      %p143 = scmp.eq.s32.totalorder %s34, 0
      %p144 = por %p142, %p143
      %p145 = scmp.ne.s32.totalorder %s133, %s134
      %p146 = scmp.eq.s32.totalorder %s35, 3
      %p147 = por %p145, %p146
      %p149 = scmp.ne.s32.totalorder %s134, %s148
      %p150 = scmp.eq.s32.totalorder %s35, 0
      %p151 = por %p149, %p150
      %s153 = sadd.s32 %s152, 1
      %p156 = scmp.eq.s32.totalorder %s29, 3
      %p157 = scmp.ne.s32.totalorder %s152, %s154
      %p158 = scmp.eq.s32.totalorder %s29, 0
      %p159 = por %p157, %p158
      %p160 = scmp.ne.s32.totalorder %s152, %s154
      %p161 = scmp.eq.s32.totalorder %s34, 3
      %p162 = por %p160, %p161
      %p163 = scmp.ne.s32.totalorder %s154, %s155
      %p164 = scmp.eq.s32.totalorder %s34, 0
      %p165 = por %p163, %p164
      %p166 = scmp.ne.s32.totalorder %s154, %s155
      %p167 = scmp.eq.s32.totalorder %s35, 3
      %p168 = por %p166, %p167
      %p170 = scmp.ne.s32.totalorder %s155, %s169
      %p171 = scmp.eq.s32.totalorder %s35, 0
      %p172 = por %p170, %p171
      %s174 = sadd.s32 %s173, 1
      %p177 = scmp.eq.s32.totalorder %s29, 3
      %p178 = scmp.ne.s32.totalorder %s173, %s175
      %p179 = scmp.eq.s32.totalorder %s29, 0
      %p180 = por %p178, %p179
      %p181 = scmp.ne.s32.totalorder %s173, %s175
      %p182 = scmp.eq.s32.totalorder %s34, 3
      %p183 = por %p181, %p182
      %p184 = scmp.ne.s32.totalorder %s175, %s176
      %p185 = scmp.eq.s32.totalorder %s34, 0
      %p186 = por %p184, %p185
      %p187 = scmp.ne.s32.totalorder %s175, %s176
      %p188 = scmp.eq.s32.totalorder %s35, 3
      %p189 = por %p187, %p188
      %p191 = scmp.ne.s32.totalorder %s176, %s190
      %p192 = scmp.eq.s32.totalorder %s35, 0
      %p193 = por %p191, %p192
      %s195 = sadd.s32 %s194, 1
      %p198 = scmp.eq.s32.totalorder %s29, 3
      %p199 = scmp.ne.s32.totalorder %s194, %s196
      %p200 = scmp.eq.s32.totalorder %s29, 0
      %p201 = por %p199, %p200
      %p202 = scmp.ne.s32.totalorder %s194, %s196
      %p203 = scmp.eq.s32.totalorder %s34, 3
      %p204 = por %p202, %p203
      %p205 = scmp.ne.s32.totalorder %s196, %s197
      %p206 = scmp.eq.s32.totalorder %s34, 0
      %p207 = por %p205, %p206
      %p208 = scmp.ne.s32.totalorder %s196, %s197
      %p209 = scmp.eq.s32.totalorder %s35, 3
      %p210 = por %p208, %p209
      %p212 = scmp.ne.s32.totalorder %s197, %s211
      %p213 = scmp.eq.s32.totalorder %s35, 0
      %p214 = por %p212, %p213
      %s216 = sadd.s32 %s215, 1
      %p219 = scmp.eq.s32.totalorder %s29, 3
      %p220 = scmp.ne.s32.totalorder %s215, %s217
      %p221 = scmp.eq.s32.totalorder %s29, 0
      %p222 = por %p220, %p221
      %p223 = scmp.ne.s32.totalorder %s215, %s217
      %p224 = scmp.eq.s32.totalorder %s34, 3
      %p225 = por %p223, %p224
      %p226 = scmp.ne.s32.totalorder %s217, %s218
      %p227 = scmp.eq.s32.totalorder %s34, 0
      %p228 = por %p226, %p227
      %p229 = scmp.ne.s32.totalorder %s217, %s218
      %p230 = scmp.eq.s32.totalorder %s35, 3
      %p231 = por %p229, %p230
      %p233 = scmp.ne.s32.totalorder %s218, %s232
      %p234 = scmp.eq.s32.totalorder %s35, 0
      %p235 = por %p233, %p234
      %s237 = sadd.s32 %s236, 1
      %p240 = scmp.eq.s32.totalorder %s29, 3
      %p241 = scmp.ne.s32.totalorder %s236, %s238
      %p242 = scmp.eq.s32.totalorder %s29, 0
      %p243 = por %p241, %p242
      %p244 = scmp.ne.s32.totalorder %s236, %s238
      %p245 = scmp.eq.s32.totalorder %s34, 3
      %p246 = por %p244, %p245
      %p247 = scmp.ne.s32.totalorder %s238, %s239
      %p248 = scmp.eq.s32.totalorder %s34, 0
      %p249 = por %p247, %p248
      %p250 = scmp.ne.s32.totalorder %s238, %s239
      %p251 = scmp.eq.s32.totalorder %s35, 3
      %p252 = por %p250, %p251
      %p254 = scmp.ne.s32.totalorder %s239, %s253
      %p255 = scmp.eq.s32.totalorder %s35, 0
      %p256 = por %p254, %p255
      %s258 = sadd.s32 %s257, 1
      %p261 = scmp.eq.s32.totalorder %s29, 3
      %p262 = scmp.ne.s32.totalorder %s257, %s259
      %p263 = scmp.eq.s32.totalorder %s29, 0
      %p264 = por %p262, %p263
      %p265 = scmp.ne.s32.totalorder %s257, %s259
      %p266 = scmp.eq.s32.totalorder %s34, 3
      %p267 = por %p265, %p266
      %p268 = scmp.ne.s32.totalorder %s259, %s260
      %p269 = scmp.eq.s32.totalorder %s34, 0
      %p270 = por %p268, %p269
      %p271 = scmp.ne.s32.totalorder %s259, %s260
      %p272 = scmp.eq.s32.totalorder %s35, 3
      %p273 = por %p271, %p272
      %p275 = scmp.ne.s32.totalorder %s260, %s274
      %p276 = scmp.eq.s32.totalorder %s35, 0
      %p277 = por %p275, %p276
      %s279 = sadd.s32 %s278, 1
      %p282 = scmp.eq.s32.totalorder %s29, 3
      %p283 = scmp.ne.s32.totalorder %s278, %s280
      %p284 = scmp.eq.s32.totalorder %s29, 0
      %p285 = por %p283, %p284
      %p286 = scmp.ne.s32.totalorder %s278, %s280
      %p287 = scmp.eq.s32.totalorder %s34, 3
      %p288 = por %p286, %p287
      %p289 = scmp.ne.s32.totalorder %s280, %s281
      %p290 = scmp.eq.s32.totalorder %s34, 0
      %p291 = por %p289, %p290
      %p292 = scmp.ne.s32.totalorder %s280, %s281
      %p293 = scmp.eq.s32.totalorder %s35, 3
      %p294 = por %p292, %p293
      %p296 = scmp.ne.s32.totalorder %s281, %s295
      %p297 = scmp.eq.s32.totalorder %s35, 0
      %p298 = por %p296, %p297
      %s300 = sadd.s32 %s299, 1
      %p303 = scmp.eq.s32.totalorder %s29, 3
      %p304 = scmp.ne.s32.totalorder %s299, %s301
      %p305 = scmp.eq.s32.totalorder %s29, 0
      %p306 = por %p304, %p305
      %p307 = scmp.ne.s32.totalorder %s299, %s301
      %p308 = scmp.eq.s32.totalorder %s34, 3
      %p309 = por %p307, %p308
      %p310 = scmp.ne.s32.totalorder %s301, %s302
      %p311 = scmp.eq.s32.totalorder %s34, 0
      %p312 = por %p310, %p311
      %p313 = scmp.ne.s32.totalorder %s301, %s302
      %p314 = scmp.eq.s32.totalorder %s35, 3
      %p315 = por %p313, %p314
      %p317 = scmp.ne.s32.totalorder %s302, %s316
      %p318 = scmp.eq.s32.totalorder %s35, 0
      %p319 = por %p317, %p318
      %s321 = sadd.s32 %s320, 1
      %p324 = scmp.eq.s32.totalorder %s29, 3
      %p325 = scmp.ne.s32.totalorder %s320, %s322
      %p326 = scmp.eq.s32.totalorder %s29, 0
      %p327 = por %p325, %p326
      %p328 = scmp.ne.s32.totalorder %s320, %s322
      %p329 = scmp.eq.s32.totalorder %s34, 3
      %p330 = por %p328, %p329
      %p331 = scmp.ne.s32.totalorder %s322, %s323
      %p332 = scmp.eq.s32.totalorder %s34, 0
      %p333 = por %p331, %p332
      %p334 = scmp.ne.s32.totalorder %s322, %s323
      %p335 = scmp.eq.s32.totalorder %s35, 3
      %p336 = por %p334, %p335
      %p338 = scmp.ne.s32.totalorder %s323, %s337
      %p339 = scmp.eq.s32.totalorder %s35, 0
      %p340 = por %p338, %p339
      %s342 = sadd.s32 %s341, 1
      %p345 = scmp.eq.s32.totalorder %s29, 3
      %p346 = scmp.ne.s32.totalorder %s341, %s343
      %p347 = scmp.eq.s32.totalorder %s29, 0
      %p348 = por %p346, %p347
      %p349 = scmp.ne.s32.totalorder %s341, %s343
      %p350 = scmp.eq.s32.totalorder %s34, 3
      %p351 = por %p349, %p350
      %p352 = scmp.ne.s32.totalorder %s343, %s344
      %p353 = scmp.eq.s32.totalorder %s34, 0
      %p354 = por %p352, %p353
      %p355 = scmp.ne.s32.totalorder %s343, %s344
      %p356 = scmp.eq.s32.totalorder %s35, 3
      %p357 = por %p355, %p356
      %p359 = scmp.ne.s32.totalorder %s344, %s358
      %p360 = scmp.eq.s32.totalorder %s35, 0
      %p361 = por %p359, %p360
      %s363 = sadd.s32 %s362, 1
      %p366 = scmp.eq.s32.totalorder %s29, 3
      %p367 = scmp.ne.s32.totalorder %s362, %s364
      %p368 = scmp.eq.s32.totalorder %s29, 0
      %p369 = por %p367, %p368
      %p370 = scmp.ne.s32.totalorder %s362, %s364
      %p371 = scmp.eq.s32.totalorder %s34, 3
      %p372 = por %p370, %p371
      %p373 = scmp.ne.s32.totalorder %s364, %s365
      %p374 = scmp.eq.s32.totalorder %s34, 0
      %p375 = por %p373, %p374
      %p376 = scmp.ne.s32.totalorder %s364, %s365
      %p377 = scmp.eq.s32.totalorder %s35, 3
      %p378 = por %p376, %p377
      %p380 = scmp.ne.s32.totalorder %s365, %s379
      %p381 = scmp.eq.s32.totalorder %s35, 0
      %p382 = por %p380, %p381
      %s383 = ssub.s32 %s29, %s36
      %p384 = scmp.eq.s32.totalorder %s383, 0
      %s386 = sadd.s32 %s385, 1
      %s387 = scalar_select %p384, %s385, %s386
      %p390 = pneg %p384
      %p391 = scmp.eq.s32.totalorder %s29, 3
      %p392 = por %p390, %p391
      %p393 = scmp.ne.s32.totalorder %s385, %s388
      %p394 = scmp.eq.s32.totalorder %s29, 0
      %p395 = por %p393, %p394
      %p396 = scmp.ne.s32.totalorder %s385, %s388
      %p397 = scmp.eq.s32.totalorder %s34, 3
      %p398 = por %p396, %p397
      %p399 = scmp.ne.s32.totalorder %s388, %s389
      %p400 = scmp.eq.s32.totalorder %s34, 0
      %p401 = por %p399, %p400
      %p402 = scmp.ne.s32.totalorder %s388, %s389
      %p403 = scmp.eq.s32.totalorder %s35, 3
      %p404 = por %p402, %p403
      %p406 = scmp.ne.s32.totalorder %s389, %s405
      %p407 = scmp.eq.s32.totalorder %s35, 0
      %p408 = por %p406, %p407
      %p409 = scmp.le.s32.totalorder 1, %s29
      %p410 = scmp.lt.s32.totalorder %s29, 5
      %p411 = pnand %p409, %p410
      %p412 = pneg %p411
      // Predicated region
      $region9: #{encoder_layer_forward.1} parent=5 // pred_check
        _
      $region10: #{encoder_layer_forward.1} parent=5 // pred_check_branch
        %414 = sbr.rel (%p411) target = $region12
      $region11: #{encoder_layer_forward.1} parent=5 // pred_region
        %s415 = ssub.s32 %s29, 1
        // Predicated region
        $region13: #{encoder_layer_forward.1} parent=11 // pred_check
          %p416 = pneg %p102
        $region14: #{encoder_layer_forward.1} parent=11 // pred_check_branch
          %418 = sbr.rel (%p416) target = $region16
        $region15: #{encoder_layer_forward.1} parent=11 // pred_region
          _
        $region16: #{encoder_layer_forward.1} parent=11 // pred_fallthru
          _
        // Predicated region
        $region17: #{encoder_layer_forward.1} parent=11 // pred_check
          %p419 = pneg %p123
        $region18: #{encoder_layer_forward.1} parent=11 // pred_check_branch
          %421 = sbr.rel (%p419) target = $region20
        $region19: #{encoder_layer_forward.1} parent=11 // pred_region
          %s423 = ssub.s32 48, 48
          %424 = vsyncadd [#allocation3], %s423
          %s426 = sshll.u32 [#allocation2], 4
          %s427 = int_to_ptr.vmem [resolvable:$true] %s426
          %429 = dma.hbm_to_vmem [thread:$0]  %s3, 48, %s427, [#allocation3]
        $region20: #{encoder_layer_forward.1} parent=11 // pred_fallthru
          _
        // Predicated region
        $region21: #{encoder_layer_forward.1} parent=11 // pred_check
          %p430 = pneg %p144
        $region22: #{encoder_layer_forward.1} parent=11 // pred_check_branch
          %432 = sbr.rel (%p430) target = $region24
        $region23: #{encoder_layer_forward.1} parent=11 // pred_region
          %s434 = ssub.s32 1024, 1024
          %435 = vsyncadd [#allocation5], %s434
          %s436 = sshll.u32 [#allocation4], 4
          %s437 = int_to_ptr.vmem [resolvable:$true] %s436
          %442 = dma.hbm_to_vmem [thread:$0]  %s4, 1024, %s437, [#allocation5], 64, 64, 4
        $region24: #{encoder_layer_forward.1} parent=11 // pred_fallthru
          _
        // Predicated region
        $region25: #{encoder_layer_forward.1} parent=11 // pred_check
          %p443 = pneg %p165
        $region26: #{encoder_layer_forward.1} parent=11 // pred_check_branch
          %445 = sbr.rel (%p443) target = $region28
        $region27: #{encoder_layer_forward.1} parent=11 // pred_region
          _
        $region28: #{encoder_layer_forward.1} parent=11 // pred_fallthru
          _
        // Predicated region
        $region29: #{encoder_layer_forward.1} parent=11 // pred_check
          %p446 = pneg %p186
        $region30: #{encoder_layer_forward.1} parent=11 // pred_check_branch
          %448 = sbr.rel (%p446) target = $region32
        $region31: #{encoder_layer_forward.1} parent=11 // pred_region
          %s450 = ssub.s32 2048, 2048
          %451 = vsyncadd [#allocation5], %s450
          %s452 = sshll.u32 [#allocation6], 4
          %s453 = int_to_ptr.vmem [resolvable:$true] %s452
          %458 = dma.hbm_to_vmem [thread:$0]  %s6, 2048, %s453, [#allocation5], 128, 128, 8
        $region32: #{encoder_layer_forward.1} parent=11 // pred_fallthru
          _
        // Predicated region
        $region33: #{encoder_layer_forward.1} parent=11 // pred_check
          %p459 = pneg %p207
        $region34: #{encoder_layer_forward.1} parent=11 // pred_check_branch
          %461 = sbr.rel (%p459) target = $region36
        $region35: #{encoder_layer_forward.1} parent=11 // pred_region
          %s463 = ssub.s32 32, 32
          %464 = vsyncadd [#allocation8], %s463
          %s466 = sshll.u32 [#allocation7], 4
          %s467 = int_to_ptr.vmem [resolvable:$true] %s466
          %469 = dma.hbm_to_vmem [thread:$0]  %s7, 32, %s467, [#allocation8]
        $region36: #{encoder_layer_forward.1} parent=11 // pred_fallthru
          _
        // Predicated region
        $region37: #{encoder_layer_forward.1} parent=11 // pred_check
          %p470 = pneg %p228
        $region38: #{encoder_layer_forward.1} parent=11 // pred_check_branch
          %472 = sbr.rel (%p470) target = $region40
        $region39: #{encoder_layer_forward.1} parent=11 // pred_region
          %s474 = ssub.s32 2048, 2048
          %475 = vsyncadd [#allocation8], %s474
          %s476 = sshll.u32 [#allocation9], 4
          %s477 = int_to_ptr.vmem [resolvable:$true] %s476
          %482 = dma.hbm_to_vmem [thread:$0]  %s8, 2048, %s477, [#allocation8], 64, 64, 4
        $region40: #{encoder_layer_forward.1} parent=11 // pred_fallthru
          _
        // Predicated region
        $region41: #{encoder_layer_forward.1} parent=11 // pred_check
          %p483 = pneg %p249
        $region42: #{encoder_layer_forward.1} parent=11 // pred_check_branch
          %485 = sbr.rel (%p483) target = $region44
        $region43: #{encoder_layer_forward.1} parent=11 // pred_region
          %s487 = ssub.s32 16, 16
          %488 = vsyncadd [#allocation11], %s487
          %s490 = sshll.u32 [#allocation10], 4
          %s491 = int_to_ptr.vmem [resolvable:$true] %s490
          %493 = dma.hbm_to_vmem [thread:$0]  %s9, 16, %s491, [#allocation11]
        $region44: #{encoder_layer_forward.1} parent=11 // pred_fallthru
          _
        // Predicated region
        $region45: #{encoder_layer_forward.1} parent=11 // pred_check
          %p494 = pneg %p270
        $region46: #{encoder_layer_forward.1} parent=11 // pred_check_branch
          %496 = sbr.rel (%p494) target = $region48
        $region47: #{encoder_layer_forward.1} parent=11 // pred_region
          %s498 = ssub.s32 16, 16
          %499 = vsyncadd [#allocation11], %s498
          %s501 = sshll.u32 [#allocation12], 4
          %s502 = int_to_ptr.vmem [resolvable:$true] %s501
          %504 = dma.hbm_to_vmem [thread:$0]  %s10, 16, %s502, [#allocation11]
        $region48: #{encoder_layer_forward.1} parent=11 // pred_fallthru
          _
        // Predicated region
        $region49: #{encoder_layer_forward.1} parent=11 // pred_check
          %p505 = pneg %p291
        $region50: #{encoder_layer_forward.1} parent=11 // pred_check_branch
          %507 = sbr.rel (%p505) target = $region52
        $region51: #{encoder_layer_forward.1} parent=11 // pred_region
          %s509 = ssub.s32 16, 16
          %510 = vsyncadd [#allocation14], %s509
          %s512 = sshll.u32 [#allocation13], 4
          %s513 = int_to_ptr.vmem [resolvable:$true] %s512
          %515 = dma.hbm_to_vmem [thread:$0]  %s11, 16, %s513, [#allocation14]
        $region52: #{encoder_layer_forward.1} parent=11 // pred_fallthru
          _
        // Predicated region
        $region53: #{encoder_layer_forward.1} parent=11 // pred_check
          %p516 = pneg %p312
        $region54: #{encoder_layer_forward.1} parent=11 // pred_check_branch
          %518 = sbr.rel (%p516) target = $region56
        $region55: #{encoder_layer_forward.1} parent=11 // pred_region
          %s520 = ssub.s32 32, 32
          %521 = vsyncadd [#allocation14], %s520
          %s523 = sshll.u32 [#allocation15], 4
          %s524 = int_to_ptr.vmem [resolvable:$true] %s523
          %526 = dma.hbm_to_vmem [thread:$0]  %s12, 32, %s524, [#allocation14]
        $region56: #{encoder_layer_forward.1} parent=11 // pred_fallthru
          _
        // Predicated region
        $region57: #{encoder_layer_forward.1} parent=11 // pred_check
          %p527 = pneg %p333
        $region58: #{encoder_layer_forward.1} parent=11 // pred_check_branch
          %529 = sbr.rel (%p527) target = $region60
        $region59: #{encoder_layer_forward.1} parent=11 // pred_region
          %s531 = ssub.s32 32, 32
          %532 = vsyncadd [#allocation17], %s531
          %s534 = sshll.u32 [#allocation16], 4
          %s535 = int_to_ptr.vmem [resolvable:$true] %s534
          %537 = dma.hbm_to_vmem [thread:$0]  %s13, 32, %s535, [#allocation17]
        $region60: #{encoder_layer_forward.1} parent=11 // pred_fallthru
          _
        // Predicated region
        $region61: #{encoder_layer_forward.1} parent=11 // pred_check
          %p538 = pneg %p354
        $region62: #{encoder_layer_forward.1} parent=11 // pred_check_branch
          %540 = sbr.rel (%p538) target = $region64
        $region63: #{encoder_layer_forward.1} parent=11 // pred_region
          %s542 = ssub.s32 16, 16
          %543 = vsyncadd [#allocation17], %s542
          %s545 = sshll.u32 [#allocation18], 4
          %s546 = int_to_ptr.vmem [resolvable:$true] %s545
          %548 = dma.hbm_to_vmem [thread:$0]  %s14, 16, %s546, [#allocation17]
        $region64: #{encoder_layer_forward.1} parent=11 // pred_fallthru
          _
        // Predicated region
        $region65: #{encoder_layer_forward.1} parent=11 // pred_check
          %p549 = pneg %p375
        $region66: #{encoder_layer_forward.1} parent=11 // pred_check_branch
          %551 = sbr.rel (%p549) target = $region68
        $region67: #{encoder_layer_forward.1} parent=11 // pred_region
          %s553 = ssub.s32 16, 16
          %554 = vsyncadd [#allocation20], %s553
          %s556 = sshll.u32 [#allocation19], 4
          %s557 = int_to_ptr.vmem [resolvable:$true] %s556
          %559 = dma.hbm_to_vmem [thread:$0]  %s15, 16, %s557, [#allocation20]
        $region68: #{encoder_layer_forward.1} parent=11 // pred_fallthru
          _
      $region12: #{encoder_layer_forward.1} parent=5 // pred_fallthru
        _
      %p560 = scmp.lt.s32.totalorder %s29, 4
      // Predicated region
      $region69: #{encoder_layer_forward.1} parent=5 // pred_check
        %p561 = pneg %p560
      $region70: #{encoder_layer_forward.1} parent=5 // pred_check_branch
        %563 = sbr.rel (%p561) target = $region72
      $region71: #{encoder_layer_forward.1} parent=5 // pred_region
        // Predicated region
        $region73: #{encoder_layer_forward.1} parent=71 // pred_check
          %p564 = pneg %p49
        $region74: #{encoder_layer_forward.1} parent=71 // pred_check_branch
          %566 = sbr.rel (%p564) target = $region76
        $region75: #{encoder_layer_forward.1} parent=71 // pred_region
          %p567 = scmp.lt.s32.totalorder %s29, 3
          %s568 = scalar_select %p567, %s29, 3
          %s569 = smul.addr %s568, 2
          %s570 = smul.addr %s569, 8
          %s571 = scalar_lea.vmem %s0, %s570
        $region76: #{encoder_layer_forward.1} parent=71 // pred_fallthru
          _
        // Predicated region
        $region77: #{encoder_layer_forward.1} parent=71 // pred_check
          %p572 = pneg %p75
        $region78: #{encoder_layer_forward.1} parent=71 // pred_check_branch
          %574 = sbr.rel (%p572) target = $region80
        $region79: #{encoder_layer_forward.1} parent=71 // pred_region
          %p575 = scmp.lt.s32.totalorder %s29, 3
          %s576 = scalar_select %p575, %s29, 3
          %s577 = scalar_lea.vmem %s1, %s576
        $region80: #{encoder_layer_forward.1} parent=71 // pred_fallthru
          _
      $region72: #{encoder_layer_forward.1} parent=5 // pred_fallthru
        _
      %p578 = scmp.le.s32.totalorder 1, %s29
      %p579 = scmp.lt.s32.totalorder %s29, 5
      %p580 = pnand %p578, %p579
      %p581 = pneg %p580
      // Predicated region
      $region81: #{encoder_layer_forward.1} parent=5 // pred_check
        _
      $region82: #{encoder_layer_forward.1} parent=5 // pred_check_branch
        %583 = sbr.rel (%p580) target = $region84
      $region83: #{encoder_layer_forward.1} parent=5 // pred_region
        %s584 = ssub.s32 %s29, 1
        // Predicated region
        $region85: #{encoder_layer_forward.1} parent=83 // pred_check
          %p585 = pneg %p123
        $region86: #{encoder_layer_forward.1} parent=83 // pred_check_branch
          %587 = sbr.rel (%p585) target = $region88
        $region87: #{encoder_layer_forward.1} parent=83 // pred_region
          %588 = dma.done [#allocation3], 48
        $region88: #{encoder_layer_forward.1} parent=83 // pred_fallthru
          _
        // Predicated region
        $region89: #{encoder_layer_forward.1} parent=83 // pred_check
          %p589 = pneg %p144
        $region90: #{encoder_layer_forward.1} parent=83 // pred_check_branch
          %591 = sbr.rel (%p589) target = $region92
        $region91: #{encoder_layer_forward.1} parent=83 // pred_region
          %592 = dma.done [#allocation5], 1024
        $region92: #{encoder_layer_forward.1} parent=83 // pred_fallthru
          _
        // Predicated region
        $region93: #{encoder_layer_forward.1} parent=83 // pred_check
          %p593 = pneg %p186
        $region94: #{encoder_layer_forward.1} parent=83 // pred_check_branch
          %595 = sbr.rel (%p593) target = $region96
        $region95: #{encoder_layer_forward.1} parent=83 // pred_region
          %596 = dma.done [#allocation5], 2048
        $region96: #{encoder_layer_forward.1} parent=83 // pred_fallthru
          _
        // Predicated region
        $region97: #{encoder_layer_forward.1} parent=83 // pred_check
          %p597 = pneg %p207
        $region98: #{encoder_layer_forward.1} parent=83 // pred_check_branch
          %599 = sbr.rel (%p597) target = $region100
        $region99: #{encoder_layer_forward.1} parent=83 // pred_region
          %600 = dma.done [#allocation8], 32
        $region100: #{encoder_layer_forward.1} parent=83 // pred_fallthru
          _
        // Predicated region
        $region101: #{encoder_layer_forward.1} parent=83 // pred_check
          %p601 = pneg %p228
        $region102: #{encoder_layer_forward.1} parent=83 // pred_check_branch
          %603 = sbr.rel (%p601) target = $region104
        $region103: #{encoder_layer_forward.1} parent=83 // pred_region
          %604 = dma.done [#allocation8], 2048
        $region104: #{encoder_layer_forward.1} parent=83 // pred_fallthru
          _
        // Predicated region
        $region105: #{encoder_layer_forward.1} parent=83 // pred_check
          %p605 = pneg %p249
        $region106: #{encoder_layer_forward.1} parent=83 // pred_check_branch
          %607 = sbr.rel (%p605) target = $region108
        $region107: #{encoder_layer_forward.1} parent=83 // pred_region
          %608 = dma.done [#allocation11], 16
        $region108: #{encoder_layer_forward.1} parent=83 // pred_fallthru
          _
        // Predicated region
        $region109: #{encoder_layer_forward.1} parent=83 // pred_check
          %p609 = pneg %p270
        $region110: #{encoder_layer_forward.1} parent=83 // pred_check_branch
          %611 = sbr.rel (%p609) target = $region112
        $region111: #{encoder_layer_forward.1} parent=83 // pred_region
          %612 = dma.done [#allocation11], 16
        $region112: #{encoder_layer_forward.1} parent=83 // pred_fallthru
          _
        // Predicated region
        $region113: #{encoder_layer_forward.1} parent=83 // pred_check
          %p613 = pneg %p291
        $region114: #{encoder_layer_forward.1} parent=83 // pred_check_branch
          %615 = sbr.rel (%p613) target = $region116
        $region115: #{encoder_layer_forward.1} parent=83 // pred_region
          %616 = dma.done [#allocation14], 16
        $region116: #{encoder_layer_forward.1} parent=83 // pred_fallthru
          _
        // Predicated region
        $region117: #{encoder_layer_forward.1} parent=83 // pred_check
          %p617 = pneg %p312
        $region118: #{encoder_layer_forward.1} parent=83 // pred_check_branch
          %619 = sbr.rel (%p617) target = $region120
        $region119: #{encoder_layer_forward.1} parent=83 // pred_region
          %620 = dma.done [#allocation14], 32
        $region120: #{encoder_layer_forward.1} parent=83 // pred_fallthru
          _
        // Predicated region
        $region121: #{encoder_layer_forward.1} parent=83 // pred_check
          %p621 = pneg %p333
        $region122: #{encoder_layer_forward.1} parent=83 // pred_check_branch
          %623 = sbr.rel (%p621) target = $region124
        $region123: #{encoder_layer_forward.1} parent=83 // pred_region
          %624 = dma.done [#allocation17], 32
        $region124: #{encoder_layer_forward.1} parent=83 // pred_fallthru
          _
        // Predicated region
        $region125: #{encoder_layer_forward.1} parent=83 // pred_check
          %p625 = pneg %p354
        $region126: #{encoder_layer_forward.1} parent=83 // pred_check_branch
          %627 = sbr.rel (%p625) target = $region128
        $region127: #{encoder_layer_forward.1} parent=83 // pred_region
          %628 = dma.done [#allocation17], 16
        $region128: #{encoder_layer_forward.1} parent=83 // pred_fallthru
          _
        // Predicated region
        $region129: #{encoder_layer_forward.1} parent=83 // pred_check
          %p629 = pneg %p375
        $region130: #{encoder_layer_forward.1} parent=83 // pred_check_branch
          %631 = sbr.rel (%p629) target = $region132
        $region131: #{encoder_layer_forward.1} parent=83 // pred_region
          %632 = dma.done [#allocation20], 16
        $region132: #{encoder_layer_forward.1} parent=83 // pred_fallthru
          _
        %p633 = scmp.lt.s32.totalorder %s34, 3
        %s634 = scalar_select %p633, %s34, 3
        %s635 = smul.addr %s634, 2
        %s636 = smul.addr %s635, 8
        %s637 = scalar_lea.vmem %s0, %s636
        %p638 = pneg %p55
        %p639 = pneg %p52
        %p640 = scmp.lt.s32.totalorder %s34, 3
        %s641 = scalar_select %p640, %s34, 3
        %s642 = scalar_lea.vmem %s1, %s641
        %p643 = pneg %p81
        %p644 = pneg %p78
        %p645 = pneg %p102
        %p646 = pneg %p99
        %p647 = pneg %p123
        %p648 = pneg %p120
        %p649 = pneg %p144
        %p650 = pneg %p141
        %p651 = pneg %p165
        %p652 = pneg %p162
        %p653 = pneg %p186
        %p654 = pneg %p183
        %p655 = pneg %p207
        %p656 = pneg %p204
        %p657 = pneg %p228
        %p658 = pneg %p225
        %p659 = pneg %p249
        %p660 = pneg %p246
        %p661 = pneg %p270
        %p662 = pneg %p267
        %p663 = pneg %p291
        %p664 = pneg %p288
        %p665 = pneg %p312
        %p666 = pneg %p309
        %p667 = pneg %p333
        %p668 = pneg %p330
        %p669 = pneg %p354
        %p670 = pneg %p351
        %p671 = pneg %p375
        %p672 = pneg %p372
        %p673 = pneg %p401
        %p674 = pneg %p398
        %p675 = scmp.lt.s32.totalorder %s34, 3
        %s676 = scalar_select %p675, %s34, 3
        %s677 = smul.addr %s676, 2
        %s678 = smul.addr %s677, 8
        %s679 = scalar_lea.vmem %s16, %s678
        %p680 = scmp.lt.s32.totalorder %s34, 3
        %s681 = scalar_select %p680, %s34, 3
        %s682 = smul.addr %s681, 2
        %s683 = smul.addr %s682, 8
        %s684 = scalar_lea.vmem %s0, %s683
        %p685 = scmp.lt.s32.totalorder %s34, 3
        %s686 = scalar_select %p685, %s34, 3
        %s687 = scalar_lea.vmem %s1, %s686
        %p688 = scmp.lt.s32.totalorder %s34, 3
        %s689 = scalar_select %p688, %s34, 3
        %s690 = smul.addr %s689, 2
        %s691 = smul.addr %s690, 8
        %s692 = scalar_lea.vmem %s16, %s691
        %v694 = vld [vmem:[%s684] sm:$0xff]
        %v695 = vld [vmem:[%s684 + $0x8] sm:$0xff]
        %v696 = vpack.c.bf16 %v695, %v694
        %v697 = vld [vmem:[%s2] sm:$0xff]
        %v698 = vld [vmem:[%s2 + $0x8] sm:$0xf]
        %v699 = vld [vmem:[%s2 + $0xc] sm:$0xff]
        %v700 = vld [vmem:[%s2 + $0x14] sm:$0xf]
        %v701 = vld [vmem:[%s2 + $0x18] sm:$0xff]
        %v702 = vld [vmem:[%s2 + $0x20] sm:$0xf]
        %v703 = vld [vmem:[%s2 + $0x24] sm:$0xff]
        %v704 = vld [vmem:[%s2 + $0x2c] sm:$0xf]
        %v705 = vld [vmem:[%s2 + $0x30] sm:$0xff]
        %v706 = vld [vmem:[%s2 + $0x38] sm:$0xf]
        %v707 = vld [vmem:[%s2 + $0x3c] sm:$0xff]
        %v708 = vld [vmem:[%s2 + $0x44] sm:$0xf]
        %v709 = vld [vmem:[%s2 + $0x48] sm:$0xff]
        %v710 = vld [vmem:[%s2 + $0x50] sm:$0xf]
        %v711 = vld [vmem:[%s2 + $0x54] sm:$0xff]
        %v712 = vld [vmem:[%s2 + $0x5c] sm:$0xf]
        %v713 = vld [vmem:[%s2 + $0x60] sm:$0xff]
        %v714 = vld [vmem:[%s2 + $0x68] sm:$0xf]
        %v715 = vld [vmem:[%s2 + $0x6c] sm:$0xff]
        %v716 = vld [vmem:[%s2 + $0x74] sm:$0xf]
        %v717 = vld [vmem:[%s2 + $0x78] sm:$0xff]
        %v718 = vld [vmem:[%s2 + $0x80] sm:$0xf]
        %v719 = vld [vmem:[%s2 + $0x84] sm:$0xff]
        %v720 = vld [vmem:[%s2 + $0x8c] sm:$0xf]
        %v721 = vld [vmem:[%s2 + $0x90] sm:$0xff]
        %v722 = vld [vmem:[%s2 + $0x98] sm:$0xf]
        %v723 = vld [vmem:[%s2 + $0x9c] sm:$0xff]
        %v724 = vld [vmem:[%s2 + $0xa4] sm:$0xf]
        %v725 = vld [vmem:[%s2 + $0xa8] sm:$0xff]
        %v726 = vld [vmem:[%s2 + $0xb0] sm:$0xf]
        %v727 = vld [vmem:[%s2 + $0xb4] sm:$0xff]
        %v728 = vld [vmem:[%s2 + $0xbc] sm:$0xf]
        %v729 = vld [vmem:[#allocation2] sm:$0x7]
        %v731 = vlaneseq
        %v732 = vshrl.u32 %v731, 7
        %v733 = vsub.s32 0, %v732
        %v734 = vrot.slane %v729, %v733
        %v735 = vlaneseq
        %v736 = vshrl.u32 %v735, 7
        %v737 = vsub.s32 1, %v736
        %v738 = vrot.slane %v729, %v737
        %v739 = vlaneseq
        %v740 = vshrl.u32 %v739, 7
        %v741 = vsub.s32 2, %v740
        %v742 = vrot.slane %v729, %v741
        %v778 = vunpack.c.l.b16 %v697
        %v779 = vunpack.c.h.b16 %v697
        %v780 = vunpack.c.l.b16 %v698
        %v781 = vunpack.c.l.b16 %v699
        %v782 = vunpack.c.h.b16 %v699
        %v783 = vunpack.c.l.b16 %v700
        %v784 = vunpack.c.l.b16 %v701
        %v785 = vunpack.c.h.b16 %v701
        %v786 = vunpack.c.l.b16 %v702
        %v787 = vunpack.c.l.b16 %v703
        %v788 = vunpack.c.h.b16 %v703
        %v789 = vunpack.c.l.b16 %v704
        %v790 = vunpack.c.l.b16 %v705
        %v791 = vunpack.c.h.b16 %v705
        %v792 = vunpack.c.l.b16 %v706
        %v793 = vunpack.c.l.b16 %v707
        %v794 = vunpack.c.h.b16 %v707
        %v795 = vunpack.c.l.b16 %v708
        %v796 = vunpack.c.l.b16 %v709
        %v797 = vunpack.c.h.b16 %v709
        %v798 = vunpack.c.l.b16 %v710
        %v799 = vunpack.c.l.b16 %v711
        %v800 = vunpack.c.h.b16 %v711
        %v801 = vunpack.c.l.b16 %v712
        %v802 = vunpack.c.l.b16 %v713
        %v803 = vunpack.c.h.b16 %v713
        %v804 = vunpack.c.l.b16 %v714
        %v805 = vunpack.c.l.b16 %v715
        %v806 = vunpack.c.h.b16 %v715
        %v807 = vunpack.c.l.b16 %v716
        %v808 = vunpack.c.l.b16 %v717
        %v809 = vunpack.c.h.b16 %v717
        %v810 = vunpack.c.l.b16 %v718
        %v811 = vunpack.c.l.b16 %v719
        %v812 = vunpack.c.h.b16 %v719
        %v813 = vunpack.c.l.b16 %v720
        %v814 = vunpack.c.l.b16 %v721
        %v815 = vunpack.c.h.b16 %v721
        %v816 = vunpack.c.l.b16 %v722
        %v817 = vunpack.c.l.b16 %v723
        %v818 = vunpack.c.h.b16 %v723
        %v819 = vunpack.c.l.b16 %v724
        %v820 = vunpack.c.l.b16 %v725
        %v821 = vunpack.c.h.b16 %v725
        %v822 = vunpack.c.l.b16 %v726
        %v823 = vunpack.c.l.b16 %v727
        %v824 = vunpack.c.h.b16 %v727
        %v825 = vunpack.c.l.b16 %v728
        %v826 = vpack.c.b16 %v781, %v778
        %v827 = vpack.c.b16 %v782, %v779
        %v828 = vpack.c.b16 %v783, %v780
        %v829 = vpack.c.b16 %v787, %v784
        %v830 = vpack.c.b16 %v788, %v785
        %v831 = vpack.c.b16 %v789, %v786
        %v832 = vpack.c.b16 %v793, %v790
        %v833 = vpack.c.b16 %v794, %v791
        %v834 = vpack.c.b16 %v795, %v792
        %v835 = vpack.c.b16 %v799, %v796
        %v836 = vpack.c.b16 %v800, %v797
        %v837 = vpack.c.b16 %v801, %v798
        %v838 = vpack.c.b16 %v805, %v802
        %v839 = vpack.c.b16 %v806, %v803
        %v840 = vpack.c.b16 %v807, %v804
        %v841 = vpack.c.b16 %v811, %v808
        %v842 = vpack.c.b16 %v812, %v809
        %v843 = vpack.c.b16 %v813, %v810
        %v844 = vpack.c.b16 %v817, %v814
        %v845 = vpack.c.b16 %v818, %v815
        %v846 = vpack.c.b16 %v819, %v816
        %v847 = vpack.c.b16 %v823, %v820
        %v848 = vpack.c.b16 %v824, %v821
        %v849 = vpack.c.b16 %v825, %v822
        %874 = vmatprep.subr.bf16.mxu0 %v827
        %875 = vmatpush1.bf16.msra.mxu0 %v826
        %876 = vmatprep.subr.bf16.mxu0 %v830
        %877 = vmatpush1.bf16.msra.mxu0 %v829
        %878 = vmatprep.subr.bf16.mxu0 %v833
        %879 = vmatpush1.bf16.msra.mxu0 %v832
        %880 = vmatprep.subr.bf16.mxu0 %v836
        %881 = vmatpush1.bf16.msra.mxu0 %v835
        %882 = vmatprep.subr.bf16.mxu0 %v839
        %883 = vmatpush1.bf16.msra.mxu0 %v838
        %884 = vmatprep.subr.bf16.mxu0 %v842
        %885 = vmatpush1.bf16.msra.mxu0 %v841
        %886 = vmatprep.subr.bf16.mxu0 %v845
        %887 = vmatpush1.bf16.msra.mxu0 %v844
        %888 = vmatprep.subr.bf16.mxu0 %v848
        %889 = vmatpush1.bf16.msra.mxu0 %v847
        %890 = vmatprep.subr.bf16.mxu0 0
        %891 = vmatpush1.bf16.msra.mxu0 0
        %892 = vmatprep.subr.bf16.mxu0 0
        %893 = vmatpush1.bf16.msra.mxu0 0
        %894 = vmatprep.subr.bf16.mxu0 0
        %895 = vmatpush1.bf16.msra.mxu0 0
        %896 = vmatprep.subr.bf16.mxu0 0
        %897 = vmatpush1.bf16.msra.mxu0 0
        %898 = vmatprep.subr.bf16.mxu0 0
        %899 = vmatpush1.bf16.msra.mxu0 0
        %900 = vmatprep.subr.bf16.mxu0 0
        %901 = vmatpush1.bf16.msra.mxu0 0
        %902 = vmatprep.subr.bf16.mxu0 0
        %903 = vmatpush1.bf16.msra.mxu0 0
        %904 = vmatprep.subr.bf16.mxu0 0
        %905 = vmatpush1.bf16.msra.mxu0 0
        %906 = vmatprep.mubr.bf16.mxu0 0
        %907 = vmatmul.mubr.bf16.gmra.mrb[0].mxu0 %v696
        %v908 = vpop.f32.mrb[0].mxu0
        %v909 = vadd.f32 %v734, %v908
        %v910 = vpop.f32.mrb[0].mxu0
        %v911 = vadd.f32 %v738, %v910
        %v912 = vpop.f32.mrb[0].mxu0
        %v913 = vadd.f32 %v734, %v912
        %v914 = vpop.f32.mrb[0].mxu0
        %v915 = vadd.f32 %v738, %v914
        %916 = vdwg.mxu0
        %917 = vmatprep.subr.bf16.mxu0 0
        %918 = vmatpush1.bf16.msra.mxu0 %v828
        %919 = vmatprep.subr.bf16.mxu0 0
        %920 = vmatpush1.bf16.msra.mxu0 %v831
        %921 = vmatprep.subr.bf16.mxu0 0
        %922 = vmatpush1.bf16.msra.mxu0 %v834
        %923 = vmatprep.subr.bf16.mxu0 0
        %924 = vmatpush1.bf16.msra.mxu0 %v837
        %925 = vmatprep.subr.bf16.mxu0 0
        %926 = vmatpush1.bf16.msra.mxu0 %v840
        %927 = vmatprep.subr.bf16.mxu0 0
        %928 = vmatpush1.bf16.msra.mxu0 %v843
        %929 = vmatprep.subr.bf16.mxu0 0
        %930 = vmatpush1.bf16.msra.mxu0 %v846
        %931 = vmatprep.subr.bf16.mxu0 0
        %932 = vmatpush1.bf16.msra.mxu0 %v849
        %933 = vmatprep.subr.bf16.mxu0 0
        %934 = vmatpush1.bf16.msra.mxu0 0
        %935 = vmatprep.subr.bf16.mxu0 0
        %936 = vmatpush1.bf16.msra.mxu0 0
        %937 = vmatprep.subr.bf16.mxu0 0
        %938 = vmatpush1.bf16.msra.mxu0 0
        %939 = vmatprep.subr.bf16.mxu0 0
        %940 = vmatpush1.bf16.msra.mxu0 0
        %941 = vmatprep.subr.bf16.mxu0 0
        %942 = vmatpush1.bf16.msra.mxu0 0
        %943 = vmatprep.subr.bf16.mxu0 0
        %944 = vmatpush1.bf16.msra.mxu0 0
        %945 = vmatprep.subr.bf16.mxu0 0
        %946 = vmatpush1.bf16.msra.mxu0 0
        %947 = vmatprep.subr.bf16.mxu0 0
        %948 = vmatpush1.bf16.msra.mxu0 0
        %949 = vmatprep.mubr.bf16.mxu0 0
        %950 = vmatmul.mubr.bf16.gmra.mrb[0].mxu0 %v696
        %v951 = vpop.f32.mrb[0].mxu0
        %v952 = vadd.f32 %v742, %v951
        %v953 = vpop.f32.mrb[0].mxu0
        %v954 = vpop.f32.mrb[0].mxu0
        %v955 = vadd.f32 %v742, %v954
        %v956 = vpop.f32.mrb[0].mxu0
        %957 = vdwg.mxu0
        %v958 = vpack.c.bf16 %v913, %v909
        %v959 = vpack.c.bf16 %v915, %v911
        %v960 = vpack.c.bf16 %v955, %v952
        %v961 = vld [vmem:[%s687] sm:$0x1]
        %v963 = vlaneseq
        %v964 = vshrl.u32 %v963, 7
        %v965 = vsub.s32 0, %v964
        %v966 = vrot.slane %v961, %v965
        %vm968 = vcmask 261120
        %v970 = vsel %vm968, %v958, 0
        %v973 = vsel %vm968, %v959, 0
        %975 = vmatprep.subr.bf16.mxu0 0
        %976 = vmatpush1.bf16.xpose.msra.mxu0 %v973
        %977 = vmatprep.subr.bf16.mxu0 0
        %978 = vmatpush1.bf16.xpose.msra.mxu0 0
        %979 = vmatprep.subr.bf16.mxu0 0
        %980 = vmatpush1.bf16.xpose.msra.mxu0 0
        %981 = vmatprep.subr.bf16.mxu0 0
        %982 = vmatpush1.bf16.xpose.msra.mxu0 0
        %983 = vmatprep.subr.bf16.mxu0 0
        %984 = vmatpush1.bf16.xpose.msra.mxu0 0
        %985 = vmatprep.subr.bf16.mxu0 0
        %986 = vmatpush1.bf16.xpose.msra.mxu0 0
        %987 = vmatprep.subr.bf16.mxu0 0
        %988 = vmatpush1.bf16.xpose.msra.mxu0 0
        %989 = vmatprep.subr.bf16.mxu0 0
        %990 = vmatpush1.bf16.xpose.msra.mxu0 0
        %991 = vmatprep.subr.bf16.mxu0 0
        %992 = vmatpush1.bf16.xpose.msra.mxu0 0
        %993 = vmatprep.subr.bf16.mxu0 0
        %994 = vmatpush1.bf16.xpose.msra.mxu0 0
        %995 = vmatprep.subr.bf16.mxu0 0
        %996 = vmatpush1.bf16.xpose.msra.mxu0 0
        %997 = vmatprep.subr.bf16.mxu0 0
        %998 = vmatpush1.bf16.xpose.msra.mxu0 0
        %999 = vmatprep.subr.bf16.mxu0 0
        %1000 = vmatpush1.bf16.xpose.msra.mxu0 0
        %1001 = vmatprep.subr.bf16.mxu0 0
        %1002 = vmatpush1.bf16.xpose.msra.mxu0 0
        %1003 = vmatprep.subr.bf16.mxu0 0
        %1004 = vmatpush1.bf16.xpose.msra.mxu0 0
        %1005 = vmatprep.subr.bf16.mxu0 0
        %1006 = vmatpush1.bf16.xpose.msra.mxu0 0
        %1007 = vmatprep.mubr.bf16.mxu0 0
        %1008 = vmatmul.mubr.bf16.gmra.mrb[0].mxu0 %v970
        %v1009 = vpop.f32.mrb[0].mxu0
        %v1010 = vadd.f32 %v966, %v1009
        %v1011 = vpop.f32.mrb[0].mxu0
        %v1012 = vpop.f32.mrb[0].mxu0
        %v1013 = vadd.f32 %v966, %v1012
        %v1014 = vpop.f32.mrb[0].mxu0
        %1015 = vdwg.mxu0
        %vm1016 = vcmask 130048
        %v1017 = vsel %vm1016, %v1010, -inf
        %1018 = vmax.xlane.f32.xlu0 %v1017
        %v1019 = vpop.xlane.xlu0 %1018
        %v1020 = vsel %vm1016, %v1013, -inf
        %1021 = vmax.xlane.f32.xlu0 %v1020
        %v1022 = vpop.xlane.xlu0 %1021
        %v1023 = vsub.f32 %v1010, %v1019
        %v1024 = vsub.f32 %v1013, %v1022
        %v1025 = vmul.f32 %v1023, 1.442695
        %v1026 = vpow.pop %v1025
        %v1027 = vmul.f32 %v1024, 1.442695
        %v1028 = vpow.pop %v1027
        %v1029 = vsel %vm1016, %v1026, 0.0
        %1030 = vadd.xlane.f32.xlu0 %v1029
        %v1031 = vpop.xlane.xlu0 %1030
        %v1032 = vsel %vm1016, %v1028, 0.0
        %1033 = vadd.xlane.f32.xlu0 %v1032
        %v1034 = vpop.xlane.xlu0 %1033
        %v1035 = vrcp.pop %v1031
        %v1036 = vrcp.pop %v1034
        %v1037 = vmul.f32 %v1031, %v1035
        %v1038 = vmul.f32 %v1034, %v1036
        %v1039 = vsub.f32 2.0, %v1037
        %v1040 = vsub.f32 2.0, %v1038
        %v1041 = vmul.f32 %v1035, %v1039
        %v1042 = vmul.f32 %v1036, %v1040
        %v1043 = vmul.f32 %v1026, %v1041
        %v1044 = vmul.f32 %v1028, %v1042
        %v1045 = vpack.c.bf16 %v1044, %v1043
        %v1047 = vsel %vm1016, %v1045, 0
        %1049 = vmatprep.subr.bf16.mxu0 0
        %1050 = vmatpush1.bf16.msra.mxu0 %v960
        %1051 = vmatprep.subr.bf16.mxu0 0
        %1052 = vmatpush1.bf16.msra.mxu0 0
        %1053 = vmatprep.subr.bf16.mxu0 0
        %1054 = vmatpush1.bf16.msra.mxu0 0
        %1055 = vmatprep.subr.bf16.mxu0 0
        %1056 = vmatpush1.bf16.msra.mxu0 0
        %1057 = vmatprep.subr.bf16.mxu0 0
        %1058 = vmatpush1.bf16.msra.mxu0 0
        %1059 = vmatprep.subr.bf16.mxu0 0
        %1060 = vmatpush1.bf16.msra.mxu0 0
        %1061 = vmatprep.subr.bf16.mxu0 0
        %1062 = vmatpush1.bf16.msra.mxu0 0
        %1063 = vmatprep.subr.bf16.mxu0 0
        %1064 = vmatpush1.bf16.msra.mxu0 0
        %1065 = vmatprep.subr.bf16.mxu0 0
        %1066 = vmatpush1.bf16.msra.mxu0 0
        %1067 = vmatprep.subr.bf16.mxu0 0
        %1068 = vmatpush1.bf16.msra.mxu0 0
        %1069 = vmatprep.subr.bf16.mxu0 0
        %1070 = vmatpush1.bf16.msra.mxu0 0
        %1071 = vmatprep.subr.bf16.mxu0 0
        %1072 = vmatpush1.bf16.msra.mxu0 0
        %1073 = vmatprep.subr.bf16.mxu0 0
        %1074 = vmatpush1.bf16.msra.mxu0 0
        %1075 = vmatprep.subr.bf16.mxu0 0
        %1076 = vmatpush1.bf16.msra.mxu0 0
        %1077 = vmatprep.subr.bf16.mxu0 0
        %1078 = vmatpush1.bf16.msra.mxu0 0
        %1079 = vmatprep.subr.bf16.mxu0 0
        %1080 = vmatpush1.bf16.msra.mxu0 0
        %1081 = vmatprep.mubr.bf16.mxu0 0
        %1082 = vmatmul.mubr.bf16.gmra.mrb[0].mxu0 %v1047
        %v1083 = vpop.f32.mrb[0].mxu0
        %v1084 = vadd.f32 0.0, %v1083
        %v1085 = vpop.f32.mrb[0].mxu0
        %v1086 = vpop.f32.mrb[0].mxu0
        %v1087 = vadd.f32 0.0, %v1086
        %v1088 = vpop.f32.mrb[0].mxu0
        %1089 = vdwg.mxu0
        %1091 = vrot.lane.b32.xlu0 %v958, 96
        %v1092 = vpop.permute.xlu0 %1091
        %1094 = vrot.lane.b32.xlu0 %v959, 96
        %v1095 = vpop.permute.xlu0 %1094
        %v1097 = vsel %vm968, %v1092, 0
        %v1100 = vsel %vm968, %v1095, 0
        %1102 = vmatprep.subr.bf16.mxu0 0
        %1103 = vmatpush1.bf16.xpose.msra.mxu0 %v1100
        %1104 = vmatprep.subr.bf16.mxu0 0
        %1105 = vmatpush1.bf16.xpose.msra.mxu0 0
        %1106 = vmatprep.subr.bf16.mxu0 0
        %1107 = vmatpush1.bf16.xpose.msra.mxu0 0
        %1108 = vmatprep.subr.bf16.mxu0 0
        %1109 = vmatpush1.bf16.xpose.msra.mxu0 0
        %1110 = vmatprep.subr.bf16.mxu0 0
        %1111 = vmatpush1.bf16.xpose.msra.mxu0 0
        %1112 = vmatprep.subr.bf16.mxu0 0
        %1113 = vmatpush1.bf16.xpose.msra.mxu0 0
        %1114 = vmatprep.subr.bf16.mxu0 0
        %1115 = vmatpush1.bf16.xpose.msra.mxu0 0
        %1116 = vmatprep.subr.bf16.mxu0 0
        %1117 = vmatpush1.bf16.xpose.msra.mxu0 0
        %1118 = vmatprep.subr.bf16.mxu0 0
        %1119 = vmatpush1.bf16.xpose.msra.mxu0 0
        %1120 = vmatprep.subr.bf16.mxu0 0
        %1121 = vmatpush1.bf16.xpose.msra.mxu0 0
        %1122 = vmatprep.subr.bf16.mxu0 0
        %1123 = vmatpush1.bf16.xpose.msra.mxu0 0
        %1124 = vmatprep.subr.bf16.mxu0 0
        %1125 = vmatpush1.bf16.xpose.msra.mxu0 0
        %1126 = vmatprep.subr.bf16.mxu0 0
        %1127 = vmatpush1.bf16.xpose.msra.mxu0 0
        %1128 = vmatprep.subr.bf16.mxu0 0
        %1129 = vmatpush1.bf16.xpose.msra.mxu0 0
        %1130 = vmatprep.subr.bf16.mxu0 0
        %1131 = vmatpush1.bf16.xpose.msra.mxu0 0
        %1132 = vmatprep.subr.bf16.mxu0 0
        %1133 = vmatpush1.bf16.xpose.msra.mxu0 0
        %1134 = vmatprep.mubr.bf16.mxu0 0
        %1135 = vmatmul.mubr.bf16.gmra.mrb[0].mxu0 %v1097
        %v1136 = vpop.f32.mrb[0].mxu0
        %v1137 = vadd.f32 %v966, %v1136
        %v1138 = vpop.f32.mrb[0].mxu0
        %v1139 = vpop.f32.mrb[0].mxu0
        %v1140 = vadd.f32 %v966, %v1139
        %v1141 = vpop.f32.mrb[0].mxu0
        %1142 = vdwg.mxu0
        %v1143 = vsel %vm1016, %v1137, -inf
        %1144 = vmax.xlane.f32.xlu0 %v1143
        %v1145 = vpop.xlane.xlu0 %1144
        %v1146 = vsel %vm1016, %v1140, -inf
        %1147 = vmax.xlane.f32.xlu0 %v1146
        %v1148 = vpop.xlane.xlu0 %1147
        %v1149 = vsub.f32 %v1137, %v1145
        %v1150 = vsub.f32 %v1140, %v1148
        %v1151 = vmul.f32 %v1149, 1.442695
        %v1152 = vpow.pop %v1151
        %v1153 = vmul.f32 %v1150, 1.442695
        %v1154 = vpow.pop %v1153
        %v1155 = vsel %vm1016, %v1152, 0.0
        %1156 = vadd.xlane.f32.xlu0 %v1155
        %v1157 = vpop.xlane.xlu0 %1156
        %v1158 = vsel %vm1016, %v1154, 0.0
        %1159 = vadd.xlane.f32.xlu0 %v1158
        %v1160 = vpop.xlane.xlu0 %1159
        %v1161 = vrcp.pop %v1157
        %v1162 = vrcp.pop %v1160
        %v1163 = vmul.f32 %v1157, %v1161
        %v1164 = vmul.f32 %v1160, %v1162
        %v1165 = vsub.f32 2.0, %v1163
        %v1166 = vsub.f32 2.0, %v1164
        %v1167 = vmul.f32 %v1161, %v1165
        %v1168 = vmul.f32 %v1162, %v1166
        %v1169 = vmul.f32 %v1152, %v1167
        %v1170 = vmul.f32 %v1154, %v1168
        %v1171 = vpack.c.bf16 %v1170, %v1169
        %1173 = vrot.lane.b32.xlu0 %v960, 96
        %v1174 = vpop.permute.xlu0 %1173
        %v1177 = vsel %vm1016, %v1171, 0
        %1179 = vmatprep.subr.bf16.mxu0 0
        %1180 = vmatpush1.bf16.msra.mxu0 %v1174
        %1181 = vmatprep.subr.bf16.mxu0 0
        %1182 = vmatpush1.bf16.msra.mxu0 0
        %1183 = vmatprep.subr.bf16.mxu0 0
        %1184 = vmatpush1.bf16.msra.mxu0 0
        %1185 = vmatprep.subr.bf16.mxu0 0
        %1186 = vmatpush1.bf16.msra.mxu0 0
        %1187 = vmatprep.subr.bf16.mxu0 0
        %1188 = vmatpush1.bf16.msra.mxu0 0
        %1189 = vmatprep.subr.bf16.mxu0 0
        %1190 = vmatpush1.bf16.msra.mxu0 0
        %1191 = vmatprep.subr.bf16.mxu0 0
        %1192 = vmatpush1.bf16.msra.mxu0 0
        %1193 = vmatprep.subr.bf16.mxu0 0
        %1194 = vmatpush1.bf16.msra.mxu0 0
        %1195 = vmatprep.subr.bf16.mxu0 0
        %1196 = vmatpush1.bf16.msra.mxu0 0
        %1197 = vmatprep.subr.bf16.mxu0 0
        %1198 = vmatpush1.bf16.msra.mxu0 0
        %1199 = vmatprep.subr.bf16.mxu0 0
        %1200 = vmatpush1.bf16.msra.mxu0 0
        %1201 = vmatprep.subr.bf16.mxu0 0
        %1202 = vmatpush1.bf16.msra.mxu0 0
        %1203 = vmatprep.subr.bf16.mxu0 0
        %1204 = vmatpush1.bf16.msra.mxu0 0
        %1205 = vmatprep.subr.bf16.mxu0 0
        %1206 = vmatpush1.bf16.msra.mxu0 0
        %1207 = vmatprep.subr.bf16.mxu0 0
        %1208 = vmatpush1.bf16.msra.mxu0 0
        %1209 = vmatprep.subr.bf16.mxu0 0
        %1210 = vmatpush1.bf16.msra.mxu0 0
        %1211 = vmatprep.mubr.bf16.mxu0 0
        %1212 = vmatmul.mubr.bf16.gmra.mrb[0].mxu0 %v1177
        %v1213 = vpop.f32.mrb[0].mxu0
        %v1214 = vadd.f32 0.0, %v1213
        %v1215 = vpop.f32.mrb[0].mxu0
        %v1216 = vpop.f32.mrb[0].mxu0
        %v1217 = vadd.f32 0.0, %v1216
        %v1218 = vpop.f32.mrb[0].mxu0
        %1219 = vdwg.mxu0
        %1220 = vrot.lane.b32.xlu0 %v958, 64
        %v1221 = vpop.permute.xlu0 %1220
        %1222 = vrot.lane.b32.xlu0 %v959, 64
        %v1223 = vpop.permute.xlu0 %1222
        %v1225 = vsel %vm968, %v1221, 0
        %v1228 = vsel %vm968, %v1223, 0
        %1230 = vmatprep.subr.bf16.mxu0 0
        %1231 = vmatpush1.bf16.xpose.msra.mxu0 %v1228
        %1232 = vmatprep.subr.bf16.mxu0 0
        %1233 = vmatpush1.bf16.xpose.msra.mxu0 0
        %1234 = vmatprep.subr.bf16.mxu0 0
        %1235 = vmatpush1.bf16.xpose.msra.mxu0 0
        %1236 = vmatprep.subr.bf16.mxu0 0
        %1237 = vmatpush1.bf16.xpose.msra.mxu0 0
        %1238 = vmatprep.subr.bf16.mxu0 0
        %1239 = vmatpush1.bf16.xpose.msra.mxu0 0
        %1240 = vmatprep.subr.bf16.mxu0 0
        %1241 = vmatpush1.bf16.xpose.msra.mxu0 0
        %1242 = vmatprep.subr.bf16.mxu0 0
        %1243 = vmatpush1.bf16.xpose.msra.mxu0 0
        %1244 = vmatprep.subr.bf16.mxu0 0
        %1245 = vmatpush1.bf16.xpose.msra.mxu0 0
        %1246 = vmatprep.subr.bf16.mxu0 0
        %1247 = vmatpush1.bf16.xpose.msra.mxu0 0
        %1248 = vmatprep.subr.bf16.mxu0 0
        %1249 = vmatpush1.bf16.xpose.msra.mxu0 0
        %1250 = vmatprep.subr.bf16.mxu0 0
        %1251 = vmatpush1.bf16.xpose.msra.mxu0 0
        %1252 = vmatprep.subr.bf16.mxu0 0
        %1253 = vmatpush1.bf16.xpose.msra.mxu0 0
        %1254 = vmatprep.subr.bf16.mxu0 0
        %1255 = vmatpush1.bf16.xpose.msra.mxu0 0
        %1256 = vmatprep.subr.bf16.mxu0 0
        %1257 = vmatpush1.bf16.xpose.msra.mxu0 0
        %1258 = vmatprep.subr.bf16.mxu0 0
        %1259 = vmatpush1.bf16.xpose.msra.mxu0 0
        %1260 = vmatprep.subr.bf16.mxu0 0
        %1261 = vmatpush1.bf16.xpose.msra.mxu0 0
        %1262 = vmatprep.mubr.bf16.mxu0 0
        %1263 = vmatmul.mubr.bf16.gmra.mrb[0].mxu0 %v1225
        %v1264 = vpop.f32.mrb[0].mxu0
        %v1265 = vadd.f32 %v966, %v1264
        %v1266 = vpop.f32.mrb[0].mxu0
        %v1267 = vpop.f32.mrb[0].mxu0
        %v1268 = vadd.f32 %v966, %v1267
        %v1269 = vpop.f32.mrb[0].mxu0
        %1270 = vdwg.mxu0
        %v1271 = vsel %vm1016, %v1265, -inf
        %1272 = vmax.xlane.f32.xlu0 %v1271
        %v1273 = vpop.xlane.xlu0 %1272
        %v1274 = vsel %vm1016, %v1268, -inf
        %1275 = vmax.xlane.f32.xlu0 %v1274
        %v1276 = vpop.xlane.xlu0 %1275
        %v1277 = vsub.f32 %v1265, %v1273
        %v1278 = vsub.f32 %v1268, %v1276
        %v1279 = vmul.f32 %v1277, 1.442695
        %v1280 = vpow.pop %v1279
        %v1281 = vmul.f32 %v1278, 1.442695
        %v1282 = vpow.pop %v1281
        %v1283 = vsel %vm1016, %v1280, 0.0
        %1284 = vadd.xlane.f32.xlu0 %v1283
        %v1285 = vpop.xlane.xlu0 %1284
        %v1286 = vsel %vm1016, %v1282, 0.0
        %1287 = vadd.xlane.f32.xlu0 %v1286
        %v1288 = vpop.xlane.xlu0 %1287
        %v1289 = vrcp.pop %v1285
        %v1290 = vrcp.pop %v1288
        %v1291 = vmul.f32 %v1285, %v1289
        %v1292 = vmul.f32 %v1288, %v1290
        %v1293 = vsub.f32 2.0, %v1291
        %v1294 = vsub.f32 2.0, %v1292
        %v1295 = vmul.f32 %v1289, %v1293
        %v1296 = vmul.f32 %v1290, %v1294
        %v1297 = vmul.f32 %v1280, %v1295
        %v1298 = vmul.f32 %v1282, %v1296
        %v1299 = vpack.c.bf16 %v1298, %v1297
        %1300 = vrot.lane.b32.xlu0 %v960, 64
        %v1301 = vpop.permute.xlu0 %1300
        %v1304 = vsel %vm1016, %v1299, 0
        %1306 = vmatprep.subr.bf16.mxu0 0
        %1307 = vmatpush1.bf16.msra.mxu0 %v1301
        %1308 = vmatprep.subr.bf16.mxu0 0
        %1309 = vmatpush1.bf16.msra.mxu0 0
        %1310 = vmatprep.subr.bf16.mxu0 0
        %1311 = vmatpush1.bf16.msra.mxu0 0
        %1312 = vmatprep.subr.bf16.mxu0 0
        %1313 = vmatpush1.bf16.msra.mxu0 0
        %1314 = vmatprep.subr.bf16.mxu0 0
        %1315 = vmatpush1.bf16.msra.mxu0 0
        %1316 = vmatprep.subr.bf16.mxu0 0
        %1317 = vmatpush1.bf16.msra.mxu0 0
        %1318 = vmatprep.subr.bf16.mxu0 0
        %1319 = vmatpush1.bf16.msra.mxu0 0
        %1320 = vmatprep.subr.bf16.mxu0 0
        %1321 = vmatpush1.bf16.msra.mxu0 0
        %1322 = vmatprep.subr.bf16.mxu0 0
        %1323 = vmatpush1.bf16.msra.mxu0 0
        %1324 = vmatprep.subr.bf16.mxu0 0
        %1325 = vmatpush1.bf16.msra.mxu0 0
        %1326 = vmatprep.subr.bf16.mxu0 0
        %1327 = vmatpush1.bf16.msra.mxu0 0
        %1328 = vmatprep.subr.bf16.mxu0 0
        %1329 = vmatpush1.bf16.msra.mxu0 0
        %1330 = vmatprep.subr.bf16.mxu0 0
        %1331 = vmatpush1.bf16.msra.mxu0 0
        %1332 = vmatprep.subr.bf16.mxu0 0
        %1333 = vmatpush1.bf16.msra.mxu0 0
        %1334 = vmatprep.subr.bf16.mxu0 0
        %1335 = vmatpush1.bf16.msra.mxu0 0
        %1336 = vmatprep.subr.bf16.mxu0 0
        %1337 = vmatpush1.bf16.msra.mxu0 0
        %1338 = vmatprep.mubr.bf16.mxu0 0
        %1339 = vmatmul.mubr.bf16.gmra.mrb[0].mxu0 %v1304
        %v1340 = vpop.f32.mrb[0].mxu0
        %v1341 = vadd.f32 0.0, %v1340
        %v1342 = vpop.f32.mrb[0].mxu0
        %v1343 = vpop.f32.mrb[0].mxu0
        %v1344 = vadd.f32 0.0, %v1343
        %v1345 = vpop.f32.mrb[0].mxu0
        %1346 = vdwg.mxu0
        %1347 = vrot.lane.b32.xlu0 %v958, 32
        %v1348 = vpop.permute.xlu0 %1347
        %1349 = vrot.lane.b32.xlu0 %v959, 32
        %v1350 = vpop.permute.xlu0 %1349
        %v1352 = vsel %vm968, %v1348, 0
        %v1355 = vsel %vm968, %v1350, 0
        %1357 = vmatprep.subr.bf16.mxu0 0
        %1358 = vmatpush1.bf16.xpose.msra.mxu0 %v1355
        %1359 = vmatprep.subr.bf16.mxu0 0
        %1360 = vmatpush1.bf16.xpose.msra.mxu0 0
        %1361 = vmatprep.subr.bf16.mxu0 0
        %1362 = vmatpush1.bf16.xpose.msra.mxu0 0
        %1363 = vmatprep.subr.bf16.mxu0 0
        %1364 = vmatpush1.bf16.xpose.msra.mxu0 0
        %1365 = vmatprep.subr.bf16.mxu0 0
        %1366 = vmatpush1.bf16.xpose.msra.mxu0 0
        %1367 = vmatprep.subr.bf16.mxu0 0
        %1368 = vmatpush1.bf16.xpose.msra.mxu0 0
        %1369 = vmatprep.subr.bf16.mxu0 0
        %1370 = vmatpush1.bf16.xpose.msra.mxu0 0
        %1371 = vmatprep.subr.bf16.mxu0 0
        %1372 = vmatpush1.bf16.xpose.msra.mxu0 0
        %1373 = vmatprep.subr.bf16.mxu0 0
        %1374 = vmatpush1.bf16.xpose.msra.mxu0 0
        %1375 = vmatprep.subr.bf16.mxu0 0
        %1376 = vmatpush1.bf16.xpose.msra.mxu0 0
        %1377 = vmatprep.subr.bf16.mxu0 0
        %1378 = vmatpush1.bf16.xpose.msra.mxu0 0
        %1379 = vmatprep.subr.bf16.mxu0 0
        %1380 = vmatpush1.bf16.xpose.msra.mxu0 0
        %1381 = vmatprep.subr.bf16.mxu0 0
        %1382 = vmatpush1.bf16.xpose.msra.mxu0 0
        %1383 = vmatprep.subr.bf16.mxu0 0
        %1384 = vmatpush1.bf16.xpose.msra.mxu0 0
        %1385 = vmatprep.subr.bf16.mxu0 0
        %1386 = vmatpush1.bf16.xpose.msra.mxu0 0
        %1387 = vmatprep.subr.bf16.mxu0 0
        %1388 = vmatpush1.bf16.xpose.msra.mxu0 0
        %1389 = vmatprep.mubr.bf16.mxu0 0
        %1390 = vmatmul.mubr.bf16.gmra.mrb[0].mxu0 %v1352
        %v1391 = vpop.f32.mrb[0].mxu0
        %v1392 = vadd.f32 %v966, %v1391
        %v1393 = vpop.f32.mrb[0].mxu0
        %v1394 = vpop.f32.mrb[0].mxu0
        %v1395 = vadd.f32 %v966, %v1394
        %v1396 = vpop.f32.mrb[0].mxu0
        %1397 = vdwg.mxu0
        %v1398 = vsel %vm1016, %v1392, -inf
        %1399 = vmax.xlane.f32.xlu0 %v1398
        %v1400 = vpop.xlane.xlu0 %1399
        %v1401 = vsel %vm1016, %v1395, -inf
        %1402 = vmax.xlane.f32.xlu0 %v1401
        %v1403 = vpop.xlane.xlu0 %1402
        %v1404 = vsub.f32 %v1392, %v1400
        %v1405 = vsub.f32 %v1395, %v1403
        %v1406 = vmul.f32 %v1404, 1.442695
        %v1407 = vpow.pop %v1406
        %v1408 = vmul.f32 %v1405, 1.442695
        %v1409 = vpow.pop %v1408
        %v1410 = vsel %vm1016, %v1407, 0.0
        %1411 = vadd.xlane.f32.xlu0 %v1410
        %v1412 = vpop.xlane.xlu0 %1411
        %v1413 = vsel %vm1016, %v1409, 0.0
        %1414 = vadd.xlane.f32.xlu0 %v1413
        %v1415 = vpop.xlane.xlu0 %1414
        %v1416 = vrcp.pop %v1412
        %v1417 = vrcp.pop %v1415
        %v1418 = vmul.f32 %v1412, %v1416
        %v1419 = vmul.f32 %v1415, %v1417
        %v1420 = vsub.f32 2.0, %v1418
        %v1421 = vsub.f32 2.0, %v1419
        %v1422 = vmul.f32 %v1416, %v1420
        %v1423 = vmul.f32 %v1417, %v1421
        %v1424 = vmul.f32 %v1407, %v1422
        %v1425 = vmul.f32 %v1409, %v1423
        %v1426 = vpack.c.bf16 %v1425, %v1424
        %1427 = vrot.lane.b32.xlu0 %v960, 32
        %v1428 = vpop.permute.xlu0 %1427
        %v1431 = vsel %vm1016, %v1426, 0
        %1433 = vmatprep.subr.bf16.mxu0 0
        %1434 = vmatpush1.bf16.msra.mxu0 %v1428
        %1435 = vmatprep.subr.bf16.mxu0 0
        %1436 = vmatpush1.bf16.msra.mxu0 0
        %1437 = vmatprep.subr.bf16.mxu0 0
        %1438 = vmatpush1.bf16.msra.mxu0 0
        %1439 = vmatprep.subr.bf16.mxu0 0
        %1440 = vmatpush1.bf16.msra.mxu0 0
        %1441 = vmatprep.subr.bf16.mxu0 0
        %1442 = vmatpush1.bf16.msra.mxu0 0
        %1443 = vmatprep.subr.bf16.mxu0 0
        %1444 = vmatpush1.bf16.msra.mxu0 0
        %1445 = vmatprep.subr.bf16.mxu0 0
        %1446 = vmatpush1.bf16.msra.mxu0 0
        %1447 = vmatprep.subr.bf16.mxu0 0
        %1448 = vmatpush1.bf16.msra.mxu0 0
        %1449 = vmatprep.subr.bf16.mxu0 0
        %1450 = vmatpush1.bf16.msra.mxu0 0
        %1451 = vmatprep.subr.bf16.mxu0 0
        %1452 = vmatpush1.bf16.msra.mxu0 0
        %1453 = vmatprep.subr.bf16.mxu0 0
        %1454 = vmatpush1.bf16.msra.mxu0 0
        %1455 = vmatprep.subr.bf16.mxu0 0
        %1456 = vmatpush1.bf16.msra.mxu0 0
        %1457 = vmatprep.subr.bf16.mxu0 0
        %1458 = vmatpush1.bf16.msra.mxu0 0
        %1459 = vmatprep.subr.bf16.mxu0 0
        %1460 = vmatpush1.bf16.msra.mxu0 0
        %1461 = vmatprep.subr.bf16.mxu0 0
        %1462 = vmatpush1.bf16.msra.mxu0 0
        %1463 = vmatprep.subr.bf16.mxu0 0
        %1464 = vmatpush1.bf16.msra.mxu0 0
        %1465 = vmatprep.mubr.bf16.mxu0 0
        %1466 = vmatmul.mubr.bf16.gmra.mrb[0].mxu0 %v1431
        %v1467 = vpop.f32.mrb[0].mxu0
        %v1468 = vadd.f32 0.0, %v1467
        %v1469 = vpop.f32.mrb[0].mxu0
        %v1470 = vpop.f32.mrb[0].mxu0
        %v1471 = vadd.f32 0.0, %v1470
        %v1472 = vpop.f32.mrb[0].mxu0
        %1473 = vdwg.mxu0
        %1476 = vrot.lane.b32.xlu0 %v1214, 32
        %v1477 = vpop.permute.xlu0 %1476
        %1478 = vrot.lane.b32.xlu0 %v1217, 32
        %v1479 = vpop.permute.xlu0 %1478
        %1484 = vrot.lane.b32.xlu0 %v1341, 64
        %v1485 = vpop.permute.xlu0 %1484
        %1486 = vrot.lane.b32.xlu0 %v1344, 64
        %v1487 = vpop.permute.xlu0 %1486
        %1492 = vrot.lane.b32.xlu0 %v1468, 96
        %v1493 = vpop.permute.xlu0 %1492
        %1494 = vrot.lane.b32.xlu0 %v1471, 96
        %v1495 = vpop.permute.xlu0 %1494
        %v1498 = vsel %vm968, %v1084, %v1477
        %v1499 = vsel %vm968, %v1087, %v1479
        %vm1500 = vcmask 523264
        %v1501 = vsel %vm1500, %v1498, %v1485
        %v1502 = vsel %vm1500, %v1499, %v1487
        %vm1503 = vcmask 785408
        %v1504 = vsel %vm1503, %v1501, %v1493
        %v1505 = vsel %vm1503, %v1502, %v1495
        %v1506 = vpack.c.bf16 %v1505, %v1504
        %v1507 = vld [vmem:[#allocation4] sm:$0xf]
        %v1508 = vld [vmem:[#allocation4 + $0x4] sm:$0xf]
        %v1509 = vld [vmem:[#allocation4 + $0x8] sm:$0xf]
        %v1510 = vld [vmem:[#allocation4 + $0xc] sm:$0xf]
        %v1511 = vld [vmem:[#allocation4 + $0x10] sm:$0xf]
        %v1512 = vld [vmem:[#allocation4 + $0x14] sm:$0xf]
        %v1513 = vld [vmem:[#allocation4 + $0x18] sm:$0xf]
        %v1514 = vld [vmem:[#allocation4 + $0x1c] sm:$0xf]
        %v1515 = vld [vmem:[#allocation4 + $0x20] sm:$0xf]
        %v1516 = vld [vmem:[#allocation4 + $0x24] sm:$0xf]
        %v1517 = vld [vmem:[#allocation4 + $0x28] sm:$0xf]
        %v1518 = vld [vmem:[#allocation4 + $0x2c] sm:$0xf]
        %v1519 = vld [vmem:[#allocation4 + $0x30] sm:$0xf]
        %v1520 = vld [vmem:[#allocation4 + $0x34] sm:$0xf]
        %v1521 = vld [vmem:[#allocation4 + $0x38] sm:$0xf]
        %v1522 = vld [vmem:[#allocation4 + $0x3c] sm:$0xf]
        %v1523 = vld [vmem:[%s5] sm:$0x1]
        %v1525 = vlaneseq
        %v1526 = vshrl.u32 %v1525, 7
        %v1527 = vsub.s32 0, %v1526
        %v1528 = vrot.slane %v1523, %v1527
        %v1546 = vunpack.c.l.b16 %v1507
        %v1547 = vunpack.c.l.b16 %v1508
        %v1548 = vunpack.c.l.b16 %v1509
        %v1549 = vunpack.c.l.b16 %v1510
        %v1550 = vunpack.c.l.b16 %v1511
        %v1551 = vunpack.c.l.b16 %v1512
        %v1552 = vunpack.c.l.b16 %v1513
        %v1553 = vunpack.c.l.b16 %v1514
        %v1554 = vunpack.c.l.b16 %v1515
        %v1555 = vunpack.c.l.b16 %v1516
        %v1556 = vunpack.c.l.b16 %v1517
        %v1557 = vunpack.c.l.b16 %v1518
        %v1558 = vunpack.c.l.b16 %v1519
        %v1559 = vunpack.c.l.b16 %v1520
        %v1560 = vunpack.c.l.b16 %v1521
        %v1561 = vunpack.c.l.b16 %v1522
        %v1562 = vpack.c.b16 %v1547, %v1546
        %v1563 = vpack.c.b16 %v1549, %v1548
        %v1564 = vpack.c.b16 %v1551, %v1550
        %v1565 = vpack.c.b16 %v1553, %v1552
        %v1566 = vpack.c.b16 %v1555, %v1554
        %v1567 = vpack.c.b16 %v1557, %v1556
        %v1568 = vpack.c.b16 %v1559, %v1558
        %v1569 = vpack.c.b16 %v1561, %v1560
        %1578 = vmatprep.subr.bf16.mxu0 0
        %1579 = vmatpush1.bf16.msra.mxu0 %v1562
        %1580 = vmatprep.subr.bf16.mxu0 0
        %1581 = vmatpush1.bf16.msra.mxu0 %v1563
        %1582 = vmatprep.subr.bf16.mxu0 0
        %1583 = vmatpush1.bf16.msra.mxu0 %v1564
        %1584 = vmatprep.subr.bf16.mxu0 0
        %1585 = vmatpush1.bf16.msra.mxu0 %v1565
        %1586 = vmatprep.subr.bf16.mxu0 0
        %1587 = vmatpush1.bf16.msra.mxu0 %v1566
        %1588 = vmatprep.subr.bf16.mxu0 0
        %1589 = vmatpush1.bf16.msra.mxu0 %v1567
        %1590 = vmatprep.subr.bf16.mxu0 0
        %1591 = vmatpush1.bf16.msra.mxu0 %v1568
        %1592 = vmatprep.subr.bf16.mxu0 0
        %1593 = vmatpush1.bf16.msra.mxu0 %v1569
        %1594 = vmatprep.subr.bf16.mxu0 0
        %1595 = vmatpush1.bf16.msra.mxu0 0
        %1596 = vmatprep.subr.bf16.mxu0 0
        %1597 = vmatpush1.bf16.msra.mxu0 0
        %1598 = vmatprep.subr.bf16.mxu0 0
        %1599 = vmatpush1.bf16.msra.mxu0 0
        %1600 = vmatprep.subr.bf16.mxu0 0
        %1601 = vmatpush1.bf16.msra.mxu0 0
        %1602 = vmatprep.subr.bf16.mxu0 0
        %1603 = vmatpush1.bf16.msra.mxu0 0
        %1604 = vmatprep.subr.bf16.mxu0 0
        %1605 = vmatpush1.bf16.msra.mxu0 0
        %1606 = vmatprep.subr.bf16.mxu0 0
        %1607 = vmatpush1.bf16.msra.mxu0 0
        %1608 = vmatprep.subr.bf16.mxu0 0
        %1609 = vmatpush1.bf16.msra.mxu0 0
        %1610 = vmatprep.mubr.bf16.mxu0 0
        %1611 = vmatmul.mubr.bf16.gmra.mrb[0].mxu0 %v1506
        %v1612 = vpop.f32.mrb[0].mxu0
        %v1613 = vadd.f32 %v1528, %v1612
        %v1614 = vpop.f32.mrb[0].mxu0
        %v1615 = vpop.f32.mrb[0].mxu0
        %v1616 = vadd.f32 %v1528, %v1615
        %v1617 = vpop.f32.mrb[0].mxu0
        %1618 = vdwg.mxu0
        %v1619 = vadd.f32 %v1613, %v694
        %v1620 = vadd.f32 %v1616, %v695
        %v1621 = vld [vmem:[#allocation12] sm:$0x1]
        %v1622 = vld [vmem:[#allocation13] sm:$0x1]
        %1623 = vadd.xlane.f32.xlu0 %v1619
        %v1624 = vpop.xlane.xlu0 %1623
        %1625 = vadd.xlane.f32.xlu0 %v1620
        %v1626 = vpop.xlane.xlu0 %1625
        %v1627 = vrcp.pop 128.0
        %v1628 = vmul.f32 %v1624, %v1627
        %v1629 = vmul.f32 %v1626, %v1627
        %v1630 = vsub.f32 %v1619, %v1628
        %v1631 = vsub.f32 %v1620, %v1629
        %v1632 = vmul.f32 %v1630, %v1630
        %v1633 = vmul.f32 %v1631, %v1631
        %1634 = vadd.xlane.f32.xlu0 %v1632
        %v1635 = vpop.xlane.xlu0 %1634
        %1636 = vadd.xlane.f32.xlu0 %v1633
        %v1637 = vpop.xlane.xlu0 %1636
        %v1638 = vmul.f32 %v1635, %v1627
        %v1639 = vmul.f32 %v1637, %v1627
        %v1640 = vadd.f32 %v1638, 1e-05
        %v1641 = vadd.f32 %v1639, 1e-05
        %v1642 = vrsqrt.pop %v1640
        %v1643 = vrsqrt.pop %v1641
        %v1644 = vmul.f32 %v1630, %v1642
        %v1645 = vmul.f32 %v1631, %v1643
        %v1647 = vlaneseq
        %v1648 = vshrl.u32 %v1647, 7
        %v1649 = vsub.s32 0, %v1648
        %v1650 = vrot.slane %v1621, %v1649
        %v1652 = vmul.f32 %v1644, %v1650
        %v1653 = vmul.f32 %v1645, %v1650
        %v1655 = vlaneseq
        %v1656 = vshrl.u32 %v1655, 7
        %v1657 = vsub.s32 0, %v1656
        %v1658 = vrot.slane %v1622, %v1657
        %v1660 = vadd.f32 %v1652, %v1658
        %v1661 = vadd.f32 %v1653, %v1658
        %v1662 = vpack.c.bf16 %v1661, %v1660
        %v1663 = vld [vmem:[#allocation6] sm:$0xff]
        %v1664 = vld [vmem:[#allocation6 + $0x8] sm:$0xff]
        %v1665 = vld [vmem:[#allocation6 + $0x10] sm:$0xff]
        %v1666 = vld [vmem:[#allocation6 + $0x18] sm:$0xff]
        %v1667 = vld [vmem:[#allocation6 + $0x20] sm:$0xff]
        %v1668 = vld [vmem:[#allocation6 + $0x28] sm:$0xff]
        %v1669 = vld [vmem:[#allocation6 + $0x30] sm:$0xff]
        %v1670 = vld [vmem:[#allocation6 + $0x38] sm:$0xff]
        %v1671 = vld [vmem:[#allocation6 + $0x40] sm:$0xff]
        %v1672 = vld [vmem:[#allocation6 + $0x48] sm:$0xff]
        %v1673 = vld [vmem:[#allocation6 + $0x50] sm:$0xff]
        %v1674 = vld [vmem:[#allocation6 + $0x58] sm:$0xff]
        %v1675 = vld [vmem:[#allocation6 + $0x60] sm:$0xff]
        %v1676 = vld [vmem:[#allocation6 + $0x68] sm:$0xff]
        %v1677 = vld [vmem:[#allocation6 + $0x70] sm:$0xff]
        %v1678 = vld [vmem:[#allocation6 + $0x78] sm:$0xff]
        %v1679 = vld [vmem:[#allocation7] sm:$0x3]
        %v1681 = vlaneseq
        %v1682 = vshrl.u32 %v1681, 7
        %v1683 = vsub.s32 0, %v1682
        %v1684 = vrot.slane %v1679, %v1683
        %v1685 = vlaneseq
        %v1686 = vshrl.u32 %v1685, 7
        %v1687 = vsub.s32 1, %v1686
        %v1688 = vrot.slane %v1679, %v1687
        %v1707 = vunpack.c.l.b16 %v1663
        %v1708 = vunpack.c.h.b16 %v1663
        %v1709 = vunpack.c.l.b16 %v1664
        %v1710 = vunpack.c.h.b16 %v1664
        %v1711 = vunpack.c.l.b16 %v1665
        %v1712 = vunpack.c.h.b16 %v1665
        %v1713 = vunpack.c.l.b16 %v1666
        %v1714 = vunpack.c.h.b16 %v1666
        %v1715 = vunpack.c.l.b16 %v1667
        %v1716 = vunpack.c.h.b16 %v1667
        %v1717 = vunpack.c.l.b16 %v1668
        %v1718 = vunpack.c.h.b16 %v1668
        %v1719 = vunpack.c.l.b16 %v1669
        %v1720 = vunpack.c.h.b16 %v1669
        %v1721 = vunpack.c.l.b16 %v1670
        %v1722 = vunpack.c.h.b16 %v1670
        %v1723 = vunpack.c.l.b16 %v1671
        %v1724 = vunpack.c.h.b16 %v1671
        %v1725 = vunpack.c.l.b16 %v1672
        %v1726 = vunpack.c.h.b16 %v1672
        %v1727 = vunpack.c.l.b16 %v1673
        %v1728 = vunpack.c.h.b16 %v1673
        %v1729 = vunpack.c.l.b16 %v1674
        %v1730 = vunpack.c.h.b16 %v1674
        %v1731 = vunpack.c.l.b16 %v1675
        %v1732 = vunpack.c.h.b16 %v1675
        %v1733 = vunpack.c.l.b16 %v1676
        %v1734 = vunpack.c.h.b16 %v1676
        %v1735 = vunpack.c.l.b16 %v1677
        %v1736 = vunpack.c.h.b16 %v1677
        %v1737 = vunpack.c.l.b16 %v1678
        %v1738 = vunpack.c.h.b16 %v1678
        %v1739 = vpack.c.b16 %v1709, %v1707
        %v1740 = vpack.c.b16 %v1710, %v1708
        %v1741 = vpack.c.b16 %v1713, %v1711
        %v1742 = vpack.c.b16 %v1714, %v1712
        %v1743 = vpack.c.b16 %v1717, %v1715
        %v1744 = vpack.c.b16 %v1718, %v1716
        %v1745 = vpack.c.b16 %v1721, %v1719
        %v1746 = vpack.c.b16 %v1722, %v1720
        %v1747 = vpack.c.b16 %v1725, %v1723
        %v1748 = vpack.c.b16 %v1726, %v1724
        %v1749 = vpack.c.b16 %v1729, %v1727
        %v1750 = vpack.c.b16 %v1730, %v1728
        %v1751 = vpack.c.b16 %v1733, %v1731
        %v1752 = vpack.c.b16 %v1734, %v1732
        %v1753 = vpack.c.b16 %v1737, %v1735
        %v1754 = vpack.c.b16 %v1738, %v1736
        %1771 = vmatprep.subr.bf16.mxu0 %v1740
        %1772 = vmatpush1.bf16.msra.mxu0 %v1739
        %1773 = vmatprep.subr.bf16.mxu0 %v1742
        %1774 = vmatpush1.bf16.msra.mxu0 %v1741
        %1775 = vmatprep.subr.bf16.mxu0 %v1744
        %1776 = vmatpush1.bf16.msra.mxu0 %v1743
        %1777 = vmatprep.subr.bf16.mxu0 %v1746
        %1778 = vmatpush1.bf16.msra.mxu0 %v1745
        %1779 = vmatprep.subr.bf16.mxu0 %v1748
        %1780 = vmatpush1.bf16.msra.mxu0 %v1747
        %1781 = vmatprep.subr.bf16.mxu0 %v1750
        %1782 = vmatpush1.bf16.msra.mxu0 %v1749
        %1783 = vmatprep.subr.bf16.mxu0 %v1752
        %1784 = vmatpush1.bf16.msra.mxu0 %v1751
        %1785 = vmatprep.subr.bf16.mxu0 %v1754
        %1786 = vmatpush1.bf16.msra.mxu0 %v1753
        %1787 = vmatprep.subr.bf16.mxu0 0
        %1788 = vmatpush1.bf16.msra.mxu0 0
        %1789 = vmatprep.subr.bf16.mxu0 0
        %1790 = vmatpush1.bf16.msra.mxu0 0
        %1791 = vmatprep.subr.bf16.mxu0 0
        %1792 = vmatpush1.bf16.msra.mxu0 0
        %1793 = vmatprep.subr.bf16.mxu0 0
        %1794 = vmatpush1.bf16.msra.mxu0 0
        %1795 = vmatprep.subr.bf16.mxu0 0
        %1796 = vmatpush1.bf16.msra.mxu0 0
        %1797 = vmatprep.subr.bf16.mxu0 0
        %1798 = vmatpush1.bf16.msra.mxu0 0
        %1799 = vmatprep.subr.bf16.mxu0 0
        %1800 = vmatpush1.bf16.msra.mxu0 0
        %1801 = vmatprep.subr.bf16.mxu0 0
        %1802 = vmatpush1.bf16.msra.mxu0 0
        %1803 = vmatprep.mubr.bf16.mxu0 0
        %1804 = vmatmul.mubr.bf16.gmra.mrb[0].mxu0 %v1662
        %v1805 = vpop.f32.mrb[0].mxu0
        %v1806 = vadd.f32 %v1684, %v1805
        %v1807 = vpop.f32.mrb[0].mxu0
        %v1808 = vadd.f32 %v1688, %v1807
        %v1809 = vpop.f32.mrb[0].mxu0
        %v1810 = vadd.f32 %v1684, %v1809
        %v1811 = vpop.f32.mrb[0].mxu0
        %v1812 = vadd.f32 %v1688, %v1811
        %1813 = vdwg.mxu0
        %v1814 = vmax.f32 %v1806, 0.0
        %v1815 = vmax.f32 %v1808, 0.0
        %v1816 = vmax.f32 %v1810, 0.0
        %v1817 = vmax.f32 %v1812, 0.0
        %v1818 = vld [vmem:[#allocation15] sm:$0x3]
        %v1819 = vld [vmem:[#allocation16] sm:$0x3]
        %v1820 = vadd.f32 %v1814, %v1815
        %1821 = vadd.xlane.f32.xlu0 %v1820
        %v1822 = vpop.xlane.xlu0 %1821
        %v1823 = vadd.f32 %v1816, %v1817
        %1824 = vadd.xlane.f32.xlu0 %v1823
        %v1825 = vpop.xlane.xlu0 %1824
        %v1826 = vrcp.pop 256.0
        %v1827 = vmul.f32 %v1822, %v1826
        %v1828 = vmul.f32 %v1825, %v1826
        %v1829 = vsub.f32 %v1814, %v1827
        %v1830 = vsub.f32 %v1815, %v1827
        %v1831 = vsub.f32 %v1816, %v1828
        %v1832 = vsub.f32 %v1817, %v1828
        %v1833 = vmul.f32 %v1829, %v1829
        %v1834 = vmul.f32 %v1830, %v1830
        %v1835 = vmul.f32 %v1831, %v1831
        %v1836 = vmul.f32 %v1832, %v1832
        %v1837 = vadd.f32 %v1833, %v1834
        %1838 = vadd.xlane.f32.xlu0 %v1837
        %v1839 = vpop.xlane.xlu0 %1838
        %v1840 = vadd.f32 %v1835, %v1836
        %1841 = vadd.xlane.f32.xlu0 %v1840
        %v1842 = vpop.xlane.xlu0 %1841
        %v1843 = vmul.f32 %v1839, %v1826
        %v1844 = vmul.f32 %v1842, %v1826
        %v1845 = vadd.f32 %v1843, 1e-05
        %v1846 = vadd.f32 %v1844, 1e-05
        %v1847 = vrsqrt.pop %v1845
        %v1848 = vrsqrt.pop %v1846
        %v1849 = vmul.f32 %v1829, %v1847
        %v1850 = vmul.f32 %v1830, %v1847
        %v1851 = vmul.f32 %v1831, %v1848
        %v1852 = vmul.f32 %v1832, %v1848
        %v1854 = vlaneseq
        %v1855 = vshrl.u32 %v1854, 7
        %v1856 = vsub.s32 0, %v1855
        %v1857 = vrot.slane %v1818, %v1856
        %v1858 = vlaneseq
        %v1859 = vshrl.u32 %v1858, 7
        %v1860 = vsub.s32 1, %v1859
        %v1861 = vrot.slane %v1818, %v1860
        %v1864 = vmul.f32 %v1849, %v1857
        %v1865 = vmul.f32 %v1850, %v1861
        %v1866 = vmul.f32 %v1851, %v1857
        %v1867 = vmul.f32 %v1852, %v1861
        %v1869 = vlaneseq
        %v1870 = vshrl.u32 %v1869, 7
        %v1871 = vsub.s32 0, %v1870
        %v1872 = vrot.slane %v1819, %v1871
        %v1873 = vlaneseq
        %v1874 = vshrl.u32 %v1873, 7
        %v1875 = vsub.s32 1, %v1874
        %v1876 = vrot.slane %v1819, %v1875
        %v1879 = vadd.f32 %v1864, %v1872
        %v1880 = vadd.f32 %v1865, %v1876
        %v1881 = vadd.f32 %v1866, %v1872
        %v1882 = vadd.f32 %v1867, %v1876
        %v1883 = vpack.c.bf16 %v1881, %v1879
        %v1884 = vpack.c.bf16 %v1882, %v1880
        %v1885 = vld [vmem:[#allocation9] sm:$0xf]
        %v1886 = vld [vmem:[#allocation9 + $0x4] sm:$0xf]
        %v1887 = vld [vmem:[#allocation9 + $0x8] sm:$0xf]
        %v1888 = vld [vmem:[#allocation9 + $0xc] sm:$0xf]
        %v1889 = vld [vmem:[#allocation9 + $0x10] sm:$0xf]
        %v1890 = vld [vmem:[#allocation9 + $0x14] sm:$0xf]
        %v1891 = vld [vmem:[#allocation9 + $0x18] sm:$0xf]
        %v1892 = vld [vmem:[#allocation9 + $0x1c] sm:$0xf]
        %v1893 = vld [vmem:[#allocation9 + $0x20] sm:$0xf]
        %v1894 = vld [vmem:[#allocation9 + $0x24] sm:$0xf]
        %v1895 = vld [vmem:[#allocation9 + $0x28] sm:$0xf]
        %v1896 = vld [vmem:[#allocation9 + $0x2c] sm:$0xf]
        %v1897 = vld [vmem:[#allocation9 + $0x30] sm:$0xf]
        %v1898 = vld [vmem:[#allocation9 + $0x34] sm:$0xf]
        %v1899 = vld [vmem:[#allocation9 + $0x38] sm:$0xf]
        %v1900 = vld [vmem:[#allocation9 + $0x3c] sm:$0xf]
        %v1901 = vld [vmem:[#allocation9 + $0x40] sm:$0xf]
        %v1902 = vld [vmem:[#allocation9 + $0x44] sm:$0xf]
        %v1903 = vld [vmem:[#allocation9 + $0x48] sm:$0xf]
        %v1904 = vld [vmem:[#allocation9 + $0x4c] sm:$0xf]
        %v1905 = vld [vmem:[#allocation9 + $0x50] sm:$0xf]
        %v1906 = vld [vmem:[#allocation9 + $0x54] sm:$0xf]
        %v1907 = vld [vmem:[#allocation9 + $0x58] sm:$0xf]
        %v1908 = vld [vmem:[#allocation9 + $0x5c] sm:$0xf]
        %v1909 = vld [vmem:[#allocation9 + $0x60] sm:$0xf]
        %v1910 = vld [vmem:[#allocation9 + $0x64] sm:$0xf]
        %v1911 = vld [vmem:[#allocation9 + $0x68] sm:$0xf]
        %v1912 = vld [vmem:[#allocation9 + $0x6c] sm:$0xf]
        %v1913 = vld [vmem:[#allocation9 + $0x70] sm:$0xf]
        %v1914 = vld [vmem:[#allocation9 + $0x74] sm:$0xf]
        %v1915 = vld [vmem:[#allocation9 + $0x78] sm:$0xf]
        %v1916 = vld [vmem:[#allocation9 + $0x7c] sm:$0xf]
        %v1917 = vld [vmem:[#allocation10] sm:$0x1]
        %v1919 = vlaneseq
        %v1920 = vshrl.u32 %v1919, 7
        %v1921 = vsub.s32 0, %v1920
        %v1922 = vrot.slane %v1917, %v1921
        %v1956 = vunpack.c.l.b16 %v1885
        %v1957 = vunpack.c.l.b16 %v1886
        %v1958 = vunpack.c.l.b16 %v1887
        %v1959 = vunpack.c.l.b16 %v1888
        %v1960 = vunpack.c.l.b16 %v1889
        %v1961 = vunpack.c.l.b16 %v1890
        %v1962 = vunpack.c.l.b16 %v1891
        %v1963 = vunpack.c.l.b16 %v1892
        %v1964 = vunpack.c.l.b16 %v1893
        %v1965 = vunpack.c.l.b16 %v1894
        %v1966 = vunpack.c.l.b16 %v1895
        %v1967 = vunpack.c.l.b16 %v1896
        %v1968 = vunpack.c.l.b16 %v1897
        %v1969 = vunpack.c.l.b16 %v1898
        %v1970 = vunpack.c.l.b16 %v1899
        %v1971 = vunpack.c.l.b16 %v1900
        %v1972 = vunpack.c.l.b16 %v1901
        %v1973 = vunpack.c.l.b16 %v1902
        %v1974 = vunpack.c.l.b16 %v1903
        %v1975 = vunpack.c.l.b16 %v1904
        %v1976 = vunpack.c.l.b16 %v1905
        %v1977 = vunpack.c.l.b16 %v1906
        %v1978 = vunpack.c.l.b16 %v1907
        %v1979 = vunpack.c.l.b16 %v1908
        %v1980 = vunpack.c.l.b16 %v1909
        %v1981 = vunpack.c.l.b16 %v1910
        %v1982 = vunpack.c.l.b16 %v1911
        %v1983 = vunpack.c.l.b16 %v1912
        %v1984 = vunpack.c.l.b16 %v1913
        %v1985 = vunpack.c.l.b16 %v1914
        %v1986 = vunpack.c.l.b16 %v1915
        %v1987 = vunpack.c.l.b16 %v1916
        %v1988 = vpack.c.b16 %v1957, %v1956
        %v1989 = vpack.c.b16 %v1959, %v1958
        %v1990 = vpack.c.b16 %v1961, %v1960
        %v1991 = vpack.c.b16 %v1963, %v1962
        %v1992 = vpack.c.b16 %v1965, %v1964
        %v1993 = vpack.c.b16 %v1967, %v1966
        %v1994 = vpack.c.b16 %v1969, %v1968
        %v1995 = vpack.c.b16 %v1971, %v1970
        %v1996 = vpack.c.b16 %v1973, %v1972
        %v1997 = vpack.c.b16 %v1975, %v1974
        %v1998 = vpack.c.b16 %v1977, %v1976
        %v1999 = vpack.c.b16 %v1979, %v1978
        %v2000 = vpack.c.b16 %v1981, %v1980
        %v2001 = vpack.c.b16 %v1983, %v1982
        %v2002 = vpack.c.b16 %v1985, %v1984
        %v2003 = vpack.c.b16 %v1987, %v1986
        %2020 = vmatprep.subr.bf16.mxu0 0
        %2021 = vmatpush1.bf16.msra.mxu0 %v1988
        %2022 = vmatprep.subr.bf16.mxu0 0
        %2023 = vmatpush1.bf16.msra.mxu0 %v1989
        %2024 = vmatprep.subr.bf16.mxu0 0
        %2025 = vmatpush1.bf16.msra.mxu0 %v1990
        %2026 = vmatprep.subr.bf16.mxu0 0
        %2027 = vmatpush1.bf16.msra.mxu0 %v1991
        %2028 = vmatprep.subr.bf16.mxu0 0
        %2029 = vmatpush1.bf16.msra.mxu0 %v1992
        %2030 = vmatprep.subr.bf16.mxu0 0
        %2031 = vmatpush1.bf16.msra.mxu0 %v1993
        %2032 = vmatprep.subr.bf16.mxu0 0
        %2033 = vmatpush1.bf16.msra.mxu0 %v1994
        %2034 = vmatprep.subr.bf16.mxu0 0
        %2035 = vmatpush1.bf16.msra.mxu0 %v1995
        %2036 = vmatprep.subr.bf16.mxu0 0
        %2037 = vmatpush1.bf16.msra.mxu0 %v1996
        %2038 = vmatprep.subr.bf16.mxu0 0
        %2039 = vmatpush1.bf16.msra.mxu0 %v1997
        %2040 = vmatprep.subr.bf16.mxu0 0
        %2041 = vmatpush1.bf16.msra.mxu0 %v1998
        %2042 = vmatprep.subr.bf16.mxu0 0
        %2043 = vmatpush1.bf16.msra.mxu0 %v1999
        %2044 = vmatprep.subr.bf16.mxu0 0
        %2045 = vmatpush1.bf16.msra.mxu0 %v2000
        %2046 = vmatprep.subr.bf16.mxu0 0
        %2047 = vmatpush1.bf16.msra.mxu0 %v2001
        %2048 = vmatprep.subr.bf16.mxu0 0
        %2049 = vmatpush1.bf16.msra.mxu0 %v2002
        %2050 = vmatprep.subr.bf16.mxu0 0
        %2051 = vmatpush1.bf16.msra.mxu0 %v2003
        %2052 = vmatprep.mubr.bf16.mxu0 %v1884
        %2053 = vmatmul.mubr.bf16.gmra.mrb[0].mxu0 %v1883
        %v2054 = vpop.f32.mrb[0].mxu0
        %v2055 = vadd.f32 %v1922, %v2054
        %v2056 = vpop.f32.mrb[0].mxu0
        %v2057 = vpop.f32.mrb[0].mxu0
        %v2058 = vadd.f32 %v1922, %v2057
        %v2059 = vpop.f32.mrb[0].mxu0
        %2060 = vdwg.mxu0
        %v2061 = vadd.f32 %v2055, %v1660
        %v2062 = vadd.f32 %v2058, %v1661
        %v2063 = vld [vmem:[#allocation18] sm:$0x1]
        %v2064 = vld [vmem:[#allocation19] sm:$0x1]
        %2065 = vadd.xlane.f32.xlu0 %v2061
        %v2066 = vpop.xlane.xlu0 %2065
        %2067 = vadd.xlane.f32.xlu0 %v2062
        %v2068 = vpop.xlane.xlu0 %2067
        %v2069 = vmul.f32 %v2066, %v1627
        %v2070 = vmul.f32 %v2068, %v1627
        %v2071 = vsub.f32 %v2061, %v2069
        %v2072 = vsub.f32 %v2062, %v2070
        %v2073 = vmul.f32 %v2071, %v2071
        %v2074 = vmul.f32 %v2072, %v2072
        %2075 = vadd.xlane.f32.xlu0 %v2073
        %v2076 = vpop.xlane.xlu0 %2075
        %2077 = vadd.xlane.f32.xlu0 %v2074
        %v2078 = vpop.xlane.xlu0 %2077
        %v2079 = vmul.f32 %v2076, %v1627
        %v2080 = vmul.f32 %v2078, %v1627
        %v2081 = vadd.f32 %v2079, 1e-05
        %v2082 = vadd.f32 %v2080, 1e-05
        %v2083 = vrsqrt.pop %v2081
        %v2084 = vrsqrt.pop %v2082
        %v2085 = vmul.f32 %v2071, %v2083
        %v2086 = vmul.f32 %v2072, %v2084
        %v2088 = vlaneseq
        %v2089 = vshrl.u32 %v2088, 7
        %v2090 = vsub.s32 0, %v2089
        %v2091 = vrot.slane %v2063, %v2090
        %v2093 = vmul.f32 %v2085, %v2091
        %v2094 = vmul.f32 %v2086, %v2091
        %v2096 = vlaneseq
        %v2097 = vshrl.u32 %v2096, 7
        %v2098 = vsub.s32 0, %v2097
        %v2099 = vrot.slane %v2064, %v2098
        %v2101 = vadd.f32 %v2093, %v2099
        %v2102 = vadd.f32 %v2094, %v2099
        %2103 = vst [vmem:[%s692] sm:$0xff] %v2101
        %2104 = vst [vmem:[%s692 + $0x8] sm:$0xff] %v2102
        %p2105 = scmp.lt.s32.totalorder %s34, 3
        %s2106 = scalar_select %p2105, %s34, 3
        %s2107 = smul.addr %s2106, 2
        %s2108 = smul.addr %s2107, 8
        %s2109 = scalar_lea.vmem %s16, %s2108
        // Predicated region
        $region133: #{encoder_layer_forward.1} parent=83 // pred_check
          %p2110 = pneg %p398
        $region134: #{encoder_layer_forward.1} parent=83 // pred_check_branch
          %2112 = sbr.rel (%p2110) target = $region136
        $region135: #{encoder_layer_forward.1} parent=83 // pred_region
          _
        $region136: #{encoder_layer_forward.1} parent=83 // pred_fallthru
          _
      $region84: #{encoder_layer_forward.1} parent=5 // pred_fallthru
        _
      %p2113 = scmp.le.s32.totalorder 2, %s29
      // Predicated region
      $region137: #{encoder_layer_forward.1} parent=5 // pred_check
        %p2114 = pneg %p2113
      $region138: #{encoder_layer_forward.1} parent=5 // pred_check_branch
        %2116 = sbr.rel (%p2114) target = $region140
      $region139: #{encoder_layer_forward.1} parent=5 // pred_region
        %s2117 = ssub.s32 %s29, 2
        // Predicated region
        $region141: #{encoder_layer_forward.1} parent=139 // pred_check
          %p2118 = pneg %p404
        $region142: #{encoder_layer_forward.1} parent=139 // pred_check_branch
          %2120 = sbr.rel (%p2118) target = $region144
        $region143: #{encoder_layer_forward.1} parent=139 // pred_region
          %p2121 = scmp.lt.s32.totalorder %s35, 3
          %s2122 = scalar_select %p2121, %s35, 3
          %s2123 = smul.addr %s2122, 2
          %s2124 = smul.addr %s2123, 8
          %s2125 = scalar_lea.vmem %s16, %s2124
        $region144: #{encoder_layer_forward.1} parent=139 // pred_fallthru
          _
      $region140: #{encoder_layer_forward.1} parent=5 // pred_fallthru
        _
    $region6: #{encoder_layer_forward.1} parent=1 // loop_footer
      %s33 = sadd.s32 1, %s29
    $region7: #{encoder_layer_forward.1} parent=1 // loop_footer_branch
      %28 = sbr.rel target = $region3
    $region8: #{encoder_layer_forward.1} parent=1 // loop_exit
      _
    %2126 = vsyncpa [#allocation3], 1
    %s2127 = scalar_lea.sflag [#allocation3], 1
    %2128 = vsyncpa %s2127, 1
    %2129 = vsyncpa [#allocation5], 1
    %2130 = vsyncpa [#allocation8], 1
    %2131 = vsyncpa [#allocation11], 1
    %2132 = vsyncpa [#allocation14], 1
    %2133 = vsyncpa [#allocation17], 1
    %2134 = vsyncpa [#allocation20], 1

// kernel: encoder_layer_forward.1
$region0: #{encoder_layer_forward.1}
  #allocation0 [shape = 'u32[]', space=smem, size = 0x4, offset = 0x4, fixed_abs, tag = 'smem constant byte address 0x4 - core index']
  #allocation1 [shape = 'u32[144,128]{1,0:T(1,128)}', space=vmem, size = 0x12000, scoped, tag = 'internal scratch']
  %s0 = inlined_call_operand.vmem [shape: f32[4,16,128], index: 0, kind: input, shape index: {}]
  %s1 = inlined_call_operand.vmem [shape: f32[4,1,16], index: 1, kind: input, shape index: {}]
  %s2 = inlined_call_operand.vmem [shape: bf16[128,384], index: 2, kind: input, shape index: {}]
  %s3 = inlined_call_operand.hbm [shape: f32[1,384], index: 3, kind: input, shape index: {}]
  %s4 = inlined_call_operand.hbm [shape: bf16[128,128], index: 4, kind: input, shape index: {}]
  %s5 = inlined_call_operand.vmem [shape: f32[1,128], index: 5, kind: input, shape index: {}]
  %s6 = inlined_call_operand.hbm [shape: bf16[128,256], index: 6, kind: input, shape index: {}]
  %s7 = inlined_call_operand.hbm [shape: f32[1,256], index: 7, kind: input, shape index: {}]
  %s8 = inlined_call_operand.hbm [shape: bf16[256,128], index: 8, kind: input, shape index: {}]
  %s9 = inlined_call_operand.hbm [shape: f32[1,128], index: 9, kind: input, shape index: {}]
  %s10 = inlined_call_operand.hbm [shape: f32[1,128], index: 10, kind: input, shape index: {}]
  %s11 = inlined_call_operand.hbm [shape: f32[1,128], index: 11, kind: input, shape index: {}]
  %s12 = inlined_call_operand.hbm [shape: f32[1,256], index: 12, kind: input, shape index: {}]
  %s13 = inlined_call_operand.hbm [shape: f32[1,256], index: 13, kind: input, shape index: {}]
  %s14 = inlined_call_operand.hbm [shape: f32[1,128], index: 14, kind: input, shape index: {}]
  %s15 = inlined_call_operand.hbm [shape: f32[1,128], index: 15, kind: input, shape index: {}]
  %s16 = inlined_call_operand.vmem [shape: f32[4,16,128], index: 16, kind: output, shape index: {}]
  %s17 = sld [smem:[#allocation0]]
  $region145: #{encoder_layer_forward.1} parent=0
    _
  %s19 = ssub.s32 1, %s17
  %s20 = scalar_select 0, %s19, %s17
  $region1: #{encoder_layer_forward.1} parent=0
    #allocation2 [shape = 'u8[1536]{0}', space=vmem, size = 0x800, scoped, tag = 'input window, operand 3, single buffered']
    #allocation3 [shape = 's32[2]{0}', space=sflag, size = 0x8, scoped, tag = 'scoped memory for encoder_layer_forward.1']
    #allocation4 [shape = 'u8[32768]{0}', space=vmem, size = 0x8000, scoped, tag = 'input window, operand 4, single buffered']
    #allocation5 [shape = 's32[1]{0}', space=sflag, size = 0x4, scoped, tag = 'scoped memory for encoder_layer_forward.1']
    #allocation6 [shape = 'u8[65536]{0}', space=vmem, size = 0x10000, scoped, tag = 'input window, operand 6, single buffered']
    #allocation7 [shape = 'u8[1024]{0}', space=vmem, size = 0x400, scoped, tag = 'input window, operand 7, single buffered']
    #allocation8 [shape = 's32[1]{0}', space=sflag, size = 0x4, scoped, tag = 'scoped memory for encoder_layer_forward.1']
    #allocation9 [shape = 'u8[65536]{0}', space=vmem, size = 0x10000, scoped, tag = 'input window, operand 8, single buffered']
    #allocation10 [shape = 'u8[512]{0}', space=vmem, size = 0x400, scoped, tag = 'input window, operand 9, single buffered']
    #allocation11 [shape = 's32[1]{0}', space=sflag, size = 0x4, scoped, tag = 'scoped memory for encoder_layer_forward.1']
    #allocation12 [shape = 'u8[512]{0}', space=vmem, size = 0x400, scoped, tag = 'input window, operand 10, single buffered']
    #allocation13 [shape = 'u8[512]{0}', space=vmem, size = 0x400, scoped, tag = 'input window, operand 11, single buffered']
    #allocation14 [shape = 's32[1]{0}', space=sflag, size = 0x4, scoped, tag = 'scoped memory for encoder_layer_forward.1']
    #allocation15 [shape = 'u8[1024]{0}', space=vmem, size = 0x400, scoped, tag = 'input window, operand 12, single buffered']
    #allocation16 [shape = 'u8[1024]{0}', space=vmem, size = 0x400, scoped, tag = 'input window, operand 13, single buffered']
    #allocation17 [shape = 's32[1]{0}', space=sflag, size = 0x4, scoped, tag = 'scoped memory for encoder_layer_forward.1']
    #allocation18 [shape = 'u8[512]{0}', space=vmem, size = 0x400, scoped, tag = 'input window, operand 14, single buffered']
    #allocation19 [shape = 'u8[512]{0}', space=vmem, size = 0x400, scoped, tag = 'input window, operand 15, single buffered']
    #allocation20 [shape = 's32[1]{0}', space=sflag, size = 0x4, scoped, tag = 'scoped memory for encoder_layer_forward.1']
    %21 = vsyncpa [#allocation3], 0
    %22 = vsyncpa [#allocation5], 0
    %23 = vsyncpa [#allocation8], 0
    %24 = vsyncpa [#allocation11], 0
    %25 = vsyncpa [#allocation14], 0
    %26 = vsyncpa [#allocation17], 0
    %27 = vsyncpa [#allocation20], 0
    loop: start=0, step=1, limit=6
    $region2: #{encoder_layer_forward.1} parent=1 // loop_pre_header
      _
    $region3: #{encoder_layer_forward.1} parent=1 // loop_header
      %s29 = sphi 0, %s33
      %p30 = scmp.ge.s32.totalorder %s29, 6
      %s39 = sphi 0, %s41
      %s42 = sphi 0, %s39
      %s43 = sphi 0, %s42
      %s59 = sphi 0, %s43
      %s65 = sphi 0, %s67
      %s68 = sphi 0, %s65
      %s69 = sphi 0, %s68
      %s85 = sphi 0, %s69
      %s89 = sphi 0, %s89
      %s91 = sphi 0, %s89
      %s92 = sphi 0, %s91
      %s106 = sphi 0, %s92
      %s110 = sphi 0, %s110
      %s112 = sphi 0, %s110
      %s113 = sphi 0, %s112
      %s127 = sphi 0, %s113
      %s131 = sphi 0, %s131
      %s133 = sphi 0, %s131
      %s134 = sphi 0, %s133
      %s148 = sphi 0, %s134
      %s152 = sphi 0, %s152
      %s154 = sphi 0, %s152
      %s155 = sphi 0, %s154
      %s169 = sphi 0, %s155
      %s173 = sphi 0, %s173
      %s175 = sphi 0, %s173
      %s176 = sphi 0, %s175
      %s190 = sphi 0, %s176
      %s194 = sphi 0, %s194
      %s196 = sphi 0, %s194
      %s197 = sphi 0, %s196
      %s211 = sphi 0, %s197
      %s215 = sphi 0, %s215
      %s217 = sphi 0, %s215
      %s218 = sphi 0, %s217
      %s232 = sphi 0, %s218
      %s236 = sphi 0, %s236
      %s238 = sphi 0, %s236
      %s239 = sphi 0, %s238
      %s253 = sphi 0, %s239
      %s257 = sphi 0, %s257
      %s259 = sphi 0, %s257
      %s260 = sphi 0, %s259
      %s274 = sphi 0, %s260
      %s278 = sphi 0, %s278
      %s280 = sphi 0, %s278
      %s281 = sphi 0, %s280
      %s295 = sphi 0, %s281
      %s299 = sphi 0, %s299
      %s301 = sphi 0, %s299
      %s302 = sphi 0, %s301
      %s316 = sphi 0, %s302
      %s320 = sphi 0, %s320
      %s322 = sphi 0, %s320
      %s323 = sphi 0, %s322
      %s337 = sphi 0, %s323
      %s341 = sphi 0, %s341
      %s343 = sphi 0, %s341
      %s344 = sphi 0, %s343
      %s358 = sphi 0, %s344
      %s362 = sphi 0, %s362
      %s364 = sphi 0, %s362
      %s365 = sphi 0, %s364
      %s379 = sphi 0, %s365
      %s385 = sphi 0, %s387
      %s388 = sphi 0, %s385
      %s389 = sphi 0, %s388
      %s405 = sphi 0, %s389
    $region4: #{encoder_layer_forward.1} parent=1 // loop_header_branch
      %32 = sbr.rel (%p30) target = $region8
    $region5: #{encoder_layer_forward.1} parent=1 // loop_body
      %s34 = ssub.s32 %s29, 1
      %s35 = ssub.s32 %s29, 2
      %s36 = sadd.s32 %s29, 1
      %s37 = ssub.s32 %s29, %s36
      %p38 = scmp.eq.s32.totalorder %s37, 0
      %s40 = sadd.s32 %s39, 1
      %s41 = scalar_select %p38, %s39, %s40
      %p44 = pneg %p38
      %p45 = scmp.eq.s32.totalorder %s29, 3
      %p46 = por %p44, %p45
      %p47 = scmp.ne.s32.totalorder %s39, %s42
      %p48 = scmp.eq.s32.totalorder %s29, 0
      %p49 = por %p47, %p48
      %p50 = scmp.ne.s32.totalorder %s39, %s42
      %p51 = scmp.eq.s32.totalorder %s34, 3
      %p52 = por %p50, %p51
      %p53 = scmp.ne.s32.totalorder %s42, %s43
      %p54 = scmp.eq.s32.totalorder %s34, 0
      %p55 = por %p53, %p54
      %p56 = scmp.ne.s32.totalorder %s42, %s43
      %p57 = scmp.eq.s32.totalorder %s35, 3
      %p58 = por %p56, %p57
      %p60 = scmp.ne.s32.totalorder %s43, %s59
      %p61 = scmp.eq.s32.totalorder %s35, 0
      %p62 = por %p60, %p61
      %s63 = ssub.s32 %s29, %s36
      %p64 = scmp.eq.s32.totalorder %s63, 0
      %s66 = sadd.s32 %s65, 1
      %s67 = scalar_select %p64, %s65, %s66
      %p70 = pneg %p64
      %p71 = scmp.eq.s32.totalorder %s29, 3
      %p72 = por %p70, %p71
      %p73 = scmp.ne.s32.totalorder %s65, %s68
      %p74 = scmp.eq.s32.totalorder %s29, 0
      %p75 = por %p73, %p74
      %p76 = scmp.ne.s32.totalorder %s65, %s68
      %p77 = scmp.eq.s32.totalorder %s34, 3
      %p78 = por %p76, %p77
      %p79 = scmp.ne.s32.totalorder %s68, %s69
      %p80 = scmp.eq.s32.totalorder %s34, 0
      %p81 = por %p79, %p80
      %p82 = scmp.ne.s32.totalorder %s68, %s69
      %p83 = scmp.eq.s32.totalorder %s35, 3
      %p84 = por %p82, %p83
      %p86 = scmp.ne.s32.totalorder %s69, %s85
      %p87 = scmp.eq.s32.totalorder %s35, 0
      %p88 = por %p86, %p87
      %s90 = sadd.s32 %s89, 1
      %p93 = scmp.eq.s32.totalorder %s29, 3
      %p94 = scmp.ne.s32.totalorder %s89, %s91
      %p95 = scmp.eq.s32.totalorder %s29, 0
      %p96 = por %p94, %p95
      %p97 = scmp.ne.s32.totalorder %s89, %s91
      %p98 = scmp.eq.s32.totalorder %s34, 3
      %p99 = por %p97, %p98
      %p100 = scmp.ne.s32.totalorder %s91, %s92
      %p101 = scmp.eq.s32.totalorder %s34, 0
      %p102 = por %p100, %p101
      %p103 = scmp.ne.s32.totalorder %s91, %s92
      %p104 = scmp.eq.s32.totalorder %s35, 3
      %p105 = por %p103, %p104
      %p107 = scmp.ne.s32.totalorder %s92, %s106
      %p108 = scmp.eq.s32.totalorder %s35, 0
      %p109 = por %p107, %p108
      %s111 = sadd.s32 %s110, 1
      %p114 = scmp.eq.s32.totalorder %s29, 3
      %p115 = scmp.ne.s32.totalorder %s110, %s112
      %p116 = scmp.eq.s32.totalorder %s29, 0
      %p117 = por %p115, %p116
      %p118 = scmp.ne.s32.totalorder %s110, %s112
      %p119 = scmp.eq.s32.totalorder %s34, 3
      %p120 = por %p118, %p119
      %p121 = scmp.ne.s32.totalorder %s112, %s113
      %p122 = scmp.eq.s32.totalorder %s34, 0
      %p123 = por %p121, %p122
      %p124 = scmp.ne.s32.totalorder %s112, %s113
      %p125 = scmp.eq.s32.totalorder %s35, 3
      %p126 = por %p124, %p125
      %p128 = scmp.ne.s32.totalorder %s113, %s127
      %p129 = scmp.eq.s32.totalorder %s35, 0
      %p130 = por %p128, %p129
      %s132 = sadd.s32 %s131, 1
      %p135 = scmp.eq.s32.totalorder %s29, 3
      %p136 = scmp.ne.s32.totalorder %s131, %s133
      %p137 = scmp.eq.s32.totalorder %s29, 0
      %p138 = por %p136, %p137
      %p139 = scmp.ne.s32.totalorder %s131, %s133
      %p140 = scmp.eq.s32.totalorder %s34, 3
      %p141 = por %p139, %p140
      %p142 = scmp.ne.s32.totalorder %s133, %s134
      %p143 = scmp.eq.s32.totalorder %s34, 0
      %p144 = por %p142, %p143
      %p145 = scmp.ne.s32.totalorder %s133, %s134
      %p146 = scmp.eq.s32.totalorder %s35, 3
      %p147 = por %p145, %p146
      %p149 = scmp.ne.s32.totalorder %s134, %s148
      %p150 = scmp.eq.s32.totalorder %s35, 0
      %p151 = por %p149, %p150
      %s153 = sadd.s32 %s152, 1
      %p156 = scmp.eq.s32.totalorder %s29, 3
      %p157 = scmp.ne.s32.totalorder %s152, %s154
      %p158 = scmp.eq.s32.totalorder %s29, 0
      %p159 = por %p157, %p158
      %p160 = scmp.ne.s32.totalorder %s152, %s154
      %p161 = scmp.eq.s32.totalorder %s34, 3
      %p162 = por %p160, %p161
      %p163 = scmp.ne.s32.totalorder %s154, %s155
      %p164 = scmp.eq.s32.totalorder %s34, 0
      %p165 = por %p163, %p164
      %p166 = scmp.ne.s32.totalorder %s154, %s155
      %p167 = scmp.eq.s32.totalorder %s35, 3
      %p168 = por %p166, %p167
      %p170 = scmp.ne.s32.totalorder %s155, %s169
      %p171 = scmp.eq.s32.totalorder %s35, 0
      %p172 = por %p170, %p171
      %s174 = sadd.s32 %s173, 1
      %p177 = scmp.eq.s32.totalorder %s29, 3
      %p178 = scmp.ne.s32.totalorder %s173, %s175
      %p179 = scmp.eq.s32.totalorder %s29, 0
      %p180 = por %p178, %p179
      %p181 = scmp.ne.s32.totalorder %s173, %s175
      %p182 = scmp.eq.s32.totalorder %s34, 3
      %p183 = por %p181, %p182
      %p184 = scmp.ne.s32.totalorder %s175, %s176
      %p185 = scmp.eq.s32.totalorder %s34, 0
      %p186 = por %p184, %p185
      %p187 = scmp.ne.s32.totalorder %s175, %s176
      %p188 = scmp.eq.s32.totalorder %s35, 3
      %p189 = por %p187, %p188
      %p191 = scmp.ne.s32.totalorder %s176, %s190
      %p192 = scmp.eq.s32.totalorder %s35, 0
      %p193 = por %p191, %p192
      %s195 = sadd.s32 %s194, 1
      %p198 = scmp.eq.s32.totalorder %s29, 3
      %p199 = scmp.ne.s32.totalorder %s194, %s196
      %p200 = scmp.eq.s32.totalorder %s29, 0
      %p201 = por %p199, %p200
      %p202 = scmp.ne.s32.totalorder %s194, %s196
      %p203 = scmp.eq.s32.totalorder %s34, 3
      %p204 = por %p202, %p203
      %p205 = scmp.ne.s32.totalorder %s196, %s197
      %p206 = scmp.eq.s32.totalorder %s34, 0
      %p207 = por %p205, %p206
      %p208 = scmp.ne.s32.totalorder %s196, %s197
      %p209 = scmp.eq.s32.totalorder %s35, 3
      %p210 = por %p208, %p209
      %p212 = scmp.ne.s32.totalorder %s197, %s211
      %p213 = scmp.eq.s32.totalorder %s35, 0
      %p214 = por %p212, %p213
      %s216 = sadd.s32 %s215, 1
      %p219 = scmp.eq.s32.totalorder %s29, 3
      %p220 = scmp.ne.s32.totalorder %s215, %s217
      %p221 = scmp.eq.s32.totalorder %s29, 0
      %p222 = por %p220, %p221
      %p223 = scmp.ne.s32.totalorder %s215, %s217
      %p224 = scmp.eq.s32.totalorder %s34, 3
      %p225 = por %p223, %p224
      %p226 = scmp.ne.s32.totalorder %s217, %s218
      %p227 = scmp.eq.s32.totalorder %s34, 0
      %p228 = por %p226, %p227
      %p229 = scmp.ne.s32.totalorder %s217, %s218
      %p230 = scmp.eq.s32.totalorder %s35, 3
      %p231 = por %p229, %p230
      %p233 = scmp.ne.s32.totalorder %s218, %s232
      %p234 = scmp.eq.s32.totalorder %s35, 0
      %p235 = por %p233, %p234
      %s237 = sadd.s32 %s236, 1
      %p240 = scmp.eq.s32.totalorder %s29, 3
      %p241 = scmp.ne.s32.totalorder %s236, %s238
      %p242 = scmp.eq.s32.totalorder %s29, 0
      %p243 = por %p241, %p242
      %p244 = scmp.ne.s32.totalorder %s236, %s238
      %p245 = scmp.eq.s32.totalorder %s34, 3
      %p246 = por %p244, %p245
      %p247 = scmp.ne.s32.totalorder %s238, %s239
      %p248 = scmp.eq.s32.totalorder %s34, 0
      %p249 = por %p247, %p248
      %p250 = scmp.ne.s32.totalorder %s238, %s239
      %p251 = scmp.eq.s32.totalorder %s35, 3
      %p252 = por %p250, %p251
      %p254 = scmp.ne.s32.totalorder %s239, %s253
      %p255 = scmp.eq.s32.totalorder %s35, 0
      %p256 = por %p254, %p255
      %s258 = sadd.s32 %s257, 1
      %p261 = scmp.eq.s32.totalorder %s29, 3
      %p262 = scmp.ne.s32.totalorder %s257, %s259
      %p263 = scmp.eq.s32.totalorder %s29, 0
      %p264 = por %p262, %p263
      %p265 = scmp.ne.s32.totalorder %s257, %s259
      %p266 = scmp.eq.s32.totalorder %s34, 3
      %p267 = por %p265, %p266
      %p268 = scmp.ne.s32.totalorder %s259, %s260
      %p269 = scmp.eq.s32.totalorder %s34, 0
      %p270 = por %p268, %p269
      %p271 = scmp.ne.s32.totalorder %s259, %s260
      %p272 = scmp.eq.s32.totalorder %s35, 3
      %p273 = por %p271, %p272
      %p275 = scmp.ne.s32.totalorder %s260, %s274
      %p276 = scmp.eq.s32.totalorder %s35, 0
      %p277 = por %p275, %p276
      %s279 = sadd.s32 %s278, 1
      %p282 = scmp.eq.s32.totalorder %s29, 3
      %p283 = scmp.ne.s32.totalorder %s278, %s280
      %p284 = scmp.eq.s32.totalorder %s29, 0
      %p285 = por %p283, %p284
      %p286 = scmp.ne.s32.totalorder %s278, %s280
      %p287 = scmp.eq.s32.totalorder %s34, 3
      %p288 = por %p286, %p287
      %p289 = scmp.ne.s32.totalorder %s280, %s281
      %p290 = scmp.eq.s32.totalorder %s34, 0
      %p291 = por %p289, %p290
      %p292 = scmp.ne.s32.totalorder %s280, %s281
      %p293 = scmp.eq.s32.totalorder %s35, 3
      %p294 = por %p292, %p293
      %p296 = scmp.ne.s32.totalorder %s281, %s295
      %p297 = scmp.eq.s32.totalorder %s35, 0
      %p298 = por %p296, %p297
      %s300 = sadd.s32 %s299, 1
      %p303 = scmp.eq.s32.totalorder %s29, 3
      %p304 = scmp.ne.s32.totalorder %s299, %s301
      %p305 = scmp.eq.s32.totalorder %s29, 0
      %p306 = por %p304, %p305
      %p307 = scmp.ne.s32.totalorder %s299, %s301
      %p308 = scmp.eq.s32.totalorder %s34, 3
      %p309 = por %p307, %p308
      %p310 = scmp.ne.s32.totalorder %s301, %s302
      %p311 = scmp.eq.s32.totalorder %s34, 0
      %p312 = por %p310, %p311
      %p313 = scmp.ne.s32.totalorder %s301, %s302
      %p314 = scmp.eq.s32.totalorder %s35, 3
      %p315 = por %p313, %p314
      %p317 = scmp.ne.s32.totalorder %s302, %s316
      %p318 = scmp.eq.s32.totalorder %s35, 0
      %p319 = por %p317, %p318
      %s321 = sadd.s32 %s320, 1
      %p324 = scmp.eq.s32.totalorder %s29, 3
      %p325 = scmp.ne.s32.totalorder %s320, %s322
      %p326 = scmp.eq.s32.totalorder %s29, 0
      %p327 = por %p325, %p326
      %p328 = scmp.ne.s32.totalorder %s320, %s322
      %p329 = scmp.eq.s32.totalorder %s34, 3
      %p330 = por %p328, %p329
      %p331 = scmp.ne.s32.totalorder %s322, %s323
      %p332 = scmp.eq.s32.totalorder %s34, 0
      %p333 = por %p331, %p332
      %p334 = scmp.ne.s32.totalorder %s322, %s323
      %p335 = scmp.eq.s32.totalorder %s35, 3
      %p336 = por %p334, %p335
      %p338 = scmp.ne.s32.totalorder %s323, %s337
      %p339 = scmp.eq.s32.totalorder %s35, 0
      %p340 = por %p338, %p339
      %s342 = sadd.s32 %s341, 1
      %p345 = scmp.eq.s32.totalorder %s29, 3
      %p346 = scmp.ne.s32.totalorder %s341, %s343
      %p347 = scmp.eq.s32.totalorder %s29, 0
      %p348 = por %p346, %p347
      %p349 = scmp.ne.s32.totalorder %s341, %s343
      %p350 = scmp.eq.s32.totalorder %s34, 3
      %p351 = por %p349, %p350
      %p352 = scmp.ne.s32.totalorder %s343, %s344
      %p353 = scmp.eq.s32.totalorder %s34, 0
      %p354 = por %p352, %p353
      %p355 = scmp.ne.s32.totalorder %s343, %s344
      %p356 = scmp.eq.s32.totalorder %s35, 3
      %p357 = por %p355, %p356
      %p359 = scmp.ne.s32.totalorder %s344, %s358
      %p360 = scmp.eq.s32.totalorder %s35, 0
      %p361 = por %p359, %p360
      %s363 = sadd.s32 %s362, 1
      %p366 = scmp.eq.s32.totalorder %s29, 3
      %p367 = scmp.ne.s32.totalorder %s362, %s364
      %p368 = scmp.eq.s32.totalorder %s29, 0
      %p369 = por %p367, %p368
      %p370 = scmp.ne.s32.totalorder %s362, %s364
      %p371 = scmp.eq.s32.totalorder %s34, 3
      %p372 = por %p370, %p371
      %p373 = scmp.ne.s32.totalorder %s364, %s365
      %p374 = scmp.eq.s32.totalorder %s34, 0
      %p375 = por %p373, %p374
      %p376 = scmp.ne.s32.totalorder %s364, %s365
      %p377 = scmp.eq.s32.totalorder %s35, 3
      %p378 = por %p376, %p377
      %p380 = scmp.ne.s32.totalorder %s365, %s379
      %p381 = scmp.eq.s32.totalorder %s35, 0
      %p382 = por %p380, %p381
      %s383 = ssub.s32 %s29, %s36
      %p384 = scmp.eq.s32.totalorder %s383, 0
      %s386 = sadd.s32 %s385, 1
      %s387 = scalar_select %p384, %s385, %s386
      %p390 = pneg %p384
      %p391 = scmp.eq.s32.totalorder %s29, 3
      %p392 = por %p390, %p391
      %p393 = scmp.ne.s32.totalorder %s385, %s388
      %p394 = scmp.eq.s32.totalorder %s29, 0
      %p395 = por %p393, %p394
      %p396 = scmp.ne.s32.totalorder %s385, %s388
      %p397 = scmp.eq.s32.totalorder %s34, 3
      %p398 = por %p396, %p397
      %p399 = scmp.ne.s32.totalorder %s388, %s389
      %p400 = scmp.eq.s32.totalorder %s34, 0
      %p401 = por %p399, %p400
      %p402 = scmp.ne.s32.totalorder %s388, %s389
      %p403 = scmp.eq.s32.totalorder %s35, 3
      %p404 = por %p402, %p403
      %p406 = scmp.ne.s32.totalorder %s389, %s405
      %p407 = scmp.eq.s32.totalorder %s35, 0
      %p408 = por %p406, %p407
      %p409 = scmp.le.s32.totalorder 1, %s29
      %p410 = scmp.lt.s32.totalorder %s29, 5
      %p411 = pnand %p409, %p410
      %p412 = pneg %p411
      // Predicated region
      $region9: #{encoder_layer_forward.1} parent=5 // pred_check
        _
      $region10: #{encoder_layer_forward.1} parent=5 // pred_check_branch
        %414 = sbr.rel (%p411) target = $region12
      $region11: #{encoder_layer_forward.1} parent=5 // pred_region
        %s415 = ssub.s32 %s29, 1
        // Predicated region
        $region13: #{encoder_layer_forward.1} parent=11 // pred_check
          %p416 = pneg %p102
        $region14: #{encoder_layer_forward.1} parent=11 // pred_check_branch
          %418 = sbr.rel (%p416) target = $region16
        $region15: #{encoder_layer_forward.1} parent=11 // pred_region
          _
        $region16: #{encoder_layer_forward.1} parent=11 // pred_fallthru
          _
        // Predicated region
        $region17: #{encoder_layer_forward.1} parent=11 // pred_check
          %p419 = pneg %p123
        $region18: #{encoder_layer_forward.1} parent=11 // pred_check_branch
          %421 = sbr.rel (%p419) target = $region20
        $region19: #{encoder_layer_forward.1} parent=11 // pred_region
          %s423 = ssub.s32 48, 48
          %424 = vsyncadd [#allocation3], %s423
          %s426 = sshll.u32 [#allocation2], 4
          %s427 = int_to_ptr.vmem [resolvable:$true] %s426
          %429 = dma.hbm_to_vmem [thread:$0]  %s3, 48, %s427, [#allocation3]
        $region20: #{encoder_layer_forward.1} parent=11 // pred_fallthru
          _
        // Predicated region
        $region21: #{encoder_layer_forward.1} parent=11 // pred_check
          %p430 = pneg %p144
        $region22: #{encoder_layer_forward.1} parent=11 // pred_check_branch
          %432 = sbr.rel (%p430) target = $region24
        $region23: #{encoder_layer_forward.1} parent=11 // pred_region
          %s434 = ssub.s32 1024, 1024
          %435 = vsyncadd [#allocation5], %s434
          %s436 = sshll.u32 [#allocation4], 4
          %s437 = int_to_ptr.vmem [resolvable:$true] %s436
          %442 = dma.hbm_to_vmem [thread:$0]  %s4, 1024, %s437, [#allocation5], 64, 64, 4
        $region24: #{encoder_layer_forward.1} parent=11 // pred_fallthru
          _
        // Predicated region
        $region25: #{encoder_layer_forward.1} parent=11 // pred_check
          %p443 = pneg %p165
        $region26: #{encoder_layer_forward.1} parent=11 // pred_check_branch
          %445 = sbr.rel (%p443) target = $region28
        $region27: #{encoder_layer_forward.1} parent=11 // pred_region
          _
        $region28: #{encoder_layer_forward.1} parent=11 // pred_fallthru
          _
        // Predicated region
        $region29: #{encoder_layer_forward.1} parent=11 // pred_check
          %p446 = pneg %p186
        $region30: #{encoder_layer_forward.1} parent=11 // pred_check_branch
          %448 = sbr.rel (%p446) target = $region32
        $region31: #{encoder_layer_forward.1} parent=11 // pred_region
          %s450 = ssub.s32 2048, 2048
          %451 = vsyncadd [#allocation5], %s450
          %s452 = sshll.u32 [#allocation6], 4
          %s453 = int_to_ptr.vmem [resolvable:$true] %s452
          %458 = dma.hbm_to_vmem [thread:$0]  %s6, 2048, %s453, [#allocation5], 128, 128, 8
        $region32: #{encoder_layer_forward.1} parent=11 // pred_fallthru
          _
        // Predicated region
        $region33: #{encoder_layer_forward.1} parent=11 // pred_check
          %p459 = pneg %p207
        $region34: #{encoder_layer_forward.1} parent=11 // pred_check_branch
          %461 = sbr.rel (%p459) target = $region36
        $region35: #{encoder_layer_forward.1} parent=11 // pred_region
          %s463 = ssub.s32 32, 32
          %464 = vsyncadd [#allocation8], %s463
          %s466 = sshll.u32 [#allocation7], 4
          %s467 = int_to_ptr.vmem [resolvable:$true] %s466
          %469 = dma.hbm_to_vmem [thread:$0]  %s7, 32, %s467, [#allocation8]
        $region36: #{encoder_layer_forward.1} parent=11 // pred_fallthru
          _
        // Predicated region
        $region37: #{encoder_layer_forward.1} parent=11 // pred_check
          %p470 = pneg %p228
        $region38: #{encoder_layer_forward.1} parent=11 // pred_check_branch
          %472 = sbr.rel (%p470) target = $region40
        $region39: #{encoder_layer_forward.1} parent=11 // pred_region
          %s474 = ssub.s32 2048, 2048
          %475 = vsyncadd [#allocation8], %s474
          %s476 = sshll.u32 [#allocation9], 4
          %s477 = int_to_ptr.vmem [resolvable:$true] %s476
          %482 = dma.hbm_to_vmem [thread:$0]  %s8, 2048, %s477, [#allocation8], 64, 64, 4
        $region40: #{encoder_layer_forward.1} parent=11 // pred_fallthru
          _
        // Predicated region
        $region41: #{encoder_layer_forward.1} parent=11 // pred_check
          %p483 = pneg %p249
        $region42: #{encoder_layer_forward.1} parent=11 // pred_check_branch
          %485 = sbr.rel (%p483) target = $region44
        $region43: #{encoder_layer_forward.1} parent=11 // pred_region
          %s487 = ssub.s32 16, 16
          %488 = vsyncadd [#allocation11], %s487
          %s490 = sshll.u32 [#allocation10], 4
          %s491 = int_to_ptr.vmem [resolvable:$true] %s490
          %493 = dma.hbm_to_vmem [thread:$0]  %s9, 16, %s491, [#allocation11]
        $region44: #{encoder_layer_forward.1} parent=11 // pred_fallthru
          _
        // Predicated region
        $region45: #{encoder_layer_forward.1} parent=11 // pred_check
          %p494 = pneg %p270
        $region46: #{encoder_layer_forward.1} parent=11 // pred_check_branch
          %496 = sbr.rel (%p494) target = $region48
        $region47: #{encoder_layer_forward.1} parent=11 // pred_region
          %s498 = ssub.s32 16, 16
          %499 = vsyncadd [#allocation11], %s498
          %s501 = sshll.u32 [#allocation12], 4
          %s502 = int_to_ptr.vmem [resolvable:$true] %s501
          %504 = dma.hbm_to_vmem [thread:$0]  %s10, 16, %s502, [#allocation11]
        $region48: #{encoder_layer_forward.1} parent=11 // pred_fallthru
          _
        // Predicated region
        $region49: #{encoder_layer_forward.1} parent=11 // pred_check
          %p505 = pneg %p291
        $region50: #{encoder_layer_forward.1} parent=11 // pred_check_branch
          %507 = sbr.rel (%p505) target = $region52
        $region51: #{encoder_layer_forward.1} parent=11 // pred_region
          %s509 = ssub.s32 16, 16
          %510 = vsyncadd [#allocation14], %s509
          %s512 = sshll.u32 [#allocation13], 4
          %s513 = int_to_ptr.vmem [resolvable:$true] %s512
          %515 = dma.hbm_to_vmem [thread:$0]  %s11, 16, %s513, [#allocation14]
        $region52: #{encoder_layer_forward.1} parent=11 // pred_fallthru
          _
        // Predicated region
        $region53: #{encoder_layer_forward.1} parent=11 // pred_check
          %p516 = pneg %p312
        $region54: #{encoder_layer_forward.1} parent=11 // pred_check_branch
          %518 = sbr.rel (%p516) target = $region56
        $region55: #{encoder_layer_forward.1} parent=11 // pred_region
          %s520 = ssub.s32 32, 32
          %521 = vsyncadd [#allocation14], %s520
          %s523 = sshll.u32 [#allocation15], 4
          %s524 = int_to_ptr.vmem [resolvable:$true] %s523
          %526 = dma.hbm_to_vmem [thread:$0]  %s12, 32, %s524, [#allocation14]
        $region56: #{encoder_layer_forward.1} parent=11 // pred_fallthru
          _
        // Predicated region
        $region57: #{encoder_layer_forward.1} parent=11 // pred_check
          %p527 = pneg %p333
        $region58: #{encoder_layer_forward.1} parent=11 // pred_check_branch
          %529 = sbr.rel (%p527) target = $region60
        $region59: #{encoder_layer_forward.1} parent=11 // pred_region
          %s531 = ssub.s32 32, 32
          %532 = vsyncadd [#allocation17], %s531
          %s534 = sshll.u32 [#allocation16], 4
          %s535 = int_to_ptr.vmem [resolvable:$true] %s534
          %537 = dma.hbm_to_vmem [thread:$0]  %s13, 32, %s535, [#allocation17]
        $region60: #{encoder_layer_forward.1} parent=11 // pred_fallthru
          _
        // Predicated region
        $region61: #{encoder_layer_forward.1} parent=11 // pred_check
          %p538 = pneg %p354
        $region62: #{encoder_layer_forward.1} parent=11 // pred_check_branch
          %540 = sbr.rel (%p538) target = $region64
        $region63: #{encoder_layer_forward.1} parent=11 // pred_region
          %s542 = ssub.s32 16, 16
          %543 = vsyncadd [#allocation17], %s542
          %s545 = sshll.u32 [#allocation18], 4
          %s546 = int_to_ptr.vmem [resolvable:$true] %s545
          %548 = dma.hbm_to_vmem [thread:$0]  %s14, 16, %s546, [#allocation17]
        $region64: #{encoder_layer_forward.1} parent=11 // pred_fallthru
          _
        // Predicated region
        $region65: #{encoder_layer_forward.1} parent=11 // pred_check
          %p549 = pneg %p375
        $region66: #{encoder_layer_forward.1} parent=11 // pred_check_branch
          %551 = sbr.rel (%p549) target = $region68
        $region67: #{encoder_layer_forward.1} parent=11 // pred_region
          %s553 = ssub.s32 16, 16
          %554 = vsyncadd [#allocation20], %s553
          %s556 = sshll.u32 [#allocation19], 4
          %s557 = int_to_ptr.vmem [resolvable:$true] %s556
          %559 = dma.hbm_to_vmem [thread:$0]  %s15, 16, %s557, [#allocation20]
        $region68: #{encoder_layer_forward.1} parent=11 // pred_fallthru
          _
      $region12: #{encoder_layer_forward.1} parent=5 // pred_fallthru
        _
      %p560 = scmp.lt.s32.totalorder %s29, 4
      // Predicated region
      $region69: #{encoder_layer_forward.1} parent=5 // pred_check
        %p561 = pneg %p560
      $region70: #{encoder_layer_forward.1} parent=5 // pred_check_branch
        %563 = sbr.rel (%p561) target = $region72
      $region71: #{encoder_layer_forward.1} parent=5 // pred_region
        // Predicated region
        $region73: #{encoder_layer_forward.1} parent=71 // pred_check
          %p564 = pneg %p49
        $region74: #{encoder_layer_forward.1} parent=71 // pred_check_branch
          %566 = sbr.rel (%p564) target = $region76
        $region75: #{encoder_layer_forward.1} parent=71 // pred_region
          %p567 = scmp.lt.s32.totalorder %s29, 3
          %s568 = scalar_select %p567, %s29, 3
          %s569 = smul.addr %s568, 2
          %s570 = smul.addr %s569, 8
          %s571 = scalar_lea.vmem %s0, %s570
        $region76: #{encoder_layer_forward.1} parent=71 // pred_fallthru
          _
        // Predicated region
        $region77: #{encoder_layer_forward.1} parent=71 // pred_check
          %p572 = pneg %p75
        $region78: #{encoder_layer_forward.1} parent=71 // pred_check_branch
          %574 = sbr.rel (%p572) target = $region80
        $region79: #{encoder_layer_forward.1} parent=71 // pred_region
          %p575 = scmp.lt.s32.totalorder %s29, 3
          %s576 = scalar_select %p575, %s29, 3
          %s577 = scalar_lea.vmem %s1, %s576
        $region80: #{encoder_layer_forward.1} parent=71 // pred_fallthru
          _
      $region72: #{encoder_layer_forward.1} parent=5 // pred_fallthru
        _
      %p578 = scmp.le.s32.totalorder 1, %s29
      %p579 = scmp.lt.s32.totalorder %s29, 5
      %p580 = pnand %p578, %p579
      %p581 = pneg %p580
      // Predicated region
      $region81: #{encoder_layer_forward.1} parent=5 // pred_check
        _
      $region82: #{encoder_layer_forward.1} parent=5 // pred_check_branch
        %583 = sbr.rel (%p580) target = $region84
      $region83: #{encoder_layer_forward.1} parent=5 // pred_region
        %s584 = ssub.s32 %s29, 1
        // Predicated region
        $region85: #{encoder_layer_forward.1} parent=83 // pred_check
          %p585 = pneg %p123
        $region86: #{encoder_layer_forward.1} parent=83 // pred_check_branch
          %587 = sbr.rel (%p585) target = $region88
        $region87: #{encoder_layer_forward.1} parent=83 // pred_region
          %588 = dma.done [#allocation3], 48
        $region88: #{encoder_layer_forward.1} parent=83 // pred_fallthru
          _
        // Predicated region
        $region89: #{encoder_layer_forward.1} parent=83 // pred_check
          %p589 = pneg %p144
        $region90: #{encoder_layer_forward.1} parent=83 // pred_check_branch
          %591 = sbr.rel (%p589) target = $region92
        $region91: #{encoder_layer_forward.1} parent=83 // pred_region
          %592 = dma.done [#allocation5], 1024
        $region92: #{encoder_layer_forward.1} parent=83 // pred_fallthru
          _
        // Predicated region
        $region93: #{encoder_layer_forward.1} parent=83 // pred_check
          %p593 = pneg %p186
        $region94: #{encoder_layer_forward.1} parent=83 // pred_check_branch
          %595 = sbr.rel (%p593) target = $region96
        $region95: #{encoder_layer_forward.1} parent=83 // pred_region
          %596 = dma.done [#allocation5], 2048
        $region96: #{encoder_layer_forward.1} parent=83 // pred_fallthru
          _
        // Predicated region
        $region97: #{encoder_layer_forward.1} parent=83 // pred_check
          %p597 = pneg %p207
        $region98: #{encoder_layer_forward.1} parent=83 // pred_check_branch
          %599 = sbr.rel (%p597) target = $region100
        $region99: #{encoder_layer_forward.1} parent=83 // pred_region
          %600 = dma.done [#allocation8], 32
        $region100: #{encoder_layer_forward.1} parent=83 // pred_fallthru
          _
        // Predicated region
        $region101: #{encoder_layer_forward.1} parent=83 // pred_check
          %p601 = pneg %p228
        $region102: #{encoder_layer_forward.1} parent=83 // pred_check_branch
          %603 = sbr.rel (%p601) target = $region104
        $region103: #{encoder_layer_forward.1} parent=83 // pred_region
          %604 = dma.done [#allocation8], 2048
        $region104: #{encoder_layer_forward.1} parent=83 // pred_fallthru
          _
        // Predicated region
        $region105: #{encoder_layer_forward.1} parent=83 // pred_check
          %p605 = pneg %p249
        $region106: #{encoder_layer_forward.1} parent=83 // pred_check_branch
          %607 = sbr.rel (%p605) target = $region108
        $region107: #{encoder_layer_forward.1} parent=83 // pred_region
          %608 = dma.done [#allocation11], 16
        $region108: #{encoder_layer_forward.1} parent=83 // pred_fallthru
          _
        // Predicated region
        $region109: #{encoder_layer_forward.1} parent=83 // pred_check
          %p609 = pneg %p270
        $region110: #{encoder_layer_forward.1} parent=83 // pred_check_branch
          %611 = sbr.rel (%p609) target = $region112
        $region111: #{encoder_layer_forward.1} parent=83 // pred_region
          %612 = dma.done [#allocation11], 16
        $region112: #{encoder_layer_forward.1} parent=83 // pred_fallthru
          _
        // Predicated region
        $region113: #{encoder_layer_forward.1} parent=83 // pred_check
          %p613 = pneg %p291
        $region114: #{encoder_layer_forward.1} parent=83 // pred_check_branch
          %615 = sbr.rel (%p613) target = $region116
        $region115: #{encoder_layer_forward.1} parent=83 // pred_region
          %616 = dma.done [#allocation14], 16
        $region116: #{encoder_layer_forward.1} parent=83 // pred_fallthru
          _
        // Predicated region
        $region117: #{encoder_layer_forward.1} parent=83 // pred_check
          %p617 = pneg %p312
        $region118: #{encoder_layer_forward.1} parent=83 // pred_check_branch
          %619 = sbr.rel (%p617) target = $region120
        $region119: #{encoder_layer_forward.1} parent=83 // pred_region
          %620 = dma.done [#allocation14], 32
        $region120: #{encoder_layer_forward.1} parent=83 // pred_fallthru
          _
        // Predicated region
        $region121: #{encoder_layer_forward.1} parent=83 // pred_check
          %p621 = pneg %p333
        $region122: #{encoder_layer_forward.1} parent=83 // pred_check_branch
          %623 = sbr.rel (%p621) target = $region124
        $region123: #{encoder_layer_forward.1} parent=83 // pred_region
          %624 = dma.done [#allocation17], 32
        $region124: #{encoder_layer_forward.1} parent=83 // pred_fallthru
          _
        // Predicated region
        $region125: #{encoder_layer_forward.1} parent=83 // pred_check
          %p625 = pneg %p354
        $region126: #{encoder_layer_forward.1} parent=83 // pred_check_branch
          %627 = sbr.rel (%p625) target = $region128
        $region127: #{encoder_layer_forward.1} parent=83 // pred_region
          %628 = dma.done [#allocation17], 16
        $region128: #{encoder_layer_forward.1} parent=83 // pred_fallthru
          _
        // Predicated region
        $region129: #{encoder_layer_forward.1} parent=83 // pred_check
          %p629 = pneg %p375
        $region130: #{encoder_layer_forward.1} parent=83 // pred_check_branch
          %631 = sbr.rel (%p629) target = $region132
        $region131: #{encoder_layer_forward.1} parent=83 // pred_region
          %632 = dma.done [#allocation20], 16
        $region132: #{encoder_layer_forward.1} parent=83 // pred_fallthru
          _
        %p633 = scmp.lt.s32.totalorder %s34, 3
        %s634 = scalar_select %p633, %s34, 3
        %s635 = smul.addr %s634, 2
        %s636 = smul.addr %s635, 8
        %s637 = scalar_lea.vmem %s0, %s636
        %p638 = pneg %p55
        %p639 = pneg %p52
        %p640 = scmp.lt.s32.totalorder %s34, 3
        %s641 = scalar_select %p640, %s34, 3
        %s642 = scalar_lea.vmem %s1, %s641
        %p643 = pneg %p81
        %p644 = pneg %p78
        %p645 = pneg %p102
        %p646 = pneg %p99
        %p647 = pneg %p123
        %p648 = pneg %p120
        %p649 = pneg %p144
        %p650 = pneg %p141
        %p651 = pneg %p165
        %p652 = pneg %p162
        %p653 = pneg %p186
        %p654 = pneg %p183
        %p655 = pneg %p207
        %p656 = pneg %p204
        %p657 = pneg %p228
        %p658 = pneg %p225
        %p659 = pneg %p249
        %p660 = pneg %p246
        %p661 = pneg %p270
        %p662 = pneg %p267
        %p663 = pneg %p291
        %p664 = pneg %p288
        %p665 = pneg %p312
        %p666 = pneg %p309
        %p667 = pneg %p333
        %p668 = pneg %p330
        %p669 = pneg %p354
        %p670 = pneg %p351
        %p671 = pneg %p375
        %p672 = pneg %p372
        %p673 = pneg %p401
        %p674 = pneg %p398
        %p675 = scmp.lt.s32.totalorder %s34, 3
        %s676 = scalar_select %p675, %s34, 3
        %s677 = smul.addr %s676, 2
        %s678 = smul.addr %s677, 8
        %s679 = scalar_lea.vmem %s16, %s678
        %p680 = scmp.lt.s32.totalorder %s34, 3
        %s681 = scalar_select %p680, %s34, 3
        %s682 = smul.addr %s681, 2
        %s683 = smul.addr %s682, 8
        %s684 = scalar_lea.vmem %s0, %s683
        %p685 = scmp.lt.s32.totalorder %s34, 3
        %s686 = scalar_select %p685, %s34, 3
        %s687 = scalar_lea.vmem %s1, %s686
        %p688 = scmp.lt.s32.totalorder %s34, 3
        %s689 = scalar_select %p688, %s34, 3
        %s690 = smul.addr %s689, 2
        %s691 = smul.addr %s690, 8
        %s692 = scalar_lea.vmem %s16, %s691
        %v694 = vld [vmem:[%s684] sm:$0xff]
        %v695 = vld [vmem:[%s684 + $0x8] sm:$0xff]
        %v696 = vpack.c.bf16 %v695, %v694
        %v697 = vld [vmem:[%s2] sm:$0xff]
        %v698 = vld [vmem:[%s2 + $0x8] sm:$0xf]
        %v699 = vld [vmem:[%s2 + $0xc] sm:$0xff]
        %v700 = vld [vmem:[%s2 + $0x14] sm:$0xf]
        %v701 = vld [vmem:[%s2 + $0x18] sm:$0xff]
        %v702 = vld [vmem:[%s2 + $0x20] sm:$0xf]
        %v703 = vld [vmem:[%s2 + $0x24] sm:$0xff]
        %v704 = vld [vmem:[%s2 + $0x2c] sm:$0xf]
        %v705 = vld [vmem:[%s2 + $0x30] sm:$0xff]
        %v706 = vld [vmem:[%s2 + $0x38] sm:$0xf]
        %v707 = vld [vmem:[%s2 + $0x3c] sm:$0xff]
        %v708 = vld [vmem:[%s2 + $0x44] sm:$0xf]
        %v709 = vld [vmem:[%s2 + $0x48] sm:$0xff]
        %v710 = vld [vmem:[%s2 + $0x50] sm:$0xf]
        %v711 = vld [vmem:[%s2 + $0x54] sm:$0xff]
        %v712 = vld [vmem:[%s2 + $0x5c] sm:$0xf]
        %v713 = vld [vmem:[%s2 + $0x60] sm:$0xff]
        %v714 = vld [vmem:[%s2 + $0x68] sm:$0xf]
        %v715 = vld [vmem:[%s2 + $0x6c] sm:$0xff]
        %v716 = vld [vmem:[%s2 + $0x74] sm:$0xf]
        %v717 = vld [vmem:[%s2 + $0x78] sm:$0xff]
        %v718 = vld [vmem:[%s2 + $0x80] sm:$0xf]
        %v719 = vld [vmem:[%s2 + $0x84] sm:$0xff]
        %v720 = vld [vmem:[%s2 + $0x8c] sm:$0xf]
        %v721 = vld [vmem:[%s2 + $0x90] sm:$0xff]
        %v722 = vld [vmem:[%s2 + $0x98] sm:$0xf]
        %v723 = vld [vmem:[%s2 + $0x9c] sm:$0xff]
        %v724 = vld [vmem:[%s2 + $0xa4] sm:$0xf]
        %v725 = vld [vmem:[%s2 + $0xa8] sm:$0xff]
        %v726 = vld [vmem:[%s2 + $0xb0] sm:$0xf]
        %v727 = vld [vmem:[%s2 + $0xb4] sm:$0xff]
        %v728 = vld [vmem:[%s2 + $0xbc] sm:$0xf]
        %v729 = vld [vmem:[#allocation2] sm:$0x7]
        %v731 = vlaneseq
        %v732 = vshrl.u32 %v731, 7
        %v733 = vsub.s32 0, %v732
        %v734 = vrot.slane %v729, %v733
        %v735 = vlaneseq
        %v736 = vshrl.u32 %v735, 7
        %v737 = vsub.s32 1, %v736
        %v738 = vrot.slane %v729, %v737
        %v739 = vlaneseq
        %v740 = vshrl.u32 %v739, 7
        %v741 = vsub.s32 2, %v740
        %v742 = vrot.slane %v729, %v741
        %v778 = vunpack.c.l.b16 %v697
        %v779 = vunpack.c.h.b16 %v697
        %v780 = vunpack.c.l.b16 %v698
        %v781 = vunpack.c.l.b16 %v699
        %v782 = vunpack.c.h.b16 %v699
        %v783 = vunpack.c.l.b16 %v700
        %v784 = vunpack.c.l.b16 %v701
        %v785 = vunpack.c.h.b16 %v701
        %v786 = vunpack.c.l.b16 %v702
        %v787 = vunpack.c.l.b16 %v703
        %v788 = vunpack.c.h.b16 %v703
        %v789 = vunpack.c.l.b16 %v704
        %v790 = vunpack.c.l.b16 %v705
        %v791 = vunpack.c.h.b16 %v705
        %v792 = vunpack.c.l.b16 %v706
        %v793 = vunpack.c.l.b16 %v707
        %v794 = vunpack.c.h.b16 %v707
        %v795 = vunpack.c.l.b16 %v708
        %v796 = vunpack.c.l.b16 %v709
        %v797 = vunpack.c.h.b16 %v709
        %v798 = vunpack.c.l.b16 %v710
        %v799 = vunpack.c.l.b16 %v711
        %v800 = vunpack.c.h.b16 %v711
        %v801 = vunpack.c.l.b16 %v712
        %v802 = vunpack.c.l.b16 %v713
        %v803 = vunpack.c.h.b16 %v713
        %v804 = vunpack.c.l.b16 %v714
        %v805 = vunpack.c.l.b16 %v715
        %v806 = vunpack.c.h.b16 %v715
        %v807 = vunpack.c.l.b16 %v716
        %v808 = vunpack.c.l.b16 %v717
        %v809 = vunpack.c.h.b16 %v717
        %v810 = vunpack.c.l.b16 %v718
        %v811 = vunpack.c.l.b16 %v719
        %v812 = vunpack.c.h.b16 %v719
        %v813 = vunpack.c.l.b16 %v720
        %v814 = vunpack.c.l.b16 %v721
        %v815 = vunpack.c.h.b16 %v721
        %v816 = vunpack.c.l.b16 %v722
        %v817 = vunpack.c.l.b16 %v723
        %v818 = vunpack.c.h.b16 %v723
        %v819 = vunpack.c.l.b16 %v724
        %v820 = vunpack.c.l.b16 %v725
        %v821 = vunpack.c.h.b16 %v725
        %v822 = vunpack.c.l.b16 %v726
        %v823 = vunpack.c.l.b16 %v727
        %v824 = vunpack.c.h.b16 %v727
        %v825 = vunpack.c.l.b16 %v728
        %v826 = vpack.c.b16 %v781, %v778
        %v827 = vpack.c.b16 %v782, %v779
        %v828 = vpack.c.b16 %v783, %v780
        %v829 = vpack.c.b16 %v787, %v784
        %v830 = vpack.c.b16 %v788, %v785
        %v831 = vpack.c.b16 %v789, %v786
        %v832 = vpack.c.b16 %v793, %v790
        %v833 = vpack.c.b16 %v794, %v791
        %v834 = vpack.c.b16 %v795, %v792
        %v835 = vpack.c.b16 %v799, %v796
        %v836 = vpack.c.b16 %v800, %v797
        %v837 = vpack.c.b16 %v801, %v798
        %v838 = vpack.c.b16 %v805, %v802
        %v839 = vpack.c.b16 %v806, %v803
        %v840 = vpack.c.b16 %v807, %v804
        %v841 = vpack.c.b16 %v811, %v808
        %v842 = vpack.c.b16 %v812, %v809
        %v843 = vpack.c.b16 %v813, %v810
        %v844 = vpack.c.b16 %v817, %v814
        %v845 = vpack.c.b16 %v818, %v815
        %v846 = vpack.c.b16 %v819, %v816
        %v847 = vpack.c.b16 %v823, %v820
        %v848 = vpack.c.b16 %v824, %v821
        %v849 = vpack.c.b16 %v825, %v822
        %874 = vmatprep.subr.bf16.mxu0 %v827
        %875 = vmatpush1.bf16.msra.mxu0 %v826
        %876 = vmatprep.subr.bf16.mxu0 %v830
        %877 = vmatpush1.bf16.msra.mxu0 %v829
        %878 = vmatprep.subr.bf16.mxu0 %v833
        %879 = vmatpush1.bf16.msra.mxu0 %v832
        %880 = vmatprep.subr.bf16.mxu0 %v836
        %881 = vmatpush1.bf16.msra.mxu0 %v835
        %882 = vmatprep.subr.bf16.mxu0 %v839
        %883 = vmatpush1.bf16.msra.mxu0 %v838
        %884 = vmatprep.subr.bf16.mxu0 %v842
        %885 = vmatpush1.bf16.msra.mxu0 %v841
        %886 = vmatprep.subr.bf16.mxu0 %v845
        %887 = vmatpush1.bf16.msra.mxu0 %v844
        %888 = vmatprep.subr.bf16.mxu0 %v848
        %889 = vmatpush1.bf16.msra.mxu0 %v847
        %890 = vmatprep.subr.bf16.mxu0 0
        %891 = vmatpush1.bf16.msra.mxu0 0
        %892 = vmatprep.subr.bf16.mxu0 0
        %893 = vmatpush1.bf16.msra.mxu0 0
        %894 = vmatprep.subr.bf16.mxu0 0
        %895 = vmatpush1.bf16.msra.mxu0 0
        %896 = vmatprep.subr.bf16.mxu0 0
        %897 = vmatpush1.bf16.msra.mxu0 0
        %898 = vmatprep.subr.bf16.mxu0 0
        %899 = vmatpush1.bf16.msra.mxu0 0
        %900 = vmatprep.subr.bf16.mxu0 0
        %901 = vmatpush1.bf16.msra.mxu0 0
        %902 = vmatprep.subr.bf16.mxu0 0
        %903 = vmatpush1.bf16.msra.mxu0 0
        %904 = vmatprep.subr.bf16.mxu0 0
        %905 = vmatpush1.bf16.msra.mxu0 0
        %906 = vmatprep.mubr.bf16.mxu0 0
        %907 = vmatmul.mubr.bf16.gmra.mrb[0].mxu0 %v696
        %v908 = vpop.f32.mrb[0].mxu0
        %v909 = vadd.f32 %v734, %v908
        %v910 = vpop.f32.mrb[0].mxu0
        %v911 = vadd.f32 %v738, %v910
        %v912 = vpop.f32.mrb[0].mxu0
        %v913 = vadd.f32 %v734, %v912
        %v914 = vpop.f32.mrb[0].mxu0
        %v915 = vadd.f32 %v738, %v914
        %916 = vdwg.mxu0
        %917 = vmatprep.subr.bf16.mxu0 0
        %918 = vmatpush1.bf16.msra.mxu0 %v828
        %919 = vmatprep.subr.bf16.mxu0 0
        %920 = vmatpush1.bf16.msra.mxu0 %v831
        %921 = vmatprep.subr.bf16.mxu0 0
        %922 = vmatpush1.bf16.msra.mxu0 %v834
        %923 = vmatprep.subr.bf16.mxu0 0
        %924 = vmatpush1.bf16.msra.mxu0 %v837
        %925 = vmatprep.subr.bf16.mxu0 0
        %926 = vmatpush1.bf16.msra.mxu0 %v840
        %927 = vmatprep.subr.bf16.mxu0 0
        %928 = vmatpush1.bf16.msra.mxu0 %v843
        %929 = vmatprep.subr.bf16.mxu0 0
        %930 = vmatpush1.bf16.msra.mxu0 %v846
        %931 = vmatprep.subr.bf16.mxu0 0
        %932 = vmatpush1.bf16.msra.mxu0 %v849
        %933 = vmatprep.subr.bf16.mxu0 0
        %934 = vmatpush1.bf16.msra.mxu0 0
        %935 = vmatprep.subr.bf16.mxu0 0
        %936 = vmatpush1.bf16.msra.mxu0 0
        %937 = vmatprep.subr.bf16.mxu0 0
        %938 = vmatpush1.bf16.msra.mxu0 0
        %939 = vmatprep.subr.bf16.mxu0 0
        %940 = vmatpush1.bf16.msra.mxu0 0
        %941 = vmatprep.subr.bf16.mxu0 0
        %942 = vmatpush1.bf16.msra.mxu0 0
        %943 = vmatprep.subr.bf16.mxu0 0
        %944 = vmatpush1.bf16.msra.mxu0 0
        %945 = vmatprep.subr.bf16.mxu0 0
        %946 = vmatpush1.bf16.msra.mxu0 0
        %947 = vmatprep.subr.bf16.mxu0 0
        %948 = vmatpush1.bf16.msra.mxu0 0
        %949 = vmatprep.mubr.bf16.mxu0 0
        %950 = vmatmul.mubr.bf16.gmra.mrb[0].mxu0 %v696
        %v951 = vpop.f32.mrb[0].mxu0
        %v952 = vadd.f32 %v742, %v951
        %v953 = vpop.f32.mrb[0].mxu0
        %v954 = vpop.f32.mrb[0].mxu0
        %v955 = vadd.f32 %v742, %v954
        %v956 = vpop.f32.mrb[0].mxu0
        %957 = vdwg.mxu0
        %v958 = vpack.c.bf16 %v913, %v909
        %v959 = vpack.c.bf16 %v915, %v911
        %v960 = vpack.c.bf16 %v955, %v952
        %v961 = vld [vmem:[%s687] sm:$0x1]
        %v963 = vlaneseq
        %v964 = vshrl.u32 %v963, 7
        %v965 = vsub.s32 0, %v964
        %v966 = vrot.slane %v961, %v965
        %vm968 = vcmask 261120
        %v970 = vsel %vm968, %v958, 0
        %v973 = vsel %vm968, %v959, 0
        %975 = vmatprep.subr.bf16.mxu0 0
        %976 = vmatpush1.bf16.xpose.msra.mxu0 %v973
        %977 = vmatprep.subr.bf16.mxu0 0
        %978 = vmatpush1.bf16.xpose.msra.mxu0 0
        %979 = vmatprep.subr.bf16.mxu0 0
        %980 = vmatpush1.bf16.xpose.msra.mxu0 0
        %981 = vmatprep.subr.bf16.mxu0 0
        %982 = vmatpush1.bf16.xpose.msra.mxu0 0
        %983 = vmatprep.subr.bf16.mxu0 0
        %984 = vmatpush1.bf16.xpose.msra.mxu0 0
        %985 = vmatprep.subr.bf16.mxu0 0
        %986 = vmatpush1.bf16.xpose.msra.mxu0 0
        %987 = vmatprep.subr.bf16.mxu0 0
        %988 = vmatpush1.bf16.xpose.msra.mxu0 0
        %989 = vmatprep.subr.bf16.mxu0 0
        %990 = vmatpush1.bf16.xpose.msra.mxu0 0
        %991 = vmatprep.subr.bf16.mxu0 0
        %992 = vmatpush1.bf16.xpose.msra.mxu0 0
        %993 = vmatprep.subr.bf16.mxu0 0
        %994 = vmatpush1.bf16.xpose.msra.mxu0 0
        %995 = vmatprep.subr.bf16.mxu0 0
        %996 = vmatpush1.bf16.xpose.msra.mxu0 0
        %997 = vmatprep.subr.bf16.mxu0 0
        %998 = vmatpush1.bf16.xpose.msra.mxu0 0
        %999 = vmatprep.subr.bf16.mxu0 0
        %1000 = vmatpush1.bf16.xpose.msra.mxu0 0
        %1001 = vmatprep.subr.bf16.mxu0 0
        %1002 = vmatpush1.bf16.xpose.msra.mxu0 0
        %1003 = vmatprep.subr.bf16.mxu0 0
        %1004 = vmatpush1.bf16.xpose.msra.mxu0 0
        %1005 = vmatprep.subr.bf16.mxu0 0
        %1006 = vmatpush1.bf16.xpose.msra.mxu0 0
        %1007 = vmatprep.mubr.bf16.mxu0 0
        %1008 = vmatmul.mubr.bf16.gmra.mrb[0].mxu0 %v970
        %v1009 = vpop.f32.mrb[0].mxu0
        %v1010 = vadd.f32 %v966, %v1009
        %v1011 = vpop.f32.mrb[0].mxu0
        %v1012 = vpop.f32.mrb[0].mxu0
        %v1013 = vadd.f32 %v966, %v1012
        %v1014 = vpop.f32.mrb[0].mxu0
        %1015 = vdwg.mxu0
        %vm1016 = vcmask 130048
        %v1017 = vsel %vm1016, %v1010, -inf
        %1018 = vmax.xlane.f32.xlu0 %v1017
        %v1019 = vpop.xlane.xlu0 %1018
        %v1020 = vsel %vm1016, %v1013, -inf
        %1021 = vmax.xlane.f32.xlu0 %v1020
        %v1022 = vpop.xlane.xlu0 %1021
        %v1023 = vsub.f32 %v1010, %v1019
        %v1024 = vsub.f32 %v1013, %v1022
        %v1025 = vmul.f32 %v1023, 1.442695
        %v1026 = vpow.pop %v1025
        %v1027 = vmul.f32 %v1024, 1.442695
        %v1028 = vpow.pop %v1027
        %v1029 = vsel %vm1016, %v1026, 0.0
        %1030 = vadd.xlane.f32.xlu0 %v1029
        %v1031 = vpop.xlane.xlu0 %1030
        %v1032 = vsel %vm1016, %v1028, 0.0
        %1033 = vadd.xlane.f32.xlu0 %v1032
        %v1034 = vpop.xlane.xlu0 %1033
        %v1035 = vrcp.pop %v1031
        %v1036 = vrcp.pop %v1034
        %v1037 = vmul.f32 %v1031, %v1035
        %v1038 = vmul.f32 %v1034, %v1036
        %v1039 = vsub.f32 2.0, %v1037
        %v1040 = vsub.f32 2.0, %v1038
        %v1041 = vmul.f32 %v1035, %v1039
        %v1042 = vmul.f32 %v1036, %v1040
        %v1043 = vmul.f32 %v1026, %v1041
        %v1044 = vmul.f32 %v1028, %v1042
        %v1045 = vpack.c.bf16 %v1044, %v1043
        %v1047 = vsel %vm1016, %v1045, 0
        %1049 = vmatprep.subr.bf16.mxu0 0
        %1050 = vmatpush1.bf16.msra.mxu0 %v960
        %1051 = vmatprep.subr.bf16.mxu0 0
        %1052 = vmatpush1.bf16.msra.mxu0 0
        %1053 = vmatprep.subr.bf16.mxu0 0
        %1054 = vmatpush1.bf16.msra.mxu0 0
        %1055 = vmatprep.subr.bf16.mxu0 0
        %1056 = vmatpush1.bf16.msra.mxu0 0
        %1057 = vmatprep.subr.bf16.mxu0 0
        %1058 = vmatpush1.bf16.msra.mxu0 0
        %1059 = vmatprep.subr.bf16.mxu0 0
        %1060 = vmatpush1.bf16.msra.mxu0 0
        %1061 = vmatprep.subr.bf16.mxu0 0
        %1062 = vmatpush1.bf16.msra.mxu0 0
        %1063 = vmatprep.subr.bf16.mxu0 0
        %1064 = vmatpush1.bf16.msra.mxu0 0
        %1065 = vmatprep.subr.bf16.mxu0 0
        %1066 = vmatpush1.bf16.msra.mxu0 0
        %1067 = vmatprep.subr.bf16.mxu0 0
        %1068 = vmatpush1.bf16.msra.mxu0 0
        %1069 = vmatprep.subr.bf16.mxu0 0
        %1070 = vmatpush1.bf16.msra.mxu0 0
        %1071 = vmatprep.subr.bf16.mxu0 0
        %1072 = vmatpush1.bf16.msra.mxu0 0
        %1073 = vmatprep.subr.bf16.mxu0 0
        %1074 = vmatpush1.bf16.msra.mxu0 0
        %1075 = vmatprep.subr.bf16.mxu0 0
        %1076 = vmatpush1.bf16.msra.mxu0 0
        %1077 = vmatprep.subr.bf16.mxu0 0
        %1078 = vmatpush1.bf16.msra.mxu0 0
        %1079 = vmatprep.subr.bf16.mxu0 0
        %1080 = vmatpush1.bf16.msra.mxu0 0
        %1081 = vmatprep.mubr.bf16.mxu0 0
        %1082 = vmatmul.mubr.bf16.gmra.mrb[0].mxu0 %v1047
        %v1083 = vpop.f32.mrb[0].mxu0
        %v1084 = vadd.f32 0.0, %v1083
        %v1085 = vpop.f32.mrb[0].mxu0
        %v1086 = vpop.f32.mrb[0].mxu0
        %v1087 = vadd.f32 0.0, %v1086
        %v1088 = vpop.f32.mrb[0].mxu0
        %1089 = vdwg.mxu0
        %1091 = vrot.lane.b32.xlu0 %v958, 96
        %v1092 = vpop.permute.xlu0 %1091
        %1094 = vrot.lane.b32.xlu0 %v959, 96
        %v1095 = vpop.permute.xlu0 %1094
        %v1097 = vsel %vm968, %v1092, 0
        %v1100 = vsel %vm968, %v1095, 0
        %1102 = vmatprep.subr.bf16.mxu0 0
        %1103 = vmatpush1.bf16.xpose.msra.mxu0 %v1100
        %1104 = vmatprep.subr.bf16.mxu0 0
        %1105 = vmatpush1.bf16.xpose.msra.mxu0 0
        %1106 = vmatprep.subr.bf16.mxu0 0
        %1107 = vmatpush1.bf16.xpose.msra.mxu0 0
        %1108 = vmatprep.subr.bf16.mxu0 0
        %1109 = vmatpush1.bf16.xpose.msra.mxu0 0
        %1110 = vmatprep.subr.bf16.mxu0 0
        %1111 = vmatpush1.bf16.xpose.msra.mxu0 0
        %1112 = vmatprep.subr.bf16.mxu0 0
        %1113 = vmatpush1.bf16.xpose.msra.mxu0 0
        %1114 = vmatprep.subr.bf16.mxu0 0
        %1115 = vmatpush1.bf16.xpose.msra.mxu0 0
        %1116 = vmatprep.subr.bf16.mxu0 0
        %1117 = vmatpush1.bf16.xpose.msra.mxu0 0
        %1118 = vmatprep.subr.bf16.mxu0 0
        %1119 = vmatpush1.bf16.xpose.msra.mxu0 0
        %1120 = vmatprep.subr.bf16.mxu0 0
        %1121 = vmatpush1.bf16.xpose.msra.mxu0 0
        %1122 = vmatprep.subr.bf16.mxu0 0
        %1123 = vmatpush1.bf16.xpose.msra.mxu0 0
        %1124 = vmatprep.subr.bf16.mxu0 0
        %1125 = vmatpush1.bf16.xpose.msra.mxu0 0
        %1126 = vmatprep.subr.bf16.mxu0 0
        %1127 = vmatpush1.bf16.xpose.msra.mxu0 0
        %1128 = vmatprep.subr.bf16.mxu0 0
        %1129 = vmatpush1.bf16.xpose.msra.mxu0 0
        %1130 = vmatprep.subr.bf16.mxu0 0
        %1131 = vmatpush1.bf16.xpose.msra.mxu0 0
        %1132 = vmatprep.subr.bf16.mxu0 0
        %1133 = vmatpush1.bf16.xpose.msra.mxu0 0
        %1134 = vmatprep.mubr.bf16.mxu0 0
        %1135 = vmatmul.mubr.bf16.gmra.mrb[0].mxu0 %v1097
        %v1136 = vpop.f32.mrb[0].mxu0
        %v1137 = vadd.f32 %v966, %v1136
        %v1138 = vpop.f32.mrb[0].mxu0
        %v1139 = vpop.f32.mrb[0].mxu0
        %v1140 = vadd.f32 %v966, %v1139
        %v1141 = vpop.f32.mrb[0].mxu0
        %1142 = vdwg.mxu0
        %v1143 = vsel %vm1016, %v1137, -inf
        %1144 = vmax.xlane.f32.xlu0 %v1143
        %v1145 = vpop.xlane.xlu0 %1144
        %v1146 = vsel %vm1016, %v1140, -inf
        %1147 = vmax.xlane.f32.xlu0 %v1146
        %v1148 = vpop.xlane.xlu0 %1147
        %v1149 = vsub.f32 %v1137, %v1145
        %v1150 = vsub.f32 %v1140, %v1148
        %v1151 = vmul.f32 %v1149, 1.442695
        %v1152 = vpow.pop %v1151
        %v1153 = vmul.f32 %v1150, 1.442695
        %v1154 = vpow.pop %v1153
        %v1155 = vsel %vm1016, %v1152, 0.0
        %1156 = vadd.xlane.f32.xlu0 %v1155
        %v1157 = vpop.xlane.xlu0 %1156
        %v1158 = vsel %vm1016, %v1154, 0.0
        %1159 = vadd.xlane.f32.xlu0 %v1158
        %v1160 = vpop.xlane.xlu0 %1159
        %v1161 = vrcp.pop %v1157
        %v1162 = vrcp.pop %v1160
        %v1163 = vmul.f32 %v1157, %v1161
        %v1164 = vmul.f32 %v1160, %v1162
        %v1165 = vsub.f32 2.0, %v1163
        %v1166 = vsub.f32 2.0, %v1164
        %v1167 = vmul.f32 %v1161, %v1165
        %v1168 = vmul.f32 %v1162, %v1166
        %v1169 = vmul.f32 %v1152, %v1167
        %v1170 = vmul.f32 %v1154, %v1168
        %v1171 = vpack.c.bf16 %v1170, %v1169
        %1173 = vrot.lane.b32.xlu0 %v960, 96
        %v1174 = vpop.permute.xlu0 %1173
        %v1177 = vsel %vm1016, %v1171, 0
        %1179 = vmatprep.subr.bf16.mxu0 0
        %1180 = vmatpush1.bf16.msra.mxu0 %v1174
        %1181 = vmatprep.subr.bf16.mxu0 0
        %1182 = vmatpush1.bf16.msra.mxu0 0
        %1183 = vmatprep.subr.bf16.mxu0 0
        %1184 = vmatpush1.bf16.msra.mxu0 0
        %1185 = vmatprep.subr.bf16.mxu0 0
        %1186 = vmatpush1.bf16.msra.mxu0 0
        %1187 = vmatprep.subr.bf16.mxu0 0
        %1188 = vmatpush1.bf16.msra.mxu0 0
        %1189 = vmatprep.subr.bf16.mxu0 0
        %1190 = vmatpush1.bf16.msra.mxu0 0
        %1191 = vmatprep.subr.bf16.mxu0 0
        %1192 = vmatpush1.bf16.msra.mxu0 0
        %1193 = vmatprep.subr.bf16.mxu0 0
        %1194 = vmatpush1.bf16.msra.mxu0 0
        %1195 = vmatprep.subr.bf16.mxu0 0
        %1196 = vmatpush1.bf16.msra.mxu0 0
        %1197 = vmatprep.subr.bf16.mxu0 0
        %1198 = vmatpush1.bf16.msra.mxu0 0
        %1199 = vmatprep.subr.bf16.mxu0 0
        %1200 = vmatpush1.bf16.msra.mxu0 0
        %1201 = vmatprep.subr.bf16.mxu0 0
        %1202 = vmatpush1.bf16.msra.mxu0 0
        %1203 = vmatprep.subr.bf16.mxu0 0
        %1204 = vmatpush1.bf16.msra.mxu0 0
        %1205 = vmatprep.subr.bf16.mxu0 0
        %1206 = vmatpush1.bf16.msra.mxu0 0
        %1207 = vmatprep.subr.bf16.mxu0 0
        %1208 = vmatpush1.bf16.msra.mxu0 0
        %1209 = vmatprep.subr.bf16.mxu0 0
        %1210 = vmatpush1.bf16.msra.mxu0 0
        %1211 = vmatprep.mubr.bf16.mxu0 0
        %1212 = vmatmul.mubr.bf16.gmra.mrb[0].mxu0 %v1177
        %v1213 = vpop.f32.mrb[0].mxu0
        %v1214 = vadd.f32 0.0, %v1213
        %v1215 = vpop.f32.mrb[0].mxu0
        %v1216 = vpop.f32.mrb[0].mxu0
        %v1217 = vadd.f32 0.0, %v1216
        %v1218 = vpop.f32.mrb[0].mxu0
        %1219 = vdwg.mxu0
        %1220 = vrot.lane.b32.xlu0 %v958, 64
        %v1221 = vpop.permute.xlu0 %1220
        %1222 = vrot.lane.b32.xlu0 %v959, 64
        %v1223 = vpop.permute.xlu0 %1222
        %v1225 = vsel %vm968, %v1221, 0
        %v1228 = vsel %vm968, %v1223, 0
        %1230 = vmatprep.subr.bf16.mxu0 0
        %1231 = vmatpush1.bf16.xpose.msra.mxu0 %v1228
        %1232 = vmatprep.subr.bf16.mxu0 0
        %1233 = vmatpush1.bf16.xpose.msra.mxu0 0
        %1234 = vmatprep.subr.bf16.mxu0 0
        %1235 = vmatpush1.bf16.xpose.msra.mxu0 0
        %1236 = vmatprep.subr.bf16.mxu0 0
        %1237 = vmatpush1.bf16.xpose.msra.mxu0 0
        %1238 = vmatprep.subr.bf16.mxu0 0
        %1239 = vmatpush1.bf16.xpose.msra.mxu0 0
        %1240 = vmatprep.subr.bf16.mxu0 0
        %1241 = vmatpush1.bf16.xpose.msra.mxu0 0
        %1242 = vmatprep.subr.bf16.mxu0 0
        %1243 = vmatpush1.bf16.xpose.msra.mxu0 0
        %1244 = vmatprep.subr.bf16.mxu0 0
        %1245 = vmatpush1.bf16.xpose.msra.mxu0 0
        %1246 = vmatprep.subr.bf16.mxu0 0
        %1247 = vmatpush1.bf16.xpose.msra.mxu0 0
        %1248 = vmatprep.subr.bf16.mxu0 0
        %1249 = vmatpush1.bf16.xpose.msra.mxu0 0
        %1250 = vmatprep.subr.bf16.mxu0 0
        %1251 = vmatpush1.bf16.xpose.msra.mxu0 0
        %1252 = vmatprep.subr.bf16.mxu0 0
        %1253 = vmatpush1.bf16.xpose.msra.mxu0 0
        %1254 = vmatprep.subr.bf16.mxu0 0
        %1255 = vmatpush1.bf16.xpose.msra.mxu0 0
        %1256 = vmatprep.subr.bf16.mxu0 0
        %1257 = vmatpush1.bf16.xpose.msra.mxu0 0
        %1258 = vmatprep.subr.bf16.mxu0 0
        %1259 = vmatpush1.bf16.xpose.msra.mxu0 0
        %1260 = vmatprep.subr.bf16.mxu0 0
        %1261 = vmatpush1.bf16.xpose.msra.mxu0 0
        %1262 = vmatprep.mubr.bf16.mxu0 0
        %1263 = vmatmul.mubr.bf16.gmra.mrb[0].mxu0 %v1225
        %v1264 = vpop.f32.mrb[0].mxu0
        %v1265 = vadd.f32 %v966, %v1264
        %v1266 = vpop.f32.mrb[0].mxu0
        %v1267 = vpop.f32.mrb[0].mxu0
        %v1268 = vadd.f32 %v966, %v1267
        %v1269 = vpop.f32.mrb[0].mxu0
        %1270 = vdwg.mxu0
        %v1271 = vsel %vm1016, %v1265, -inf
        %1272 = vmax.xlane.f32.xlu0 %v1271
        %v1273 = vpop.xlane.xlu0 %1272
        %v1274 = vsel %vm1016, %v1268, -inf
        %1275 = vmax.xlane.f32.xlu0 %v1274
        %v1276 = vpop.xlane.xlu0 %1275
        %v1277 = vsub.f32 %v1265, %v1273
        %v1278 = vsub.f32 %v1268, %v1276
        %v1279 = vmul.f32 %v1277, 1.442695
        %v1280 = vpow.pop %v1279
        %v1281 = vmul.f32 %v1278, 1.442695
        %v1282 = vpow.pop %v1281
        %v1283 = vsel %vm1016, %v1280, 0.0
        %1284 = vadd.xlane.f32.xlu0 %v1283
        %v1285 = vpop.xlane.xlu0 %1284
        %v1286 = vsel %vm1016, %v1282, 0.0
        %1287 = vadd.xlane.f32.xlu0 %v1286
        %v1288 = vpop.xlane.xlu0 %1287
        %v1289 = vrcp.pop %v1285
        %v1290 = vrcp.pop %v1288
        %v1291 = vmul.f32 %v1285, %v1289
        %v1292 = vmul.f32 %v1288, %v1290
        %v1293 = vsub.f32 2.0, %v1291
        %v1294 = vsub.f32 2.0, %v1292
        %v1295 = vmul.f32 %v1289, %v1293
        %v1296 = vmul.f32 %v1290, %v1294
        %v1297 = vmul.f32 %v1280, %v1295
        %v1298 = vmul.f32 %v1282, %v1296
        %v1299 = vpack.c.bf16 %v1298, %v1297
        %1300 = vrot.lane.b32.xlu0 %v960, 64
        %v1301 = vpop.permute.xlu0 %1300
        %v1304 = vsel %vm1016, %v1299, 0
        %1306 = vmatprep.subr.bf16.mxu0 0
        %1307 = vmatpush1.bf16.msra.mxu0 %v1301
        %1308 = vmatprep.subr.bf16.mxu0 0
        %1309 = vmatpush1.bf16.msra.mxu0 0
        %1310 = vmatprep.subr.bf16.mxu0 0
        %1311 = vmatpush1.bf16.msra.mxu0 0
        %1312 = vmatprep.subr.bf16.mxu0 0
        %1313 = vmatpush1.bf16.msra.mxu0 0
        %1314 = vmatprep.subr.bf16.mxu0 0
        %1315 = vmatpush1.bf16.msra.mxu0 0
        %1316 = vmatprep.subr.bf16.mxu0 0
        %1317 = vmatpush1.bf16.msra.mxu0 0
        %1318 = vmatprep.subr.bf16.mxu0 0
        %1319 = vmatpush1.bf16.msra.mxu0 0
        %1320 = vmatprep.subr.bf16.mxu0 0
        %1321 = vmatpush1.bf16.msra.mxu0 0
        %1322 = vmatprep.subr.bf16.mxu0 0
        %1323 = vmatpush1.bf16.msra.mxu0 0
        %1324 = vmatprep.subr.bf16.mxu0 0
        %1325 = vmatpush1.bf16.msra.mxu0 0
        %1326 = vmatprep.subr.bf16.mxu0 0
        %1327 = vmatpush1.bf16.msra.mxu0 0
        %1328 = vmatprep.subr.bf16.mxu0 0
        %1329 = vmatpush1.bf16.msra.mxu0 0
        %1330 = vmatprep.subr.bf16.mxu0 0
        %1331 = vmatpush1.bf16.msra.mxu0 0
        %1332 = vmatprep.subr.bf16.mxu0 0
        %1333 = vmatpush1.bf16.msra.mxu0 0
        %1334 = vmatprep.subr.bf16.mxu0 0
        %1335 = vmatpush1.bf16.msra.mxu0 0
        %1336 = vmatprep.subr.bf16.mxu0 0
        %1337 = vmatpush1.bf16.msra.mxu0 0
        %1338 = vmatprep.mubr.bf16.mxu0 0
        %1339 = vmatmul.mubr.bf16.gmra.mrb[0].mxu0 %v1304
        %v1340 = vpop.f32.mrb[0].mxu0
        %v1341 = vadd.f32 0.0, %v1340
        %v1342 = vpop.f32.mrb[0].mxu0
        %v1343 = vpop.f32.mrb[0].mxu0
        %v1344 = vadd.f32 0.0, %v1343
        %v1345 = vpop.f32.mrb[0].mxu0
        %1346 = vdwg.mxu0
        %1347 = vrot.lane.b32.xlu0 %v958, 32
        %v1348 = vpop.permute.xlu0 %1347
        %1349 = vrot.lane.b32.xlu0 %v959, 32
        %v1350 = vpop.permute.xlu0 %1349
        %v1352 = vsel %vm968, %v1348, 0
        %v1355 = vsel %vm968, %v1350, 0
        %1357 = vmatprep.subr.bf16.mxu0 0
        %1358 = vmatpush1.bf16.xpose.msra.mxu0 %v1355
        %1359 = vmatprep.subr.bf16.mxu0 0
        %1360 = vmatpush1.bf16.xpose.msra.mxu0 0
        %1361 = vmatprep.subr.bf16.mxu0 0
        %1362 = vmatpush1.bf16.xpose.msra.mxu0 0
        %1363 = vmatprep.subr.bf16.mxu0 0
        %1364 = vmatpush1.bf16.xpose.msra.mxu0 0
        %1365 = vmatprep.subr.bf16.mxu0 0
        %1366 = vmatpush1.bf16.xpose.msra.mxu0 0
        %1367 = vmatprep.subr.bf16.mxu0 0
        %1368 = vmatpush1.bf16.xpose.msra.mxu0 0
        %1369 = vmatprep.subr.bf16.mxu0 0
        %1370 = vmatpush1.bf16.xpose.msra.mxu0 0
        %1371 = vmatprep.subr.bf16.mxu0 0
        %1372 = vmatpush1.bf16.xpose.msra.mxu0 0
        %1373 = vmatprep.subr.bf16.mxu0 0
        %1374 = vmatpush1.bf16.xpose.msra.mxu0 0
        %1375 = vmatprep.subr.bf16.mxu0 0
        %1376 = vmatpush1.bf16.xpose.msra.mxu0 0
        %1377 = vmatprep.subr.bf16.mxu0 0
        %1378 = vmatpush1.bf16.xpose.msra.mxu0 0
        %1379 = vmatprep.subr.bf16.mxu0 0
        %1380 = vmatpush1.bf16.xpose.msra.mxu0 0
        %1381 = vmatprep.subr.bf16.mxu0 0
        %1382 = vmatpush1.bf16.xpose.msra.mxu0 0
        %1383 = vmatprep.subr.bf16.mxu0 0
        %1384 = vmatpush1.bf16.xpose.msra.mxu0 0
        %1385 = vmatprep.subr.bf16.mxu0 0
        %1386 = vmatpush1.bf16.xpose.msra.mxu0 0
        %1387 = vmatprep.subr.bf16.mxu0 0
        %1388 = vmatpush1.bf16.xpose.msra.mxu0 0
        %1389 = vmatprep.mubr.bf16.mxu0 0
        %1390 = vmatmul.mubr.bf16.gmra.mrb[0].mxu0 %v1352
        %v1391 = vpop.f32.mrb[0].mxu0
        %v1392 = vadd.f32 %v966, %v1391
        %v1393 = vpop.f32.mrb[0].mxu0
        %v1394 = vpop.f32.mrb[0].mxu0
        %v1395 = vadd.f32 %v966, %v1394
        %v1396 = vpop.f32.mrb[0].mxu0
        %1397 = vdwg.mxu0
        %v1398 = vsel %vm1016, %v1392, -inf
        %1399 = vmax.xlane.f32.xlu0 %v1398
        %v1400 = vpop.xlane.xlu0 %1399
        %v1401 = vsel %vm1016, %v1395, -inf
        %1402 = vmax.xlane.f32.xlu0 %v1401
        %v1403 = vpop.xlane.xlu0 %1402
        %v1404 = vsub.f32 %v1392, %v1400
        %v1405 = vsub.f32 %v1395, %v1403
        %v1406 = vmul.f32 %v1404, 1.442695
        %v1407 = vpow.pop %v1406
        %v1408 = vmul.f32 %v1405, 1.442695
        %v1409 = vpow.pop %v1408
        %v1410 = vsel %vm1016, %v1407, 0.0
        %1411 = vadd.xlane.f32.xlu0 %v1410
        %v1412 = vpop.xlane.xlu0 %1411
        %v1413 = vsel %vm1016, %v1409, 0.0
        %1414 = vadd.xlane.f32.xlu0 %v1413
        %v1415 = vpop.xlane.xlu0 %1414
        %v1416 = vrcp.pop %v1412
        %v1417 = vrcp.pop %v1415
        %v1418 = vmul.f32 %v1412, %v1416
        %v1419 = vmul.f32 %v1415, %v1417
        %v1420 = vsub.f32 2.0, %v1418
        %v1421 = vsub.f32 2.0, %v1419
        %v1422 = vmul.f32 %v1416, %v1420
        %v1423 = vmul.f32 %v1417, %v1421
        %v1424 = vmul.f32 %v1407, %v1422
        %v1425 = vmul.f32 %v1409, %v1423
        %v1426 = vpack.c.bf16 %v1425, %v1424
        %1427 = vrot.lane.b32.xlu0 %v960, 32
        %v1428 = vpop.permute.xlu0 %1427
        %v1431 = vsel %vm1016, %v1426, 0
        %1433 = vmatprep.subr.bf16.mxu0 0
        %1434 = vmatpush1.bf16.msra.mxu0 %v1428
        %1435 = vmatprep.subr.bf16.mxu0 0
        %1436 = vmatpush1.bf16.msra.mxu0 0
        %1437 = vmatprep.subr.bf16.mxu0 0
        %1438 = vmatpush1.bf16.msra.mxu0 0
        %1439 = vmatprep.subr.bf16.mxu0 0
        %1440 = vmatpush1.bf16.msra.mxu0 0
        %1441 = vmatprep.subr.bf16.mxu0 0
        %1442 = vmatpush1.bf16.msra.mxu0 0
        %1443 = vmatprep.subr.bf16.mxu0 0
        %1444 = vmatpush1.bf16.msra.mxu0 0
        %1445 = vmatprep.subr.bf16.mxu0 0
        %1446 = vmatpush1.bf16.msra.mxu0 0
        %1447 = vmatprep.subr.bf16.mxu0 0
        %1448 = vmatpush1.bf16.msra.mxu0 0
        %1449 = vmatprep.subr.bf16.mxu0 0
        %1450 = vmatpush1.bf16.msra.mxu0 0
        %1451 = vmatprep.subr.bf16.mxu0 0
        %1452 = vmatpush1.bf16.msra.mxu0 0
        %1453 = vmatprep.subr.bf16.mxu0 0
        %1454 = vmatpush1.bf16.msra.mxu0 0
        %1455 = vmatprep.subr.bf16.mxu0 0
        %1456 = vmatpush1.bf16.msra.mxu0 0
        %1457 = vmatprep.subr.bf16.mxu0 0
        %1458 = vmatpush1.bf16.msra.mxu0 0
        %1459 = vmatprep.subr.bf16.mxu0 0
        %1460 = vmatpush1.bf16.msra.mxu0 0
        %1461 = vmatprep.subr.bf16.mxu0 0
        %1462 = vmatpush1.bf16.msra.mxu0 0
        %1463 = vmatprep.subr.bf16.mxu0 0
        %1464 = vmatpush1.bf16.msra.mxu0 0
        %1465 = vmatprep.mubr.bf16.mxu0 0
        %1466 = vmatmul.mubr.bf16.gmra.mrb[0].mxu0 %v1431
        %v1467 = vpop.f32.mrb[0].mxu0
        %v1468 = vadd.f32 0.0, %v1467
        %v1469 = vpop.f32.mrb[0].mxu0
        %v1470 = vpop.f32.mrb[0].mxu0
        %v1471 = vadd.f32 0.0, %v1470
        %v1472 = vpop.f32.mrb[0].mxu0
        %1473 = vdwg.mxu0
        %1476 = vrot.lane.b32.xlu0 %v1214, 32
        %v1477 = vpop.permute.xlu0 %1476
        %1478 = vrot.lane.b32.xlu0 %v1217, 32
        %v1479 = vpop.permute.xlu0 %1478
        %1484 = vrot.lane.b32.xlu0 %v1341, 64
        %v1485 = vpop.permute.xlu0 %1484
        %1486 = vrot.lane.b32.xlu0 %v1344, 64
        %v1487 = vpop.permute.xlu0 %1486
        %1492 = vrot.lane.b32.xlu0 %v1468, 96
        %v1493 = vpop.permute.xlu0 %1492
        %1494 = vrot.lane.b32.xlu0 %v1471, 96
        %v1495 = vpop.permute.xlu0 %1494
        %v1498 = vsel %vm968, %v1084, %v1477
        %v1499 = vsel %vm968, %v1087, %v1479
        %vm1500 = vcmask 523264
        %v1501 = vsel %vm1500, %v1498, %v1485
        %v1502 = vsel %vm1500, %v1499, %v1487
        %vm1503 = vcmask 785408
        %v1504 = vsel %vm1503, %v1501, %v1493
        %v1505 = vsel %vm1503, %v1502, %v1495
        %v1506 = vpack.c.bf16 %v1505, %v1504
        %v1507 = vld [vmem:[#allocation4] sm:$0xf]
        %v1508 = vld [vmem:[#allocation4 + $0x4] sm:$0xf]
        %v1509 = vld [vmem:[#allocation4 + $0x8] sm:$0xf]
        %v1510 = vld [vmem:[#allocation4 + $0xc] sm:$0xf]
        %v1511 = vld [vmem:[#allocation4 + $0x10] sm:$0xf]
        %v1512 = vld [vmem:[#allocation4 + $0x14] sm:$0xf]
        %v1513 = vld [vmem:[#allocation4 + $0x18] sm:$0xf]
        %v1514 = vld [vmem:[#allocation4 + $0x1c] sm:$0xf]
        %v1515 = vld [vmem:[#allocation4 + $0x20] sm:$0xf]
        %v1516 = vld [vmem:[#allocation4 + $0x24] sm:$0xf]
        %v1517 = vld [vmem:[#allocation4 + $0x28] sm:$0xf]
        %v1518 = vld [vmem:[#allocation4 + $0x2c] sm:$0xf]
        %v1519 = vld [vmem:[#allocation4 + $0x30] sm:$0xf]
        %v1520 = vld [vmem:[#allocation4 + $0x34] sm:$0xf]
        %v1521 = vld [vmem:[#allocation4 + $0x38] sm:$0xf]
        %v1522 = vld [vmem:[#allocation4 + $0x3c] sm:$0xf]
        %v1523 = vld [vmem:[%s5] sm:$0x1]
        %v1525 = vlaneseq
        %v1526 = vshrl.u32 %v1525, 7
        %v1527 = vsub.s32 0, %v1526
        %v1528 = vrot.slane %v1523, %v1527
        %v1546 = vunpack.c.l.b16 %v1507
        %v1547 = vunpack.c.l.b16 %v1508
        %v1548 = vunpack.c.l.b16 %v1509
        %v1549 = vunpack.c.l.b16 %v1510
        %v1550 = vunpack.c.l.b16 %v1511
        %v1551 = vunpack.c.l.b16 %v1512
        %v1552 = vunpack.c.l.b16 %v1513
        %v1553 = vunpack.c.l.b16 %v1514
        %v1554 = vunpack.c.l.b16 %v1515
        %v1555 = vunpack.c.l.b16 %v1516
        %v1556 = vunpack.c.l.b16 %v1517
        %v1557 = vunpack.c.l.b16 %v1518
        %v1558 = vunpack.c.l.b16 %v1519
        %v1559 = vunpack.c.l.b16 %v1520
        %v1560 = vunpack.c.l.b16 %v1521
        %v1561 = vunpack.c.l.b16 %v1522
        %v1562 = vpack.c.b16 %v1547, %v1546
        %v1563 = vpack.c.b16 %v1549, %v1548
        %v1564 = vpack.c.b16 %v1551, %v1550
        %v1565 = vpack.c.b16 %v1553, %v1552
        %v1566 = vpack.c.b16 %v1555, %v1554
        %v1567 = vpack.c.b16 %v1557, %v1556
        %v1568 = vpack.c.b16 %v1559, %v1558
        %v1569 = vpack.c.b16 %v1561, %v1560
        %1578 = vmatprep.subr.bf16.mxu0 0
        %1579 = vmatpush1.bf16.msra.mxu0 %v1562
        %1580 = vmatprep.subr.bf16.mxu0 0
        %1581 = vmatpush1.bf16.msra.mxu0 %v1563
        %1582 = vmatprep.subr.bf16.mxu0 0
        %1583 = vmatpush1.bf16.msra.mxu0 %v1564
        %1584 = vmatprep.subr.bf16.mxu0 0
        %1585 = vmatpush1.bf16.msra.mxu0 %v1565
        %1586 = vmatprep.subr.bf16.mxu0 0
        %1587 = vmatpush1.bf16.msra.mxu0 %v1566
        %1588 = vmatprep.subr.bf16.mxu0 0
        %1589 = vmatpush1.bf16.msra.mxu0 %v1567
        %1590 = vmatprep.subr.bf16.mxu0 0
        %1591 = vmatpush1.bf16.msra.mxu0 %v1568
        %1592 = vmatprep.subr.bf16.mxu0 0
        %1593 = vmatpush1.bf16.msra.mxu0 %v1569
        %1594 = vmatprep.subr.bf16.mxu0 0
        %1595 = vmatpush1.bf16.msra.mxu0 0
        %1596 = vmatprep.subr.bf16.mxu0 0
        %1597 = vmatpush1.bf16.msra.mxu0 0
        %1598 = vmatprep.subr.bf16.mxu0 0
        %1599 = vmatpush1.bf16.msra.mxu0 0
        %1600 = vmatprep.subr.bf16.mxu0 0
        %1601 = vmatpush1.bf16.msra.mxu0 0
        %1602 = vmatprep.subr.bf16.mxu0 0
        %1603 = vmatpush1.bf16.msra.mxu0 0
        %1604 = vmatprep.subr.bf16.mxu0 0
        %1605 = vmatpush1.bf16.msra.mxu0 0
        %1606 = vmatprep.subr.bf16.mxu0 0
        %1607 = vmatpush1.bf16.msra.mxu0 0
        %1608 = vmatprep.subr.bf16.mxu0 0
        %1609 = vmatpush1.bf16.msra.mxu0 0
        %1610 = vmatprep.mubr.bf16.mxu0 0
        %1611 = vmatmul.mubr.bf16.gmra.mrb[0].mxu0 %v1506
        %v1612 = vpop.f32.mrb[0].mxu0
        %v1613 = vadd.f32 %v1528, %v1612
        %v1614 = vpop.f32.mrb[0].mxu0
        %v1615 = vpop.f32.mrb[0].mxu0
        %v1616 = vadd.f32 %v1528, %v1615
        %v1617 = vpop.f32.mrb[0].mxu0
        %1618 = vdwg.mxu0
        %v1619 = vadd.f32 %v1613, %v694
        %v1620 = vadd.f32 %v1616, %v695
        %v1621 = vld [vmem:[#allocation12] sm:$0x1]
        %v1622 = vld [vmem:[#allocation13] sm:$0x1]
        %1623 = vadd.xlane.f32.xlu0 %v1619
        %v1624 = vpop.xlane.xlu0 %1623
        %1625 = vadd.xlane.f32.xlu0 %v1620
        %v1626 = vpop.xlane.xlu0 %1625
        %v1627 = vrcp.pop 128.0
        %v1628 = vmul.f32 %v1624, %v1627
        %v1629 = vmul.f32 %v1626, %v1627
        %v1630 = vsub.f32 %v1619, %v1628
        %v1631 = vsub.f32 %v1620, %v1629
        %v1632 = vmul.f32 %v1630, %v1630
        %v1633 = vmul.f32 %v1631, %v1631
        %1634 = vadd.xlane.f32.xlu0 %v1632
        %v1635 = vpop.xlane.xlu0 %1634
        %1636 = vadd.xlane.f32.xlu0 %v1633
        %v1637 = vpop.xlane.xlu0 %1636
        %v1638 = vmul.f32 %v1635, %v1627
        %v1639 = vmul.f32 %v1637, %v1627
        %v1640 = vadd.f32 %v1638, 1e-05
        %v1641 = vadd.f32 %v1639, 1e-05
        %v1642 = vrsqrt.pop %v1640
        %v1643 = vrsqrt.pop %v1641
        %v1644 = vmul.f32 %v1630, %v1642
        %v1645 = vmul.f32 %v1631, %v1643
        %v1647 = vlaneseq
        %v1648 = vshrl.u32 %v1647, 7
        %v1649 = vsub.s32 0, %v1648
        %v1650 = vrot.slane %v1621, %v1649
        %v1652 = vmul.f32 %v1644, %v1650
        %v1653 = vmul.f32 %v1645, %v1650
        %v1655 = vlaneseq
        %v1656 = vshrl.u32 %v1655, 7
        %v1657 = vsub.s32 0, %v1656
        %v1658 = vrot.slane %v1622, %v1657
        %v1660 = vadd.f32 %v1652, %v1658
        %v1661 = vadd.f32 %v1653, %v1658
        %v1662 = vpack.c.bf16 %v1661, %v1660
        %v1663 = vld [vmem:[#allocation6] sm:$0xff]
        %v1664 = vld [vmem:[#allocation6 + $0x8] sm:$0xff]
        %v1665 = vld [vmem:[#allocation6 + $0x10] sm:$0xff]
        %v1666 = vld [vmem:[#allocation6 + $0x18] sm:$0xff]
        %v1667 = vld [vmem:[#allocation6 + $0x20] sm:$0xff]
        %v1668 = vld [vmem:[#allocation6 + $0x28] sm:$0xff]
        %v1669 = vld [vmem:[#allocation6 + $0x30] sm:$0xff]
        %v1670 = vld [vmem:[#allocation6 + $0x38] sm:$0xff]
        %v1671 = vld [vmem:[#allocation6 + $0x40] sm:$0xff]
        %v1672 = vld [vmem:[#allocation6 + $0x48] sm:$0xff]
        %v1673 = vld [vmem:[#allocation6 + $0x50] sm:$0xff]
        %v1674 = vld [vmem:[#allocation6 + $0x58] sm:$0xff]
        %v1675 = vld [vmem:[#allocation6 + $0x60] sm:$0xff]
        %v1676 = vld [vmem:[#allocation6 + $0x68] sm:$0xff]
        %v1677 = vld [vmem:[#allocation6 + $0x70] sm:$0xff]
        %v1678 = vld [vmem:[#allocation6 + $0x78] sm:$0xff]
        %v1679 = vld [vmem:[#allocation7] sm:$0x3]
        %v1681 = vlaneseq
        %v1682 = vshrl.u32 %v1681, 7
        %v1683 = vsub.s32 0, %v1682
        %v1684 = vrot.slane %v1679, %v1683
        %v1685 = vlaneseq
        %v1686 = vshrl.u32 %v1685, 7
        %v1687 = vsub.s32 1, %v1686
        %v1688 = vrot.slane %v1679, %v1687
        %v1707 = vunpack.c.l.b16 %v1663
        %v1708 = vunpack.c.h.b16 %v1663
        %v1709 = vunpack.c.l.b16 %v1664
        %v1710 = vunpack.c.h.b16 %v1664
        %v1711 = vunpack.c.l.b16 %v1665
        %v1712 = vunpack.c.h.b16 %v1665
        %v1713 = vunpack.c.l.b16 %v1666
        %v1714 = vunpack.c.h.b16 %v1666
        %v1715 = vunpack.c.l.b16 %v1667
        %v1716 = vunpack.c.h.b16 %v1667
        %v1717 = vunpack.c.l.b16 %v1668
        %v1718 = vunpack.c.h.b16 %v1668
        %v1719 = vunpack.c.l.b16 %v1669
        %v1720 = vunpack.c.h.b16 %v1669
        %v1721 = vunpack.c.l.b16 %v1670
        %v1722 = vunpack.c.h.b16 %v1670
        %v1723 = vunpack.c.l.b16 %v1671
        %v1724 = vunpack.c.h.b16 %v1671
        %v1725 = vunpack.c.l.b16 %v1672
        %v1726 = vunpack.c.h.b16 %v1672
        %v1727 = vunpack.c.l.b16 %v1673
        %v1728 = vunpack.c.h.b16 %v1673
        %v1729 = vunpack.c.l.b16 %v1674
        %v1730 = vunpack.c.h.b16 %v1674
        %v1731 = vunpack.c.l.b16 %v1675
        %v1732 = vunpack.c.h.b16 %v1675
        %v1733 = vunpack.c.l.b16 %v1676
        %v1734 = vunpack.c.h.b16 %v1676
        %v1735 = vunpack.c.l.b16 %v1677
        %v1736 = vunpack.c.h.b16 %v1677
        %v1737 = vunpack.c.l.b16 %v1678
        %v1738 = vunpack.c.h.b16 %v1678
        %v1739 = vpack.c.b16 %v1709, %v1707
        %v1740 = vpack.c.b16 %v1710, %v1708
        %v1741 = vpack.c.b16 %v1713, %v1711
        %v1742 = vpack.c.b16 %v1714, %v1712
        %v1743 = vpack.c.b16 %v1717, %v1715
        %v1744 = vpack.c.b16 %v1718, %v1716
        %v1745 = vpack.c.b16 %v1721, %v1719
        %v1746 = vpack.c.b16 %v1722, %v1720
        %v1747 = vpack.c.b16 %v1725, %v1723
        %v1748 = vpack.c.b16 %v1726, %v1724
        %v1749 = vpack.c.b16 %v1729, %v1727
        %v1750 = vpack.c.b16 %v1730, %v1728
        %v1751 = vpack.c.b16 %v1733, %v1731
        %v1752 = vpack.c.b16 %v1734, %v1732
        %v1753 = vpack.c.b16 %v1737, %v1735
        %v1754 = vpack.c.b16 %v1738, %v1736
        %1771 = vmatprep.subr.bf16.mxu0 %v1740
        %1772 = vmatpush1.bf16.msra.mxu0 %v1739
        %1773 = vmatprep.subr.bf16.mxu0 %v1742
        %1774 = vmatpush1.bf16.msra.mxu0 %v1741
        %1775 = vmatprep.subr.bf16.mxu0 %v1744
        %1776 = vmatpush1.bf16.msra.mxu0 %v1743
        %1777 = vmatprep.subr.bf16.mxu0 %v1746
        %1778 = vmatpush1.bf16.msra.mxu0 %v1745
        %1779 = vmatprep.subr.bf16.mxu0 %v1748
        %1780 = vmatpush1.bf16.msra.mxu0 %v1747
        %1781 = vmatprep.subr.bf16.mxu0 %v1750
        %1782 = vmatpush1.bf16.msra.mxu0 %v1749
        %1783 = vmatprep.subr.bf16.mxu0 %v1752
        %1784 = vmatpush1.bf16.msra.mxu0 %v1751
        %1785 = vmatprep.subr.bf16.mxu0 %v1754
        %1786 = vmatpush1.bf16.msra.mxu0 %v1753
        %1787 = vmatprep.subr.bf16.mxu0 0
        %1788 = vmatpush1.bf16.msra.mxu0 0
        %1789 = vmatprep.subr.bf16.mxu0 0
        %1790 = vmatpush1.bf16.msra.mxu0 0
        %1791 = vmatprep.subr.bf16.mxu0 0
        %1792 = vmatpush1.bf16.msra.mxu0 0
        %1793 = vmatprep.subr.bf16.mxu0 0
        %1794 = vmatpush1.bf16.msra.mxu0 0
        %1795 = vmatprep.subr.bf16.mxu0 0
        %1796 = vmatpush1.bf16.msra.mxu0 0
        %1797 = vmatprep.subr.bf16.mxu0 0
        %1798 = vmatpush1.bf16.msra.mxu0 0
        %1799 = vmatprep.subr.bf16.mxu0 0
        %1800 = vmatpush1.bf16.msra.mxu0 0
        %1801 = vmatprep.subr.bf16.mxu0 0
        %1802 = vmatpush1.bf16.msra.mxu0 0
        %1803 = vmatprep.mubr.bf16.mxu0 0
        %1804 = vmatmul.mubr.bf16.gmra.mrb[0].mxu0 %v1662
        %v1805 = vpop.f32.mrb[0].mxu0
        %v1806 = vadd.f32 %v1684, %v1805
        %v1807 = vpop.f32.mrb[0].mxu0
        %v1808 = vadd.f32 %v1688, %v1807
        %v1809 = vpop.f32.mrb[0].mxu0
        %v1810 = vadd.f32 %v1684, %v1809
        %v1811 = vpop.f32.mrb[0].mxu0
        %v1812 = vadd.f32 %v1688, %v1811
        %1813 = vdwg.mxu0
        %v1814 = vmax.f32 %v1806, 0.0
        %v1815 = vmax.f32 %v1808, 0.0
        %v1816 = vmax.f32 %v1810, 0.0
        %v1817 = vmax.f32 %v1812, 0.0
        %v1818 = vld [vmem:[#allocation15] sm:$0x3]
        %v1819 = vld [vmem:[#allocation16] sm:$0x3]
        %v1820 = vadd.f32 %v1814, %v1815
        %1821 = vadd.xlane.f32.xlu0 %v1820
        %v1822 = vpop.xlane.xlu0 %1821
        %v1823 = vadd.f32 %v1816, %v1817
        %1824 = vadd.xlane.f32.xlu0 %v1823
        %v1825 = vpop.xlane.xlu0 %1824
        %v1826 = vrcp.pop 256.0
        %v1827 = vmul.f32 %v1822, %v1826
        %v1828 = vmul.f32 %v1825, %v1826
        %v1829 = vsub.f32 %v1814, %v1827
        %v1830 = vsub.f32 %v1815, %v1827
        %v1831 = vsub.f32 %v1816, %v1828
        %v1832 = vsub.f32 %v1817, %v1828
        %v1833 = vmul.f32 %v1829, %v1829
        %v1834 = vmul.f32 %v1830, %v1830
        %v1835 = vmul.f32 %v1831, %v1831
        %v1836 = vmul.f32 %v1832, %v1832
        %v1837 = vadd.f32 %v1833, %v1834
        %1838 = vadd.xlane.f32.xlu0 %v1837
        %v1839 = vpop.xlane.xlu0 %1838
        %v1840 = vadd.f32 %v1835, %v1836
        %1841 = vadd.xlane.f32.xlu0 %v1840
        %v1842 = vpop.xlane.xlu0 %1841
        %v1843 = vmul.f32 %v1839, %v1826
        %v1844 = vmul.f32 %v1842, %v1826
        %v1845 = vadd.f32 %v1843, 1e-05
        %v1846 = vadd.f32 %v1844, 1e-05
        %v1847 = vrsqrt.pop %v1845
        %v1848 = vrsqrt.pop %v1846
        %v1849 = vmul.f32 %v1829, %v1847
        %v1850 = vmul.f32 %v1830, %v1847
        %v1851 = vmul.f32 %v1831, %v1848
        %v1852 = vmul.f32 %v1832, %v1848
        %v1854 = vlaneseq
        %v1855 = vshrl.u32 %v1854, 7
        %v1856 = vsub.s32 0, %v1855
        %v1857 = vrot.slane %v1818, %v1856
        %v1858 = vlaneseq
        %v1859 = vshrl.u32 %v1858, 7
        %v1860 = vsub.s32 1, %v1859
        %v1861 = vrot.slane %v1818, %v1860
        %v1864 = vmul.f32 %v1849, %v1857
        %v1865 = vmul.f32 %v1850, %v1861
        %v1866 = vmul.f32 %v1851, %v1857
        %v1867 = vmul.f32 %v1852, %v1861
        %v1869 = vlaneseq
        %v1870 = vshrl.u32 %v1869, 7
        %v1871 = vsub.s32 0, %v1870
        %v1872 = vrot.slane %v1819, %v1871
        %v1873 = vlaneseq
        %v1874 = vshrl.u32 %v1873, 7
        %v1875 = vsub.s32 1, %v1874
        %v1876 = vrot.slane %v1819, %v1875
        %v1879 = vadd.f32 %v1864, %v1872
        %v1880 = vadd.f32 %v1865, %v1876
        %v1881 = vadd.f32 %v1866, %v1872
        %v1882 = vadd.f32 %v1867, %v1876
        %v1883 = vpack.c.bf16 %v1881, %v1879
        %v1884 = vpack.c.bf16 %v1882, %v1880
        %v1885 = vld [vmem:[#allocation9] sm:$0xf]
        %v1886 = vld [vmem:[#allocation9 + $0x4] sm:$0xf]
        %v1887 = vld [vmem:[#allocation9 + $0x8] sm:$0xf]
        %v1888 = vld [vmem:[#allocation9 + $0xc] sm:$0xf]
        %v1889 = vld [vmem:[#allocation9 + $0x10] sm:$0xf]
        %v1890 = vld [vmem:[#allocation9 + $0x14] sm:$0xf]
        %v1891 = vld [vmem:[#allocation9 + $0x18] sm:$0xf]
        %v1892 = vld [vmem:[#allocation9 + $0x1c] sm:$0xf]
        %v1893 = vld [vmem:[#allocation9 + $0x20] sm:$0xf]
        %v1894 = vld [vmem:[#allocation9 + $0x24] sm:$0xf]
        %v1895 = vld [vmem:[#allocation9 + $0x28] sm:$0xf]
        %v1896 = vld [vmem:[#allocation9 + $0x2c] sm:$0xf]
        %v1897 = vld [vmem:[#allocation9 + $0x30] sm:$0xf]
        %v1898 = vld [vmem:[#allocation9 + $0x34] sm:$0xf]
        %v1899 = vld [vmem:[#allocation9 + $0x38] sm:$0xf]
        %v1900 = vld [vmem:[#allocation9 + $0x3c] sm:$0xf]
        %v1901 = vld [vmem:[#allocation9 + $0x40] sm:$0xf]
        %v1902 = vld [vmem:[#allocation9 + $0x44] sm:$0xf]
        %v1903 = vld [vmem:[#allocation9 + $0x48] sm:$0xf]
        %v1904 = vld [vmem:[#allocation9 + $0x4c] sm:$0xf]
        %v1905 = vld [vmem:[#allocation9 + $0x50] sm:$0xf]
        %v1906 = vld [vmem:[#allocation9 + $0x54] sm:$0xf]
        %v1907 = vld [vmem:[#allocation9 + $0x58] sm:$0xf]
        %v1908 = vld [vmem:[#allocation9 + $0x5c] sm:$0xf]
        %v1909 = vld [vmem:[#allocation9 + $0x60] sm:$0xf]
        %v1910 = vld [vmem:[#allocation9 + $0x64] sm:$0xf]
        %v1911 = vld [vmem:[#allocation9 + $0x68] sm:$0xf]
        %v1912 = vld [vmem:[#allocation9 + $0x6c] sm:$0xf]
        %v1913 = vld [vmem:[#allocation9 + $0x70] sm:$0xf]
        %v1914 = vld [vmem:[#allocation9 + $0x74] sm:$0xf]
        %v1915 = vld [vmem:[#allocation9 + $0x78] sm:$0xf]
        %v1916 = vld [vmem:[#allocation9 + $0x7c] sm:$0xf]
        %v1917 = vld [vmem:[#allocation10] sm:$0x1]
        %v1919 = vlaneseq
        %v1920 = vshrl.u32 %v1919, 7
        %v1921 = vsub.s32 0, %v1920
        %v1922 = vrot.slane %v1917, %v1921
        %v1956 = vunpack.c.l.b16 %v1885
        %v1957 = vunpack.c.l.b16 %v1886
        %v1958 = vunpack.c.l.b16 %v1887
        %v1959 = vunpack.c.l.b16 %v1888
        %v1960 = vunpack.c.l.b16 %v1889
        %v1961 = vunpack.c.l.b16 %v1890
        %v1962 = vunpack.c.l.b16 %v1891
        %v1963 = vunpack.c.l.b16 %v1892
        %v1964 = vunpack.c.l.b16 %v1893
        %v1965 = vunpack.c.l.b16 %v1894
        %v1966 = vunpack.c.l.b16 %v1895
        %v1967 = vunpack.c.l.b16 %v1896
        %v1968 = vunpack.c.l.b16 %v1897
        %v1969 = vunpack.c.l.b16 %v1898
        %v1970 = vunpack.c.l.b16 %v1899
        %v1971 = vunpack.c.l.b16 %v1900
        %v1972 = vunpack.c.l.b16 %v1901
        %v1973 = vunpack.c.l.b16 %v1902
        %v1974 = vunpack.c.l.b16 %v1903
        %v1975 = vunpack.c.l.b16 %v1904
        %v1976 = vunpack.c.l.b16 %v1905
        %v1977 = vunpack.c.l.b16 %v1906
        %v1978 = vunpack.c.l.b16 %v1907
        %v1979 = vunpack.c.l.b16 %v1908
        %v1980 = vunpack.c.l.b16 %v1909
        %v1981 = vunpack.c.l.b16 %v1910
        %v1982 = vunpack.c.l.b16 %v1911
        %v1983 = vunpack.c.l.b16 %v1912
        %v1984 = vunpack.c.l.b16 %v1913
        %v1985 = vunpack.c.l.b16 %v1914
        %v1986 = vunpack.c.l.b16 %v1915
        %v1987 = vunpack.c.l.b16 %v1916
        %v1988 = vpack.c.b16 %v1957, %v1956
        %v1989 = vpack.c.b16 %v1959, %v1958
        %v1990 = vpack.c.b16 %v1961, %v1960
        %v1991 = vpack.c.b16 %v1963, %v1962
        %v1992 = vpack.c.b16 %v1965, %v1964
        %v1993 = vpack.c.b16 %v1967, %v1966
        %v1994 = vpack.c.b16 %v1969, %v1968
        %v1995 = vpack.c.b16 %v1971, %v1970
        %v1996 = vpack.c.b16 %v1973, %v1972
        %v1997 = vpack.c.b16 %v1975, %v1974
        %v1998 = vpack.c.b16 %v1977, %v1976
        %v1999 = vpack.c.b16 %v1979, %v1978
        %v2000 = vpack.c.b16 %v1981, %v1980
        %v2001 = vpack.c.b16 %v1983, %v1982
        %v2002 = vpack.c.b16 %v1985, %v1984
        %v2003 = vpack.c.b16 %v1987, %v1986
        %2020 = vmatprep.subr.bf16.mxu0 0
        %2021 = vmatpush1.bf16.msra.mxu0 %v1988
        %2022 = vmatprep.subr.bf16.mxu0 0
        %2023 = vmatpush1.bf16.msra.mxu0 %v1989
        %2024 = vmatprep.subr.bf16.mxu0 0
        %2025 = vmatpush1.bf16.msra.mxu0 %v1990
        %2026 = vmatprep.subr.bf16.mxu0 0
        %2027 = vmatpush1.bf16.msra.mxu0 %v1991
        %2028 = vmatprep.subr.bf16.mxu0 0
        %2029 = vmatpush1.bf16.msra.mxu0 %v1992
        %2030 = vmatprep.subr.bf16.mxu0 0
        %2031 = vmatpush1.bf16.msra.mxu0 %v1993
        %2032 = vmatprep.subr.bf16.mxu0 0
        %2033 = vmatpush1.bf16.msra.mxu0 %v1994
        %2034 = vmatprep.subr.bf16.mxu0 0
        %2035 = vmatpush1.bf16.msra.mxu0 %v1995
        %2036 = vmatprep.subr.bf16.mxu0 0
        %2037 = vmatpush1.bf16.msra.mxu0 %v1996
        %2038 = vmatprep.subr.bf16.mxu0 0
        %2039 = vmatpush1.bf16.msra.mxu0 %v1997
        %2040 = vmatprep.subr.bf16.mxu0 0
        %2041 = vmatpush1.bf16.msra.mxu0 %v1998
        %2042 = vmatprep.subr.bf16.mxu0 0
        %2043 = vmatpush1.bf16.msra.mxu0 %v1999
        %2044 = vmatprep.subr.bf16.mxu0 0
        %2045 = vmatpush1.bf16.msra.mxu0 %v2000
        %2046 = vmatprep.subr.bf16.mxu0 0
        %2047 = vmatpush1.bf16.msra.mxu0 %v2001
        %2048 = vmatprep.subr.bf16.mxu0 0
        %2049 = vmatpush1.bf16.msra.mxu0 %v2002
        %2050 = vmatprep.subr.bf16.mxu0 0
        %2051 = vmatpush1.bf16.msra.mxu0 %v2003
        %2052 = vmatprep.mubr.bf16.mxu0 %v1884
        %2053 = vmatmul.mubr.bf16.gmra.mrb[0].mxu0 %v1883
        %v2054 = vpop.f32.mrb[0].mxu0
        %v2055 = vadd.f32 %v1922, %v2054
        %v2056 = vpop.f32.mrb[0].mxu0
        %v2057 = vpop.f32.mrb[0].mxu0
        %v2058 = vadd.f32 %v1922, %v2057
        %v2059 = vpop.f32.mrb[0].mxu0
        %2060 = vdwg.mxu0
        %v2061 = vadd.f32 %v2055, %v1660
        %v2062 = vadd.f32 %v2058, %v1661
        %v2063 = vld [vmem:[#allocation18] sm:$0x1]
        %v2064 = vld [vmem:[#allocation19] sm:$0x1]
        %2065 = vadd.xlane.f32.xlu0 %v2061
        %v2066 = vpop.xlane.xlu0 %2065
        %2067 = vadd.xlane.f32.xlu0 %v2062
        %v2068 = vpop.xlane.xlu0 %2067
        %v2069 = vmul.f32 %v2066, %v1627
        %v2070 = vmul.f32 %v2068, %v1627
        %v2071 = vsub.f32 %v2061, %v2069
        %v2072 = vsub.f32 %v2062, %v2070
        %v2073 = vmul.f32 %v2071, %v2071
        %v2074 = vmul.f32 %v2072, %v2072
        %2075 = vadd.xlane.f32.xlu0 %v2073
        %v2076 = vpop.xlane.xlu0 %2075
        %2077 = vadd.xlane.f32.xlu0 %v2074
        %v2078 = vpop.xlane.xlu0 %2077
        %v2079 = vmul.f32 %v2076, %v1627
        %v2080 = vmul.f32 %v2078, %v1627
        %v2081 = vadd.f32 %v2079, 1e-05
        %v2082 = vadd.f32 %v2080, 1e-05
        %v2083 = vrsqrt.pop %v2081
        %v2084 = vrsqrt.pop %v2082
        %v2085 = vmul.f32 %v2071, %v2083
        %v2086 = vmul.f32 %v2072, %v2084
        %v2088 = vlaneseq
        %v2089 = vshrl.u32 %v2088, 7
        %v2090 = vsub.s32 0, %v2089
        %v2091 = vrot.slane %v2063, %v2090
        %v2093 = vmul.f32 %v2085, %v2091
        %v2094 = vmul.f32 %v2086, %v2091
        %v2096 = vlaneseq
        %v2097 = vshrl.u32 %v2096, 7
        %v2098 = vsub.s32 0, %v2097
        %v2099 = vrot.slane %v2064, %v2098
        %v2101 = vadd.f32 %v2093, %v2099
        %v2102 = vadd.f32 %v2094, %v2099
        %2103 = vst [vmem:[%s692] sm:$0xff] %v2101
        %2104 = vst [vmem:[%s692 + $0x8] sm:$0xff] %v2102
        %p2105 = scmp.lt.s32.totalorder %s34, 3
        %s2106 = scalar_select %p2105, %s34, 3
        %s2107 = smul.addr %s2106, 2
        %s2108 = smul.addr %s2107, 8
        %s2109 = scalar_lea.vmem %s16, %s2108
        // Predicated region
        $region133: #{encoder_layer_forward.1} parent=83 // pred_check
          %p2110 = pneg %p398
        $region134: #{encoder_layer_forward.1} parent=83 // pred_check_branch
          %2112 = sbr.rel (%p2110) target = $region136
        $region135: #{encoder_layer_forward.1} parent=83 // pred_region
          _
        $region136: #{encoder_layer_forward.1} parent=83 // pred_fallthru
          _
      $region84: #{encoder_layer_forward.1} parent=5 // pred_fallthru
        _
      %p2113 = scmp.le.s32.totalorder 2, %s29
      // Predicated region
      $region137: #{encoder_layer_forward.1} parent=5 // pred_check
        %p2114 = pneg %p2113
      $region138: #{encoder_layer_forward.1} parent=5 // pred_check_branch
        %2116 = sbr.rel (%p2114) target = $region140
      $region139: #{encoder_layer_forward.1} parent=5 // pred_region
        %s2117 = ssub.s32 %s29, 2
        // Predicated region
        $region141: #{encoder_layer_forward.1} parent=139 // pred_check
          %p2118 = pneg %p404
        $region142: #{encoder_layer_forward.1} parent=139 // pred_check_branch
          %2120 = sbr.rel (%p2118) target = $region144
        $region143: #{encoder_layer_forward.1} parent=139 // pred_region
          %p2121 = scmp.lt.s32.totalorder %s35, 3
          %s2122 = scalar_select %p2121, %s35, 3
          %s2123 = smul.addr %s2122, 2
          %s2124 = smul.addr %s2123, 8
          %s2125 = scalar_lea.vmem %s16, %s2124
        $region144: #{encoder_layer_forward.1} parent=139 // pred_fallthru
          _
      $region140: #{encoder_layer_forward.1} parent=5 // pred_fallthru
        _
    $region6: #{encoder_layer_forward.1} parent=1 // loop_footer
      %s33 = sadd.s32 1, %s29
    $region7: #{encoder_layer_forward.1} parent=1 // loop_footer_branch
      %28 = sbr.rel target = $region3
    $region8: #{encoder_layer_forward.1} parent=1 // loop_exit
      _
    %2126 = vsyncpa [#allocation3], 1
    %s2127 = scalar_lea.sflag [#allocation3], 1
    %2128 = vsyncpa %s2127, 1
    %2129 = vsyncpa [#allocation5], 1
    %2130 = vsyncpa [#allocation8], 1
    %2131 = vsyncpa [#allocation11], 1
    %2132 = vsyncpa [#allocation14], 1
    %2133 = vsyncpa [#allocation17], 1
    %2134 = vsyncpa [#allocation20], 1

</llo_original>
